<compile_context>
chip_gen: v5e
topology: v5e:2x2
jax: 0.10.0
libtpu: 0.0.40
codegen_flags: <defaults>
</compile_context>

<pallas_src>
import functools

import jax
import jax.numpy as jnp
import numpy as np
from jax import lax
from jax.experimental import pallas as pl
from jax.experimental.pallas import tpu as pltpu

# ---- configuration implied by ExtractionNet ----
SEQ_LEN = 100        # hard-coded in ExtractionNet.forward (reshape(-1, 100, dim))
WORD_DIM = 32        # word_embed_dim
TARGET_DIM = 16      # model_config['target_embedding_dim']
TAG_DIM = 100        # hard-coded tag_emb_dim
FEATURE_DIM = WORD_DIM + TARGET_DIM + TAG_DIM   # 148
HIDDEN = 32          # model_config['hidden_size'] (BiLSTM hidden size)
OUTPUT = 9           # output_size (num classes)
VOCAB = 50           # preprocess_config['vocab_size'] (small synthetic vocab)
NUM_TAGS = 50        # tag embedding num_embeddings
BATCH = 2

# bf16 EUP/VPU exists on v6e/v7x; set to False when targeting v5e.
BF16_GATES = True


def _fused_bilstm_kernel(xg_ref, whh_ref, wlin_f_ref, wlin_b_ref, blin_ref,
                         outf_ref, outb_ref, h_ref, *, Bp, T, H):
    """Fused fwd+bwd LSTM recurrence over the padded batch + split output Linear.

    xg_ref : (T*Bp, 8H) f32 gate-input projections (bias folded in).  Row s*Bp+b
             holds, for batch row b, the fwd gates of time s and the bwd gates of
             time T-1-s, columns [i_f,i_b | f_f,f_b | o_f,o_b | g_f,g_b].
    whh_ref: (2H, 8H) block-diagonal recurrent weight, same column layout; rows
             0:H act on h_fwd, rows H:2H act on h_bwd.
    Outputs: outf (T*Bp, O) = h_fwd(t=s) @ Wf + b   at row-block s
             outb (T*Bp, O) = h_bwd(t=T-1-s) @ Wb   at row-block s
             (wrapper un-reverses outb in time, adds, and applies log_softmax).
    """
    # Loop-invariant recurrent weight, bf16 -> single MXU pass per step.
    whh = whh_ref[...].astype(jnp.bfloat16)                 # (2H, 8H)
    gdt = jnp.bfloat16 if BF16_GATES else jnp.float32

    def step(s, carry):
        h, c = carry                                        # h (Bp,2H) bf16, c f32
        row = pl.multiple_of(s * Bp, 8)
        g = xg_ref[pl.ds(row, Bp), :] + jnp.dot(
            h, whh, preferred_element_type=jnp.float32)     # (Bp, 8H) f32
        ga = g.astype(gdt)
        sg = jax.nn.sigmoid(ga[:, 0:6 * H])                 # i_f,i_b,f_f,f_b,o_f,o_b
        tg = jnp.tanh(ga[:, 6 * H:8 * H])                   # g_f,g_b (cell gates)
        i = sg[:, 0:2 * H]
        f = sg[:, 2 * H:4 * H]
        o = sg[:, 4 * H:6 * H]
        c = f.astype(jnp.float32) * c + (i * tg).astype(jnp.float32)   # f32 carry
        h = (o * jnp.tanh(c.astype(gdt))).astype(jnp.bfloat16)
        # One combined (Bp, 2H) store per step; time un-reversal of the bwd half
        # happens outside the kernel on the partial logits.
        h_ref[pl.ds(row, Bp), :] = h.astype(jnp.float32)
        return (h, c)

    if T % 10 == 0:
        unroll = 10
    elif T % 5 == 0:
        unroll = 5
    elif T % 2 == 0:
        unroll = 2
    else:
        unroll = 1

    def body(j, carry):
        s0 = j * unroll
        for u in range(unroll):                             # manual unroll for LLO
            carry = step(s0 + u, carry)
        return carry

    h0 = jnp.zeros((Bp, 2 * H), jnp.bfloat16)
    c0 = jnp.zeros((Bp, 2 * H), jnp.float32)
    lax.fori_loop(0, T // unroll, body, (h0, c0))

    # Output head: wlin split over the two direction halves -> no hidden concat.
    hcat = h_ref[...].astype(jnp.bfloat16)                  # (T*Bp, 2H)
    wf = wlin_f_ref[...].astype(jnp.bfloat16)
    wb = wlin_b_ref[...].astype(jnp.bfloat16)
    outf_ref[...] = jnp.dot(hcat[:, 0:H], wf,
                            preferred_element_type=jnp.float32) + blin_ref[...]
    outb_ref[...] = jnp.dot(hcat[:, H:2 * H], wb,
                            preferred_element_type=jnp.float32)


def bilstm_forward(xg, whh_blk, wlin_f, wlin_b, blin, *, Bp, T, H, O):
    kernel = functools.partial(_fused_bilstm_kernel, Bp=Bp, T=T, H=H)

    def full(shape):
        return pl.BlockSpec(shape, lambda i: (0, 0))

    return pl.pallas_call(
        kernel,
        out_shape=(jax.ShapeDtypeStruct((T * Bp, O), jnp.float32),
                   jax.ShapeDtypeStruct((T * Bp, O), jnp.float32)),
        grid=(1,),
        in_specs=[
            full((T * Bp, 8 * H)),      # xg (pre-projected gate inputs)
            full((2 * H, 8 * H)),       # block-diagonal W_hh
            full((H, O)),               # wlin (fwd half)
            full((H, O)),               # wlin (bwd half)
            full((1, O)),               # blin
        ],
        out_specs=(full((T * Bp, O)), full((T * Bp, O))),
        scratch_shapes=[
            pltpu.VMEM((T * Bp, 2 * H), jnp.float32),   # [h_fwd | h_bwd], row = s*Bp + b
        ],
        compiler_params=pltpu.CompilerParams(dimension_semantics=("arbitrary",)),
    )(xg, whh_blk, wlin_f, wlin_b, blin)


def _permute_gates(w, H):
    """Reorder PyTorch LSTM gate columns (i, f, g, o) -> kernel order (i, f, o, g)."""
    return jnp.concatenate([w[:, 0:H], w[:, H:2 * H],
                            w[:, 3 * H:4 * H], w[:, 2 * H:3 * H]], axis=1)


def _build_whh_block(whh_f, whh_b, H):
    """(2H, 8H) block-diagonal recurrent weight, cols [i_f,i_b|f_f,f_b|o_f,o_b|g_f,g_b]."""
    Z = jnp.zeros((H, H), jnp.float32)

    def col(w, k):                      # w: (H, 4H) in PyTorch gate order i,f,g,o
        return w[:, k * H:(k + 1) * H]

    cols = []
    for k in (0, 1, 3, 2):              # i, f, o, g
        cols.append(jnp.concatenate([col(whh_f, k), Z], axis=0))   # rows [h_f ; h_b]
        cols.append(jnp.concatenate([Z, col(whh_b, k)], axis=0))
    return jnp.concatenate(cols, axis=1)                           # (2H, 8H)


def prepare_params(p):
    """One-time parameter prep: gate permutation, block-diag whh, wlin split."""
    H = HIDDEN
    return {
        'word_emb': p['word_emb'],
        'target_emb': p['target_emb'],
        'tag_emb': p['tag_emb'],
        'wih_f': _permute_gates(p['wih_f'], H),    # (F, 4H), cols i,f,o,g
        'wih_b': _permute_gates(p['wih_b'], H),
        'b_f': _permute_gates(p['b_f'], H),        # (1, 4H)
        'b_b': _permute_gates(p['b_b'], H),
        'whh_blk': _build_whh_block(p['whh_f'], p['whh_b'], H),    # (2H, 8H)
        'wlin_f': p['wlin'][:H],                   # (H, O)
        'wlin_b': p['wlin'][H:],                   # (H, O)
        'blin': p['blin'],                         # (1, O)
    }


def extraction_net_forward(kp, text_idx, target, tag):
    B, T = text_idx.shape
    H, O = HIDDEN, OUTPUT
    Bp = max(8, -(-B // 8) * 8)          # pad batch to a full sublane tile

    # Embedding lookups + concat (glue).
    word_emb = kp['word_emb'][text_idx]                        # (B, T, 32)
    target_emb = kp['target_emb'][target]                      # (B, T, 16)
    tag_emb = kp['tag_emb'][tag]                               # (B, T, 100)
    x = jnp.concatenate([word_emb, target_emb, tag_emb], axis=-1)   # (B, T, 148)
    x = jnp.transpose(x, (1, 0, 2))                            # (T, B, F)

    # Input projections hoisted out of the kernel (default matmul precision);
    # backward direction projected on the time-reversed sequence.
    xg_f = jnp.einsum('tbf,fg->tbg', x, kp['wih_f']) + kp['b_f']        # (T,B,4H) i,f,o,g
    xg_b = jnp.einsum('tbf,fg->tbg', x[::-1], kp['wih_b']) + kp['b_b']  # (T,B,4H)
    # Interleave directions per gate: [i_f,i_b | f_f,f_b | o_f,o_b | g_f,g_b].
    xg = jnp.concatenate([xg_f.reshape(T, B, 4, H),
                          xg_b.reshape(T, B, 4, H)], axis=-1).reshape(T, B, 8 * H)
    xg = jnp.pad(xg, ((0, 0), (0, Bp - B), (0, 0))).reshape(T * Bp, 8 * H)

    outf, outb = bilstm_forward(xg, kp['whh_blk'], kp['wlin_f'], kp['wlin_b'],
                                kp['blin'], Bp=Bp, T=T, H=H, O=O)

    # Tiny XLA glue: slice real batch rows, un-reverse the bwd partials, add,
    # log_softmax.
    pf = outf.reshape(T, Bp, O)[:, :B]            # (T, B, O), fwd time order
    pb = outb.reshape(T, Bp, O)[::-1, :B]         # (T, B, O), bwd time un-reversed
    out = jax.nn.log_softmax(pf + pb, axis=-1)    # (T, B, O)
    return jnp.transpose(out, (1, 0, 2))          # (B, T, O)


def init_params(key):
    # Deterministic synthetic weights (shapes follow the PyTorch module).
    ks = jax.random.split(key, 11)
    H, F, O = HIDDEN, FEATURE_DIM, OUTPUT

    def nrm(k, shape, scale=0.1):
        return (scale * jax.random.normal(k, shape)).astype(jnp.float32)

    return {
        'word_emb':   nrm(ks[0], (VOCAB, WORD_DIM)),
        'target_emb': nrm(ks[1], (OUTPUT, TARGET_DIM)),
        'tag_emb':    nrm(ks[2], (NUM_TAGS, TAG_DIM)),
        # LSTM weights stored transposed vs PyTorch: (in, 4H); bias = b_ih + b_hh
        'wih_f': nrm(ks[3], (F, 4 * H)),
        'whh_f': nrm(ks[4], (H, 4 * H)),
        'b_f':   nrm(ks[5], (1, 4 * H)),
        'wih_b': nrm(ks[6], (F, 4 * H)),
        'whh_b': nrm(ks[7], (H, 4 * H)),
        'b_b':   nrm(ks[8], (1, 4 * H)),
        'wlin':  nrm(ks[9], (2 * H, O)),
        'blin':  nrm(ks[10], (1, O)),
    }


def reference_forward(params, text_idx, target, tag):
    """Pure-JAX reference of the same forward pass (for correctness checking)."""
    word_emb = params['word_emb'][text_idx].reshape(-1, SEQ_LEN, WORD_DIM)
    target_emb = params['target_emb'][target].reshape(-1, SEQ_LEN, TARGET_DIM)
    tag_emb = params['tag_emb'][tag].reshape(-1, SEQ_LEN, TAG_DIM)
    x = jnp.concatenate([word_emb, target_emb, tag_emb], axis=-1)
    H = HIDDEN
    prec = lax.Precision.HIGHEST

    def one_dir(seq, wih, whh, b):
        def step(carry, xt):
            h, c = carry
            g = jnp.dot(xt, wih, precision=prec) + jnp.dot(h, whh, precision=prec) + b[0]
            i = jax.nn.sigmoid(g[:H]); f = jax.nn.sigmoid(g[H:2 * H])
            gg = jnp.tanh(g[2 * H:3 * H]); o = jax.nn.sigmoid(g[3 * H:])
            c = f * c + i * gg
            h = o * jnp.tanh(c)
            return (h, c), h
        _, hs = lax.scan(step, (jnp.zeros(H), jnp.zeros(H)), seq)
        return hs

    outs = []
    for b in range(x.shape[0]):
        hf = one_dir(x[b], params['wih_f'], params['whh_f'], params['b_f'])
        hb = one_dir(x[b][::-1], params['wih_b'], params['whh_b'], params['b_b'])[::-1]
        hcat = jnp.concatenate([hf, hb], axis=-1)
        logits = jnp.dot(hcat, params['wlin'], precision=prec) + params['blin'][0]
        outs.append(jax.nn.log_softmax(logits, axis=-1))
    return jnp.stack(outs, axis=0)


if __name__ == "__main__":
    key = jax.random.PRNGKey(0)
    pkey, k1, k2, k3 = jax.random.split(key, 4)
    raw_params = init_params(pkey)
    kparams = prepare_params(raw_params)

    text_idx = jax.random.randint(k1, (BATCH, SEQ_LEN), 0, VOCAB, dtype=jnp.int32)
    target = jax.random.randint(k2, (BATCH, SEQ_LEN), 0, OUTPUT, dtype=jnp.int32)
    tag = jax.random.randint(k3, (BATCH, SEQ_LEN), 0, NUM_TAGS, dtype=jnp.int32)

    forward = jax.jit(extraction_net_forward)
    out = forward(kparams, text_idx, target, tag)
    out = jax.block_until_ready(out)

    # Sanity: shape + valid log-probabilities + matches pure-JAX (f32 HIGHEST) reference.
    assert out.shape == (BATCH, SEQ_LEN, OUTPUT)
    assert bool(jnp.all(jnp.isfinite(out)))
    row_sums = np.asarray(jnp.sum(jnp.exp(out), axis=-1))
    np.testing.assert_allclose(row_sums, 1.0, atol=1e-3)

    ref = reference_forward(raw_params, text_idx, target, tag)
    # bf16 MXU operands + bf16 gate nonlinearities in the kernel -> bf16-level tolerance.
    np.testing.assert_allclose(np.asarray(out), np.asarray(ref), atol=2e-2, rtol=2e-2)

    print("KERNEL_OK")
</pallas_src>

<mosaic_0001>
module attributes {stable_mosaic.version = 11 : i64} {
  func.func @_fused_bilstm_kernel(%arg0: i32, %arg1: memref<800x256xf32, #tpu.memory_space<vmem>>, %arg2: memref<64x256xf32, #tpu.memory_space<vmem>>, %arg3: memref<32x9xf32, #tpu.memory_space<vmem>>, %arg4: memref<32x9xf32, #tpu.memory_space<vmem>>, %arg5: memref<1x9xf32, #tpu.memory_space<vmem>>, %arg6: memref<800x9xf32, #tpu.memory_space<vmem>>, %arg7: memref<800x9xf32, #tpu.memory_space<vmem>>, %arg8: memref<800x64xf32, #tpu.memory_space<vmem>>) attributes {dimension_semantics = [#tpu.dimension_semantics<arbitrary>], iteration_bounds = array<i64: 1>, scalar_prefetch = 0 : i64, scratch_operands = 1 : i64, tpu.core_type = #tpu.core_type<tc>, window_params = [{pipeline_mode = #tpu.pipeline_mode<synchronous>, transform_indices = @transform_0, window_bounds = array<i64: 800, 256>}, {pipeline_mode = #tpu.pipeline_mode<synchronous>, transform_indices = @transform_1, window_bounds = array<i64: 64, 256>}, {pipeline_mode = #tpu.pipeline_mode<synchronous>, transform_indices = @transform_2, window_bounds = array<i64: 32, 9>}, {pipeline_mode = #tpu.pipeline_mode<synchronous>, transform_indices = @transform_3, window_bounds = array<i64: 32, 9>}, {pipeline_mode = #tpu.pipeline_mode<synchronous>, transform_indices = @transform_4, window_bounds = array<i64: 1, 9>}, {pipeline_mode = #tpu.pipeline_mode<synchronous>, transform_indices = @transform_5, window_bounds = array<i64: 800, 9>}, {pipeline_mode = #tpu.pipeline_mode<synchronous>, transform_indices = @transform_6, window_bounds = array<i64: 800, 9>}]} {
    %c0 = arith.constant 0 : index
    %c0_0 = arith.constant 0 : index
    %0 = vector.load %arg2[%c0, %c0_0] : memref<64x256xf32, #tpu.memory_space<vmem>>, vector<64x256xf32>
    %1 = arith.truncf %0 : vector<64x256xf32> to vector<64x256xbf16>
    %cst = arith.constant 0.000000e+00 : bf16
    %2 = vector.broadcast %cst : bf16 to vector<8x64xbf16>
    %cst_1 = arith.constant 0.000000e+00 : f32
    %3 = vector.broadcast %cst_1 : f32 to vector<8x64xf32>
    %c0_i32 = arith.constant 0 : i32
    %c10_i32 = arith.constant 10 : i32
    %4 = arith.addi %c0_i32, %c10_i32 : i32
    %c1_i32 = arith.constant 1 : i32
    %5:2 = scf.for %arg9 = %c0_i32 to %4 step %c1_i32 iter_args(%arg10 = %2, %arg11 = %3) -> (vector<8x64xbf16>, vector<8x64xf32>)  : i32 {
      %c10_i32_17 = arith.constant 10 : i32
      %21 = arith.muli %arg9, %c10_i32_17 : i32
      %c0_i32_18 = arith.constant 0 : i32
      %22 = arith.addi %21, %c0_i32_18 : i32
      %c8_i32 = arith.constant 8 : i32
      %23 = arith.muli %22, %c8_i32 : i32
      %24 = tpu.assume_multiple %23, 8 : i32
      %25 = arith.index_cast %24 : i32 to index
      %c0_19 = arith.constant 0 : index
      %26 = vector.load %arg1[%25, %c0_19] : memref<800x256xf32, #tpu.memory_space<vmem>>, vector<8x256xf32>
      %cst_20 = arith.constant dense<0.000000e+00> : vector<8x256xf32>
      %27 = tpu.matmul %arg10, %1, %cst_20 {dimension_numbers = #tpu.dot_dimension_numbers<[1], [0], [0], [1], [0, 0, 1, 1], [], []>} : vector<8x64xbf16>, vector<64x256xbf16>, vector<8x256xf32> -> vector<8x256xf32>
      %28 = arith.addf %26, %27 : vector<8x256xf32>
      %29 = arith.truncf %28 : vector<8x256xf32> to vector<8x256xbf16>
      %30 = vector.extract_strided_slice %29 {offsets = [0, 0], sizes = [8, 192], strides = [1, 1]} : vector<8x256xbf16> to vector<8x192xbf16>
      %31 = arith.negf %30 : vector<8x192xbf16>
      %32 = math.exp %31 : vector<8x192xbf16>
      %cst_21 = arith.constant 1.000000e+00 : bf16
      %33 = vector.broadcast %cst_21 : bf16 to vector<8x192xbf16>
      %34 = arith.addf %33, %32 : vector<8x192xbf16>
      %35 = arith.divf %33, %34 : vector<8x192xbf16>
      %36 = vector.extract_strided_slice %29 {offsets = [0, 192], sizes = [8, 64], strides = [1, 1]} : vector<8x256xbf16> to vector<8x64xbf16>
      %37 = math.tanh %36 : vector<8x64xbf16>
      %38 = vector.extract_strided_slice %35 {offsets = [0, 0], sizes = [8, 64], strides = [1, 1]} : vector<8x192xbf16> to vector<8x64xbf16>
      %39 = vector.extract_strided_slice %35 {offsets = [0, 64], sizes = [8, 64], strides = [1, 1]} : vector<8x192xbf16> to vector<8x64xbf16>
      %40 = vector.extract_strided_slice %35 {offsets = [0, 128], sizes = [8, 64], strides = [1, 1]} : vector<8x192xbf16> to vector<8x64xbf16>
      %41 = arith.extf %39 : vector<8x64xbf16> to vector<8x64xf32>
      %42 = arith.mulf %41, %arg11 : vector<8x64xf32>
      %43 = arith.mulf %38, %37 : vector<8x64xbf16>
      %44 = arith.extf %43 : vector<8x64xbf16> to vector<8x64xf32>
      %45 = arith.addf %42, %44 : vector<8x64xf32>
      %46 = arith.truncf %45 : vector<8x64xf32> to vector<8x64xbf16>
      %47 = math.tanh %46 : vector<8x64xbf16>
      %48 = arith.mulf %40, %47 : vector<8x64xbf16>
      %49 = arith.extf %48 : vector<8x64xbf16> to vector<8x64xf32>
      %50 = arith.index_cast %24 : i32 to index
      %c0_22 = arith.constant 0 : index
      %51 = vector.load %arg8[%50, %c0_22] : memref<800x64xf32, #tpu.memory_space<vmem>>, vector<8x64xf32>
      tpu.vector_store %arg8[%50, %c0_22], %49 {strides = array<i32>} : memref<800x64xf32, #tpu.memory_space<vmem>>, vector<8x64xf32>,
      %c1_i32_23 = arith.constant 1 : i32
      %52 = arith.addi %21, %c1_i32_23 : i32
      %c8_i32_24 = arith.constant 8 : i32
      %53 = arith.muli %52, %c8_i32_24 : i32
      %54 = tpu.assume_multiple %53, 8 : i32
      %55 = arith.index_cast %54 : i32 to index
      %c0_25 = arith.constant 0 : index
      %56 = vector.load %arg1[%55, %c0_25] : memref<800x256xf32, #tpu.memory_space<vmem>>, vector<8x256xf32>
      %cst_26 = arith.constant dense<0.000000e+00> : vector<8x256xf32>
      %57 = tpu.matmul %48, %1, %cst_26 {dimension_numbers = #tpu.dot_dimension_numbers<[1], [0], [0], [1], [0, 0, 1, 1], [], []>} : vector<8x64xbf16>, vector<64x256xbf16>, vector<8x256xf32> -> vector<8x256xf32>
      %58 = arith.addf %56, %57 : vector<8x256xf32>
      %59 = arith.truncf %58 : vector<8x256xf32> to vector<8x256xbf16>
      %60 = vector.extract_strided_slice %59 {offsets = [0, 0], sizes = [8, 192], strides = [1, 1]} : vector<8x256xbf16> to vector<8x192xbf16>
      %61 = arith.negf %60 : vector<8x192xbf16>
      %62 = math.exp %61 : vector<8x192xbf16>
      %cst_27 = arith.constant 1.000000e+00 : bf16
      %63 = vector.broadcast %cst_27 : bf16 to vector<8x192xbf16>
      %64 = arith.addf %63, %62 : vector<8x192xbf16>
      %65 = arith.divf %63, %64 : vector<8x192xbf16>
      %66 = vector.extract_strided_slice %59 {offsets = [0, 192], sizes = [8, 64], strides = [1, 1]} : vector<8x256xbf16> to vector<8x64xbf16>
      %67 = math.tanh %66 : vector<8x64xbf16>
      %68 = vector.extract_strided_slice %65 {offsets = [0, 0], sizes = [8, 64], strides = [1, 1]} : vector<8x192xbf16> to vector<8x64xbf16>
      %69 = vector.extract_strided_slice %65 {offsets = [0, 64], sizes = [8, 64], strides = [1, 1]} : vector<8x192xbf16> to vector<8x64xbf16>
      %70 = vector.extract_strided_slice %65 {offsets = [0, 128], sizes = [8, 64], strides = [1, 1]} : vector<8x192xbf16> to vector<8x64xbf16>
      %71 = arith.extf %69 : vector<8x64xbf16> to vector<8x64xf32>
      %72 = arith.mulf %71, %45 : vector<8x64xf32>
      %73 = arith.mulf %68, %67 : vector<8x64xbf16>
      %74 = arith.extf %73 : vector<8x64xbf16> to vector<8x64xf32>
      %75 = arith.addf %72, %74 : vector<8x64xf32>
      %76 = arith.truncf %75 : vector<8x64xf32> to vector<8x64xbf16>
      %77 = math.tanh %76 : vector<8x64xbf16>
      %78 = arith.mulf %70, %77 : vector<8x64xbf16>
      %79 = arith.extf %78 : vector<8x64xbf16> to vector<8x64xf32>
      %80 = arith.index_cast %54 : i32 to index
      %c0_28 = arith.constant 0 : index
      %81 = vector.load %arg8[%80, %c0_28] : memref<800x64xf32, #tpu.memory_space<vmem>>, vector<8x64xf32>
      tpu.vector_store %arg8[%80, %c0_28], %79 {strides = array<i32>} : memref<800x64xf32, #tpu.memory_space<vmem>>, vector<8x64xf32>,
      %c2_i32 = arith.constant 2 : i32
      %82 = arith.addi %21, %c2_i32 : i32
      %c8_i32_29 = arith.constant 8 : i32
      %83 = arith.muli %82, %c8_i32_29 : i32
      %84 = tpu.assume_multiple %83, 8 : i32
      %85 = arith.index_cast %84 : i32 to index
      %c0_30 = arith.constant 0 : index
      %86 = vector.load %arg1[%85, %c0_30] : memref<800x256xf32, #tpu.memory_space<vmem>>, vector<8x256xf32>
      %cst_31 = arith.constant dense<0.000000e+00> : vector<8x256xf32>
      %87 = tpu.matmul %78, %1, %cst_31 {dimension_numbers = #tpu.dot_dimension_numbers<[1], [0], [0], [1], [0, 0, 1, 1], [], []>} : vector<8x64xbf16>, vector<64x256xbf16>, vector<8x256xf32> -> vector<8x256xf32>
      %88 = arith.addf %86, %87 : vector<8x256xf32>
      %89 = arith.truncf %88 : vector<8x256xf32> to vector<8x256xbf16>
      %90 = vector.extract_strided_slice %89 {offsets = [0, 0], sizes = [8, 192], strides = [1, 1]} : vector<8x256xbf16> to vector<8x192xbf16>
      %91 = arith.negf %90 : vector<8x192xbf16>
      %92 = math.exp %91 : vector<8x192xbf16>
      %cst_32 = arith.constant 1.000000e+00 : bf16
      %93 = vector.broadcast %cst_32 : bf16 to vector<8x192xbf16>
      %94 = arith.addf %93, %92 : vector<8x192xbf16>
      %95 = arith.divf %93, %94 : vector<8x192xbf16>
      %96 = vector.extract_strided_slice %89 {offsets = [0, 192], sizes = [8, 64], strides = [1, 1]} : vector<8x256xbf16> to vector<8x64xbf16>
      %97 = math.tanh %96 : vector<8x64xbf16>
      %98 = vector.extract_strided_slice %95 {offsets = [0, 0], sizes = [8, 64], strides = [1, 1]} : vector<8x192xbf16> to vector<8x64xbf16>
      %99 = vector.extract_strided_slice %95 {offsets = [0, 64], sizes = [8, 64], strides = [1, 1]} : vector<8x192xbf16> to vector<8x64xbf16>
      %100 = vector.extract_strided_slice %95 {offsets = [0, 128], sizes = [8, 64], strides = [1, 1]} : vector<8x192xbf16> to vector<8x64xbf16>
      %101 = arith.extf %99 : vector<8x64xbf16> to vector<8x64xf32>
      %102 = arith.mulf %101, %75 : vector<8x64xf32>
      %103 = arith.mulf %98, %97 : vector<8x64xbf16>
      %104 = arith.extf %103 : vector<8x64xbf16> to vector<8x64xf32>
      %105 = arith.addf %102, %104 : vector<8x64xf32>
      %106 = arith.truncf %105 : vector<8x64xf32> to vector<8x64xbf16>
      %107 = math.tanh %106 : vector<8x64xbf16>
      %108 = arith.mulf %100, %107 : vector<8x64xbf16>
      %109 = arith.extf %108 : vector<8x64xbf16> to vector<8x64xf32>
      %110 = arith.index_cast %84 : i32 to index
      %c0_33 = arith.constant 0 : index
      %111 = vector.load %arg8[%110, %c0_33] : memref<800x64xf32, #tpu.memory_space<vmem>>, vector<8x64xf32>
      tpu.vector_store %arg8[%110, %c0_33], %109 {strides = array<i32>} : memref<800x64xf32, #tpu.memory_space<vmem>>, vector<8x64xf32>,
      %c3_i32 = arith.constant 3 : i32
      %112 = arith.addi %21, %c3_i32 : i32
      %c8_i32_34 = arith.constant 8 : i32
      %113 = arith.muli %112, %c8_i32_34 : i32
      %114 = tpu.assume_multiple %113, 8 : i32
      %115 = arith.index_cast %114 : i32 to index
      %c0_35 = arith.constant 0 : index
      %116 = vector.load %arg1[%115, %c0_35] : memref<800x256xf32, #tpu.memory_space<vmem>>, vector<8x256xf32>
      %cst_36 = arith.constant dense<0.000000e+00> : vector<8x256xf32>
      %117 = tpu.matmul %108, %1, %cst_36 {dimension_numbers = #tpu.dot_dimension_numbers<[1], [0], [0], [1], [0, 0, 1, 1], [], []>} : vector<8x64xbf16>, vector<64x256xbf16>, vector<8x256xf32> -> vector<8x256xf32>
      %118 = arith.addf %116, %117 : vector<8x256xf32>
      %119 = arith.truncf %118 : vector<8x256xf32> to vector<8x256xbf16>
      %120 = vector.extract_strided_slice %119 {offsets = [0, 0], sizes = [8, 192], strides = [1, 1]} : vector<8x256xbf16> to vector<8x192xbf16>
      %121 = arith.negf %120 : vector<8x192xbf16>
      %122 = math.exp %121 : vector<8x192xbf16>
      %cst_37 = arith.constant 1.000000e+00 : bf16
      %123 = vector.broadcast %cst_37 : bf16 to vector<8x192xbf16>
      %124 = arith.addf %123, %122 : vector<8x192xbf16>
      %125 = arith.divf %123, %124 : vector<8x192xbf16>
      %126 = vector.extract_strided_slice %119 {offsets = [0, 192], sizes = [8, 64], strides = [1, 1]} : vector<8x256xbf16> to vector<8x64xbf16>
      %127 = math.tanh %126 : vector<8x64xbf16>
      %128 = vector.extract_strided_slice %125 {offsets = [0, 0], sizes = [8, 64], strides = [1, 1]} : vector<8x192xbf16> to vector<8x64xbf16>
      %129 = vector.extract_strided_slice %125 {offsets = [0, 64], sizes = [8, 64], strides = [1, 1]} : vector<8x192xbf16> to vector<8x64xbf16>
      %130 = vector.extract_strided_slice %125 {offsets = [0, 128], sizes = [8, 64], strides = [1, 1]} : vector<8x192xbf16> to vector<8x64xbf16>
      %131 = arith.extf %129 : vector<8x64xbf16> to vector<8x64xf32>
      %132 = arith.mulf %131, %105 : vector<8x64xf32>
      %133 = arith.mulf %128, %127 : vector<8x64xbf16>
      %134 = arith.extf %133 : vector<8x64xbf16> to vector<8x64xf32>
      %135 = arith.addf %132, %134 : vector<8x64xf32>
      %136 = arith.truncf %135 : vector<8x64xf32> to vector<8x64xbf16>
      %137 = math.tanh %136 : vector<8x64xbf16>
      %138 = arith.mulf %130, %137 : vector<8x64xbf16>
      %139 = arith.extf %138 : vector<8x64xbf16> to vector<8x64xf32>
      %140 = arith.index_cast %114 : i32 to index
      %c0_38 = arith.constant 0 : index
      %141 = vector.load %arg8[%140, %c0_38] : memref<800x64xf32, #tpu.memory_space<vmem>>, vector<8x64xf32>
      tpu.vector_store %arg8[%140, %c0_38], %139 {strides = array<i32>} : memref<800x64xf32, #tpu.memory_space<vmem>>, vector<8x64xf32>,
      %c4_i32 = arith.constant 4 : i32
      %142 = arith.addi %21, %c4_i32 : i32
      %c8_i32_39 = arith.constant 8 : i32
      %143 = arith.muli %142, %c8_i32_39 : i32
      %144 = tpu.assume_multiple %143, 8 : i32
      %145 = arith.index_cast %144 : i32 to index
      %c0_40 = arith.constant 0 : index
      %146 = vector.load %arg1[%145, %c0_40] : memref<800x256xf32, #tpu.memory_space<vmem>>, vector<8x256xf32>
      %cst_41 = arith.constant dense<0.000000e+00> : vector<8x256xf32>
      %147 = tpu.matmul %138, %1, %cst_41 {dimension_numbers = #tpu.dot_dimension_numbers<[1], [0], [0], [1], [0, 0, 1, 1], [], []>} : vector<8x64xbf16>, vector<64x256xbf16>, vector<8x256xf32> -> vector<8x256xf32>
      %148 = arith.addf %146, %147 : vector<8x256xf32>
      %149 = arith.truncf %148 : vector<8x256xf32> to vector<8x256xbf16>
      %150 = vector.extract_strided_slice %149 {offsets = [0, 0], sizes = [8, 192], strides = [1, 1]} : vector<8x256xbf16> to vector<8x192xbf16>
      %151 = arith.negf %150 : vector<8x192xbf16>
      %152 = math.exp %151 : vector<8x192xbf16>
      %cst_42 = arith.constant 1.000000e+00 : bf16
      %153 = vector.broadcast %cst_42 : bf16 to vector<8x192xbf16>
      %154 = arith.addf %153, %152 : vector<8x192xbf16>
      %155 = arith.divf %153, %154 : vector<8x192xbf16>
      %156 = vector.extract_strided_slice %149 {offsets = [0, 192], sizes = [8, 64], strides = [1, 1]} : vector<8x256xbf16> to vector<8x64xbf16>
      %157 = math.tanh %156 : vector<8x64xbf16>
      %158 = vector.extract_strided_slice %155 {offsets = [0, 0], sizes = [8, 64], strides = [1, 1]} : vector<8x192xbf16> to vector<8x64xbf16>
      %159 = vector.extract_strided_slice %155 {offsets = [0, 64], sizes = [8, 64], strides = [1, 1]} : vector<8x192xbf16> to vector<8x64xbf16>
      %160 = vector.extract_strided_slice %155 {offsets = [0, 128], sizes = [8, 64], strides = [1, 1]} : vector<8x192xbf16> to vector<8x64xbf16>
      %161 = arith.extf %159 : vector<8x64xbf16> to vector<8x64xf32>
      %162 = arith.mulf %161, %135 : vector<8x64xf32>
      %163 = arith.mulf %158, %157 : vector<8x64xbf16>
      %164 = arith.extf %163 : vector<8x64xbf16> to vector<8x64xf32>
      %165 = arith.addf %162, %164 : vector<8x64xf32>
      %166 = arith.truncf %165 : vector<8x64xf32> to vector<8x64xbf16>
      %167 = math.tanh %166 : vector<8x64xbf16>
      %168 = arith.mulf %160, %167 : vector<8x64xbf16>
      %169 = arith.extf %168 : vector<8x64xbf16> to vector<8x64xf32>
      %170 = arith.index_cast %144 : i32 to index
      %c0_43 = arith.constant 0 : index
      %171 = vector.load %arg8[%170, %c0_43] : memref<800x64xf32, #tpu.memory_space<vmem>>, vector<8x64xf32>
      tpu.vector_store %arg8[%170, %c0_43], %169 {strides = array<i32>} : memref<800x64xf32, #tpu.memory_space<vmem>>, vector<8x64xf32>,
      %c5_i32 = arith.constant 5 : i32
      %172 = arith.addi %21, %c5_i32 : i32
      %c8_i32_44 = arith.constant 8 : i32
      %173 = arith.muli %172, %c8_i32_44 : i32
      %174 = tpu.assume_multiple %173, 8 : i32
      %175 = arith.index_cast %174 : i32 to index
      %c0_45 = arith.constant 0 : index
      %176 = vector.load %arg1[%175, %c0_45] : memref<800x256xf32, #tpu.memory_space<vmem>>, vector<8x256xf32>
      %cst_46 = arith.constant dense<0.000000e+00> : vector<8x256xf32>
      %177 = tpu.matmul %168, %1, %cst_46 {dimension_numbers = #tpu.dot_dimension_numbers<[1], [0], [0], [1], [0, 0, 1, 1], [], []>} : vector<8x64xbf16>, vector<64x256xbf16>, vector<8x256xf32> -> vector<8x256xf32>
      %178 = arith.addf %176, %177 : vector<8x256xf32>
      %179 = arith.truncf %178 : vector<8x256xf32> to vector<8x256xbf16>
      %180 = vector.extract_strided_slice %179 {offsets = [0, 0], sizes = [8, 192], strides = [1, 1]} : vector<8x256xbf16> to vector<8x192xbf16>
      %181 = arith.negf %180 : vector<8x192xbf16>
      %182 = math.exp %181 : vector<8x192xbf16>
      %cst_47 = arith.constant 1.000000e+00 : bf16
      %183 = vector.broadcast %cst_47 : bf16 to vector<8x192xbf16>
      %184 = arith.addf %183, %182 : vector<8x192xbf16>
      %185 = arith.divf %183, %184 : vector<8x192xbf16>
      %186 = vector.extract_strided_slice %179 {offsets = [0, 192], sizes = [8, 64], strides = [1, 1]} : vector<8x256xbf16> to vector<8x64xbf16>
      %187 = math.tanh %186 : vector<8x64xbf16>
      %188 = vector.extract_strided_slice %185 {offsets = [0, 0], sizes = [8, 64], strides = [1, 1]} : vector<8x192xbf16> to vector<8x64xbf16>
      %189 = vector.extract_strided_slice %185 {offsets = [0, 64], sizes = [8, 64], strides = [1, 1]} : vector<8x192xbf16> to vector<8x64xbf16>
      %190 = vector.extract_strided_slice %185 {offsets = [0, 128], sizes = [8, 64], strides = [1, 1]} : vector<8x192xbf16> to vector<8x64xbf16>
      %191 = arith.extf %189 : vector<8x64xbf16> to vector<8x64xf32>
      %192 = arith.mulf %191, %165 : vector<8x64xf32>
      %193 = arith.mulf %188, %187 : vector<8x64xbf16>
      %194 = arith.extf %193 : vector<8x64xbf16> to vector<8x64xf32>
      %195 = arith.addf %192, %194 : vector<8x64xf32>
      %196 = arith.truncf %195 : vector<8x64xf32> to vector<8x64xbf16>
      %197 = math.tanh %196 : vector<8x64xbf16>
      %198 = arith.mulf %190, %197 : vector<8x64xbf16>
      %199 = arith.extf %198 : vector<8x64xbf16> to vector<8x64xf32>
      %200 = arith.index_cast %174 : i32 to index
      %c0_48 = arith.constant 0 : index
      %201 = vector.load %arg8[%200, %c0_48] : memref<800x64xf32, #tpu.memory_space<vmem>>, vector<8x64xf32>
      tpu.vector_store %arg8[%200, %c0_48], %199 {strides = array<i32>} : memref<800x64xf32, #tpu.memory_space<vmem>>, vector<8x64xf32>,
      %c6_i32 = arith.constant 6 : i32
      %202 = arith.addi %21, %c6_i32 : i32
      %c8_i32_49 = arith.constant 8 : i32
      %203 = arith.muli %202, %c8_i32_49 : i32
      %204 = tpu.assume_multiple %203, 8 : i32
      %205 = arith.index_cast %204 : i32 to index
      %c0_50 = arith.constant 0 : index
      %206 = vector.load %arg1[%205, %c0_50] : memref<800x256xf32, #tpu.memory_space<vmem>>, vector<8x256xf32>
      %cst_51 = arith.constant dense<0.000000e+00> : vector<8x256xf32>
      %207 = tpu.matmul %198, %1, %cst_51 {dimension_numbers = #tpu.dot_dimension_numbers<[1], [0], [0], [1], [0, 0, 1, 1], [], []>} : vector<8x64xbf16>, vector<64x256xbf16>, vector<8x256xf32> -> vector<8x256xf32>
      %208 = arith.addf %206, %207 : vector<8x256xf32>
      %209 = arith.truncf %208 : vector<8x256xf32> to vector<8x256xbf16>
      %210 = vector.extract_strided_slice %209 {offsets = [0, 0], sizes = [8, 192], strides = [1, 1]} : vector<8x256xbf16> to vector<8x192xbf16>
      %211 = arith.negf %210 : vector<8x192xbf16>
      %212 = math.exp %211 : vector<8x192xbf16>
      %cst_52 = arith.constant 1.000000e+00 : bf16
      %213 = vector.broadcast %cst_52 : bf16 to vector<8x192xbf16>
      %214 = arith.addf %213, %212 : vector<8x192xbf16>
      %215 = arith.divf %213, %214 : vector<8x192xbf16>
      %216 = vector.extract_strided_slice %209 {offsets = [0, 192], sizes = [8, 64], strides = [1, 1]} : vector<8x256xbf16> to vector<8x64xbf16>
      %217 = math.tanh %216 : vector<8x64xbf16>
      %218 = vector.extract_strided_slice %215 {offsets = [0, 0], sizes = [8, 64], strides = [1, 1]} : vector<8x192xbf16> to vector<8x64xbf16>
      %219 = vector.extract_strided_slice %215 {offsets = [0, 64], sizes = [8, 64], strides = [1, 1]} : vector<8x192xbf16> to vector<8x64xbf16>
      %220 = vector.extract_strided_slice %215 {offsets = [0, 128], sizes = [8, 64], strides = [1, 1]} : vector<8x192xbf16> to vector<8x64xbf16>
      %221 = arith.extf %219 : vector<8x64xbf16> to vector<8x64xf32>
      %222 = arith.mulf %221, %195 : vector<8x64xf32>
      %223 = arith.mulf %218, %217 : vector<8x64xbf16>
      %224 = arith.extf %223 : vector<8x64xbf16> to vector<8x64xf32>
      %225 = arith.addf %222, %224 : vector<8x64xf32>
      %226 = arith.truncf %225 : vector<8x64xf32> to vector<8x64xbf16>
      %227 = math.tanh %226 : vector<8x64xbf16>
      %228 = arith.mulf %220, %227 : vector<8x64xbf16>
      %229 = arith.extf %228 : vector<8x64xbf16> to vector<8x64xf32>
      %230 = arith.index_cast %204 : i32 to index
      %c0_53 = arith.constant 0 : index
      %231 = vector.load %arg8[%230, %c0_53] : memref<800x64xf32, #tpu.memory_space<vmem>>, vector<8x64xf32>
      tpu.vector_store %arg8[%230, %c0_53], %229 {strides = array<i32>} : memref<800x64xf32, #tpu.memory_space<vmem>>, vector<8x64xf32>,
      %c7_i32 = arith.constant 7 : i32
      %232 = arith.addi %21, %c7_i32 : i32
      %c8_i32_54 = arith.constant 8 : i32
      %233 = arith.muli %232, %c8_i32_54 : i32
      %234 = tpu.assume_multiple %233, 8 : i32
      %235 = arith.index_cast %234 : i32 to index
      %c0_55 = arith.constant 0 : index
      %236 = vector.load %arg1[%235, %c0_55] : memref<800x256xf32, #tpu.memory_space<vmem>>, vector<8x256xf32>
      %cst_56 = arith.constant dense<0.000000e+00> : vector<8x256xf32>
      %237 = tpu.matmul %228, %1, %cst_56 {dimension_numbers = #tpu.dot_dimension_numbers<[1], [0], [0], [1], [0, 0, 1, 1], [], []>} : vector<8x64xbf16>, vector<64x256xbf16>, vector<8x256xf32> -> vector<8x256xf32>
      %238 = arith.addf %236, %237 : vector<8x256xf32>
      %239 = arith.truncf %238 : vector<8x256xf32> to vector<8x256xbf16>
      %240 = vector.extract_strided_slice %239 {offsets = [0, 0], sizes = [8, 192], strides = [1, 1]} : vector<8x256xbf16> to vector<8x192xbf16>
      %241 = arith.negf %240 : vector<8x192xbf16>
      %242 = math.exp %241 : vector<8x192xbf16>
      %cst_57 = arith.constant 1.000000e+00 : bf16
      %243 = vector.broadcast %cst_57 : bf16 to vector<8x192xbf16>
      %244 = arith.addf %243, %242 : vector<8x192xbf16>
      %245 = arith.divf %243, %244 : vector<8x192xbf16>
      %246 = vector.extract_strided_slice %239 {offsets = [0, 192], sizes = [8, 64], strides = [1, 1]} : vector<8x256xbf16> to vector<8x64xbf16>
      %247 = math.tanh %246 : vector<8x64xbf16>
      %248 = vector.extract_strided_slice %245 {offsets = [0, 0], sizes = [8, 64], strides = [1, 1]} : vector<8x192xbf16> to vector<8x64xbf16>
      %249 = vector.extract_strided_slice %245 {offsets = [0, 64], sizes = [8, 64], strides = [1, 1]} : vector<8x192xbf16> to vector<8x64xbf16>
      %250 = vector.extract_strided_slice %245 {offsets = [0, 128], sizes = [8, 64], strides = [1, 1]} : vector<8x192xbf16> to vector<8x64xbf16>
      %251 = arith.extf %249 : vector<8x64xbf16> to vector<8x64xf32>
      %252 = arith.mulf %251, %225 : vector<8x64xf32>
      %253 = arith.mulf %248, %247 : vector<8x64xbf16>
      %254 = arith.extf %253 : vector<8x64xbf16> to vector<8x64xf32>
      %255 = arith.addf %252, %254 : vector<8x64xf32>
      %256 = arith.truncf %255 : vector<8x64xf32> to vector<8x64xbf16>
      %257 = math.tanh %256 : vector<8x64xbf16>
      %258 = arith.mulf %250, %257 : vector<8x64xbf16>
      %259 = arith.extf %258 : vector<8x64xbf16> to vector<8x64xf32>
      %260 = arith.index_cast %234 : i32 to index
      %c0_58 = arith.constant 0 : index
      %261 = vector.load %arg8[%260, %c0_58] : memref<800x64xf32, #tpu.memory_space<vmem>>, vector<8x64xf32>
      tpu.vector_store %arg8[%260, %c0_58], %259 {strides = array<i32>} : memref<800x64xf32, #tpu.memory_space<vmem>>, vector<8x64xf32>,
      %c8_i32_59 = arith.constant 8 : i32
      %262 = arith.addi %21, %c8_i32_59 : i32
      %c8_i32_60 = arith.constant 8 : i32
      %263 = arith.muli %262, %c8_i32_60 : i32
      %264 = tpu.assume_multiple %263, 8 : i32
      %265 = arith.index_cast %264 : i32 to index
      %c0_61 = arith.constant 0 : index
      %266 = vector.load %arg1[%265, %c0_61] : memref<800x256xf32, #tpu.memory_space<vmem>>, vector<8x256xf32>
      %cst_62 = arith.constant dense<0.000000e+00> : vector<8x256xf32>
      %267 = tpu.matmul %258, %1, %cst_62 {dimension_numbers = #tpu.dot_dimension_numbers<[1], [0], [0], [1], [0, 0, 1, 1], [], []>} : vector<8x64xbf16>, vector<64x256xbf16>, vector<8x256xf32> -> vector<8x256xf32>
      %268 = arith.addf %266, %267 : vector<8x256xf32>
      %269 = arith.truncf %268 : vector<8x256xf32> to vector<8x256xbf16>
      %270 = vector.extract_strided_slice %269 {offsets = [0, 0], sizes = [8, 192], strides = [1, 1]} : vector<8x256xbf16> to vector<8x192xbf16>
      %271 = arith.negf %270 : vector<8x192xbf16>
      %272 = math.exp %271 : vector<8x192xbf16>
      %cst_63 = arith.constant 1.000000e+00 : bf16
      %273 = vector.broadcast %cst_63 : bf16 to vector<8x192xbf16>
      %274 = arith.addf %273, %272 : vector<8x192xbf16>
      %275 = arith.divf %273, %274 : vector<8x192xbf16>
      %276 = vector.extract_strided_slice %269 {offsets = [0, 192], sizes = [8, 64], strides = [1, 1]} : vector<8x256xbf16> to vector<8x64xbf16>
      %277 = math.tanh %276 : vector<8x64xbf16>
      %278 = vector.extract_strided_slice %275 {offsets = [0, 0], sizes = [8, 64], strides = [1, 1]} : vector<8x192xbf16> to vector<8x64xbf16>
      %279 = vector.extract_strided_slice %275 {offsets = [0, 64], sizes = [8, 64], strides = [1, 1]} : vector<8x192xbf16> to vector<8x64xbf16>
      %280 = vector.extract_strided_slice %275 {offsets = [0, 128], sizes = [8, 64], strides = [1, 1]} : vector<8x192xbf16> to vector<8x64xbf16>
      %281 = arith.extf %279 : vector<8x64xbf16> to vector<8x64xf32>
      %282 = arith.mulf %281, %255 : vector<8x64xf32>
      %283 = arith.mulf %278, %277 : vector<8x64xbf16>
      %284 = arith.extf %283 : vector<8x64xbf16> to vector<8x64xf32>
      %285 = arith.addf %282, %284 : vector<8x64xf32>
      %286 = arith.truncf %285 : vector<8x64xf32> to vector<8x64xbf16>
      %287 = math.tanh %286 : vector<8x64xbf16>
      %288 = arith.mulf %280, %287 : vector<8x64xbf16>
      %289 = arith.extf %288 : vector<8x64xbf16> to vector<8x64xf32>
      %290 = arith.index_cast %264 : i32 to index
      %c0_64 = arith.constant 0 : index
      %291 = vector.load %arg8[%290, %c0_64] : memref<800x64xf32, #tpu.memory_space<vmem>>, vector<8x64xf32>
      tpu.vector_store %arg8[%290, %c0_64], %289 {strides = array<i32>} : memref<800x64xf32, #tpu.memory_space<vmem>>, vector<8x64xf32>,
      %c9_i32 = arith.constant 9 : i32
      %292 = arith.addi %21, %c9_i32 : i32
      %c8_i32_65 = arith.constant 8 : i32
      %293 = arith.muli %292, %c8_i32_65 : i32
      %294 = tpu.assume_multiple %293, 8 : i32
      %295 = arith.index_cast %294 : i32 to index
      %c0_66 = arith.constant 0 : index
      %296 = vector.load %arg1[%295, %c0_66] : memref<800x256xf32, #tpu.memory_space<vmem>>, vector<8x256xf32>
      %cst_67 = arith.constant dense<0.000000e+00> : vector<8x256xf32>
      %297 = tpu.matmul %288, %1, %cst_67 {dimension_numbers = #tpu.dot_dimension_numbers<[1], [0], [0], [1], [0, 0, 1, 1], [], []>} : vector<8x64xbf16>, vector<64x256xbf16>, vector<8x256xf32> -> vector<8x256xf32>
      %298 = arith.addf %296, %297 : vector<8x256xf32>
      %299 = arith.truncf %298 : vector<8x256xf32> to vector<8x256xbf16>
      %300 = vector.extract_strided_slice %299 {offsets = [0, 0], sizes = [8, 192], strides = [1, 1]} : vector<8x256xbf16> to vector<8x192xbf16>
      %301 = arith.negf %300 : vector<8x192xbf16>
      %302 = math.exp %301 : vector<8x192xbf16>
      %cst_68 = arith.constant 1.000000e+00 : bf16
      %303 = vector.broadcast %cst_68 : bf16 to vector<8x192xbf16>
      %304 = arith.addf %303, %302 : vector<8x192xbf16>
      %305 = arith.divf %303, %304 : vector<8x192xbf16>
      %306 = vector.extract_strided_slice %299 {offsets = [0, 192], sizes = [8, 64], strides = [1, 1]} : vector<8x256xbf16> to vector<8x64xbf16>
      %307 = math.tanh %306 : vector<8x64xbf16>
      %308 = vector.extract_strided_slice %305 {offsets = [0, 0], sizes = [8, 64], strides = [1, 1]} : vector<8x192xbf16> to vector<8x64xbf16>
      %309 = vector.extract_strided_slice %305 {offsets = [0, 64], sizes = [8, 64], strides = [1, 1]} : vector<8x192xbf16> to vector<8x64xbf16>
      %310 = vector.extract_strided_slice %305 {offsets = [0, 128], sizes = [8, 64], strides = [1, 1]} : vector<8x192xbf16> to vector<8x64xbf16>
      %311 = arith.extf %309 : vector<8x64xbf16> to vector<8x64xf32>
      %312 = arith.mulf %311, %285 : vector<8x64xf32>
      %313 = arith.mulf %308, %307 : vector<8x64xbf16>
      %314 = arith.extf %313 : vector<8x64xbf16> to vector<8x64xf32>
      %315 = arith.addf %312, %314 : vector<8x64xf32>
      %316 = arith.truncf %315 : vector<8x64xf32> to vector<8x64xbf16>
      %317 = math.tanh %316 : vector<8x64xbf16>
      %318 = arith.mulf %310, %317 : vector<8x64xbf16>
      %319 = arith.extf %318 : vector<8x64xbf16> to vector<8x64xf32>
      %320 = arith.index_cast %294 : i32 to index
      %c0_69 = arith.constant 0 : index
      %321 = vector.load %arg8[%320, %c0_69] : memref<800x64xf32, #tpu.memory_space<vmem>>, vector<8x64xf32>
      tpu.vector_store %arg8[%320, %c0_69], %319 {strides = array<i32>} : memref<800x64xf32, #tpu.memory_space<vmem>>, vector<8x64xf32>,
      scf.yield %318, %315 : vector<8x64xbf16>, vector<8x64xf32>
    }
    %c10_i32_2 = arith.constant 10 : i32
    %c0_3 = arith.constant 0 : index
    %c0_4 = arith.constant 0 : index
    %6 = vector.load %arg8[%c0_3, %c0_4] : memref<800x64xf32, #tpu.memory_space<vmem>>, vector<800x64xf32>
    %7 = arith.truncf %6 : vector<800x64xf32> to vector<800x64xbf16>
    %c0_5 = arith.constant 0 : index
    %c0_6 = arith.constant 0 : index
    %8 = vector.load %arg3[%c0_5, %c0_6] : memref<32x9xf32, #tpu.memory_space<vmem>>, vector<32x9xf32>
    %9 = arith.truncf %8 : vector<32x9xf32> to vector<32x9xbf16>
    %c0_7 = arith.constant 0 : index
    %c0_8 = arith.constant 0 : index
    %10 = vector.load %arg4[%c0_7, %c0_8] : memref<32x9xf32, #tpu.memory_space<vmem>>, vector<32x9xf32>
    %11 = arith.truncf %10 : vector<32x9xf32> to vector<32x9xbf16>
    %12 = vector.extract_strided_slice %7 {offsets = [0, 0], sizes = [800, 32], strides = [1, 1]} : vector<800x64xbf16> to vector<800x32xbf16>
    %cst_9 = arith.constant dense<0.000000e+00> : vector<800x9xf32>
    %13 = tpu.matmul %12, %9, %cst_9 {dimension_numbers = #tpu.dot_dimension_numbers<[1], [0], [0], [1], [0, 0, 1, 1], [], []>} : vector<800x32xbf16>, vector<32x9xbf16>, vector<800x9xf32> -> vector<800x9xf32>
    %c0_10 = arith.constant 0 : index
    %c0_11 = arith.constant 0 : index
    %14 = vector.load %arg5[%c0_10, %c0_11] : memref<1x9xf32, #tpu.memory_space<vmem>>, vector<1x9xf32>
    %15 = vector.broadcast %14 : vector<1x9xf32> to vector<800x9xf32>
    %16 = arith.addf %13, %15 : vector<800x9xf32>
    %c0_12 = arith.constant 0 : index
    %c0_13 = arith.constant 0 : index
    %17 = vector.load %arg6[%c0_12, %c0_13] : memref<800x9xf32, #tpu.memory_space<vmem>>, vector<800x9xf32>
    tpu.vector_store %arg6[%c0_12, %c0_13], %16 {strides = array<i32>} : memref<800x9xf32, #tpu.memory_space<vmem>>, vector<800x9xf32>,
    %18 = vector.extract_strided_slice %7 {offsets = [0, 32], sizes = [800, 32], strides = [1, 1]} : vector<800x64xbf16> to vector<800x32xbf16>
    %cst_14 = arith.constant dense<0.000000e+00> : vector<800x9xf32>
    %19 = tpu.matmul %18, %11, %cst_14 {dimension_numbers = #tpu.dot_dimension_numbers<[1], [0], [0], [1], [0, 0, 1, 1], [], []>} : vector<800x32xbf16>, vector<32x9xbf16>, vector<800x9xf32> -> vector<800x9xf32>
    %c0_15 = arith.constant 0 : index
    %c0_16 = arith.constant 0 : index
    %20 = vector.load %arg7[%c0_15, %c0_16] : memref<800x9xf32, #tpu.memory_space<vmem>>, vector<800x9xf32>
    tpu.vector_store %arg7[%c0_15, %c0_16], %19 {strides = array<i32>} : memref<800x9xf32, #tpu.memory_space<vmem>>, vector<800x9xf32>,
    return
  }
  func.func @transform_0(%arg0: i32) -> (i32, i32) {
    %c0_i32 = arith.constant 0 : i32
    %c0_i32_0 = arith.constant 0 : i32
    %c0_i32_1 = arith.constant 0 : i32
    return %c0_i32, %c0_i32_0 : i32, i32
  }
  func.func @transform_1(%arg0: i32) -> (i32, i32) {
    %c0_i32 = arith.constant 0 : i32
    %c0_i32_0 = arith.constant 0 : i32
    %c0_i32_1 = arith.constant 0 : i32
    return %c0_i32, %c0_i32_0 : i32, i32
  }
  func.func @transform_2(%arg0: i32) -> (i32, i32) {
    %c0_i32 = arith.constant 0 : i32
    %c0_i32_0 = arith.constant 0 : i32
    %c0_i32_1 = arith.constant 0 : i32
    return %c0_i32, %c0_i32_0 : i32, i32
  }
  func.func @transform_3(%arg0: i32) -> (i32, i32) {
    %c0_i32 = arith.constant 0 : i32
    %c0_i32_0 = arith.constant 0 : i32
    %c0_i32_1 = arith.constant 0 : i32
    return %c0_i32, %c0_i32_0 : i32, i32
  }
  func.func @transform_4(%arg0: i32) -> (i32, i32) {
    %c0_i32 = arith.constant 0 : i32
    %c0_i32_0 = arith.constant 0 : i32
    %c0_i32_1 = arith.constant 0 : i32
    return %c0_i32, %c0_i32_0 : i32, i32
  }
  func.func @transform_5(%arg0: i32) -> (i32, i32) {
    %c0_i32 = arith.constant 0 : i32
    %c0_i32_0 = arith.constant 0 : i32
    %c0_i32_1 = arith.constant 0 : i32
    return %c0_i32, %c0_i32_0 : i32, i32
  }
  func.func @transform_6(%arg0: i32) -> (i32, i32) {
    %c0_i32 = arith.constant 0 : i32
    %c0_i32_0 = arith.constant 0 : i32
    %c0_i32_1 = arith.constant 0 : i32
    return %c0_i32, %c0_i32_0 : i32, i32
  }
}

</mosaic_0001>

<llo_original>
// kernel: extraction_net_forward.1
$region0: #{extraction_net_forward.1}
  #allocation0 [shape = 'u32[]', space=smem, size = 0x4, offset = 0x4, fixed_abs, tag = 'smem constant byte address 0x4 - core index']
  #allocation1 [shape = 'u32[72,128]{1,0:T(1,128)}', space=vmem, size = 0x9000, scoped, tag = 'internal scratch']
  #allocation2 [shape = 'f32[800,64]{1,0:T(8,128)}', space=vmem, size = 0x64000, scoped, tag = 'scratch operand']
  %s0 = inlined_call_operand.vmem [shape: f32[800,256], index: 0, kind: input, shape index: {}]
  %s1 = inlined_call_operand.vmem [shape: f32[64,256], index: 1, kind: input, shape index: {}]
  %s2 = inlined_call_operand.vmem [shape: f32[32,9], index: 2, kind: input, shape index: {}]
  %s3 = inlined_call_operand.vmem [shape: f32[32,9], index: 3, kind: input, shape index: {}]
  %s4 = inlined_call_operand.vmem [shape: f32[1,9], index: 4, kind: input, shape index: {}]
  %s5 = inlined_call_operand.vmem [shape: f32[800,9], index: 5, kind: output, shape index: {0}]
  %s6 = inlined_call_operand.vmem [shape: f32[800,9], index: 6, kind: output, shape index: {1}]
  %7 = xla_tuple %s5, %s6
  %s8 = sld [smem:[#allocation0]]
  $region45: #{extraction_net_forward.1} parent=0
    _
  %s10 = ssub.s32 1, %s8
  %s11 = scalar_select 0, %s10, %s8
  // Predicated region
  $region2: #{extraction_net_forward.1} parent=0 // pred_check
    _
  $region3: #{extraction_net_forward.1} parent=0 // pred_check_branch
    %13 = sbr.rel (0) target = $region5
  $region4: #{extraction_net_forward.1} parent=0 // pred_region
    _
  $region5: #{extraction_net_forward.1} parent=0 // pred_fallthru
    _
  // Predicated region
  $region6: #{extraction_net_forward.1} parent=0 // pred_check
    _
  $region7: #{extraction_net_forward.1} parent=0 // pred_check_branch
    %15 = sbr.rel (0) target = $region9
  $region8: #{extraction_net_forward.1} parent=0 // pred_region
    _
  $region9: #{extraction_net_forward.1} parent=0 // pred_fallthru
    _
  // Predicated region
  $region10: #{extraction_net_forward.1} parent=0 // pred_check
    _
  $region11: #{extraction_net_forward.1} parent=0 // pred_check_branch
    %17 = sbr.rel (0) target = $region13
  $region12: #{extraction_net_forward.1} parent=0 // pred_region
    _
  $region13: #{extraction_net_forward.1} parent=0 // pred_fallthru
    _
  // Predicated region
  $region14: #{extraction_net_forward.1} parent=0 // pred_check
    _
  $region15: #{extraction_net_forward.1} parent=0 // pred_check_branch
    %19 = sbr.rel (0) target = $region17
  $region16: #{extraction_net_forward.1} parent=0 // pred_region
    _
  $region17: #{extraction_net_forward.1} parent=0 // pred_fallthru
    _
  // Predicated region
  $region18: #{extraction_net_forward.1} parent=0 // pred_check
    _
  $region19: #{extraction_net_forward.1} parent=0 // pred_check_branch
    %21 = sbr.rel (0) target = $region21
  $region20: #{extraction_net_forward.1} parent=0 // pred_region
    _
  $region21: #{extraction_net_forward.1} parent=0 // pred_fallthru
    _
  %v24 = vld [vmem:[%s1] sm:$0xff]
  %v25 = vld [vmem:[%s1 + $0x8] sm:$0xff]
  %v26 = vld [vmem:[%s1 + $0x10] sm:$0xff]
  %v27 = vld [vmem:[%s1 + $0x18] sm:$0xff]
  %v28 = vld [vmem:[%s1 + $0x20] sm:$0xff]
  %v29 = vld [vmem:[%s1 + $0x28] sm:$0xff]
  %v30 = vld [vmem:[%s1 + $0x30] sm:$0xff]
  %v31 = vld [vmem:[%s1 + $0x38] sm:$0xff]
  %v32 = vld [vmem:[%s1 + $0x40] sm:$0xff]
  %v33 = vld [vmem:[%s1 + $0x48] sm:$0xff]
  %v34 = vld [vmem:[%s1 + $0x50] sm:$0xff]
  %v35 = vld [vmem:[%s1 + $0x58] sm:$0xff]
  %v36 = vld [vmem:[%s1 + $0x60] sm:$0xff]
  %v37 = vld [vmem:[%s1 + $0x68] sm:$0xff]
  %v38 = vld [vmem:[%s1 + $0x70] sm:$0xff]
  %v39 = vld [vmem:[%s1 + $0x78] sm:$0xff]
  %v40 = vpack.c.bf16 %v26, %v24
  %v41 = vpack.c.bf16 %v27, %v25
  %v42 = vpack.c.bf16 %v30, %v28
  %v43 = vpack.c.bf16 %v31, %v29
  %v44 = vpack.c.bf16 %v34, %v32
  %v45 = vpack.c.bf16 %v35, %v33
  %v46 = vpack.c.bf16 %v38, %v36
  %v47 = vpack.c.bf16 %v39, %v37
  loop: start=0, step=1, limit=10
  $region22: #{extraction_net_forward.1} parent=0 // loop_pre_header
    _
  $region23: #{extraction_net_forward.1} parent=0 // loop_header
    %s49 = sphi 0, %s53
    %p50 = scmp.ge.s32.totalorder %s49, 10
    %v54 = vphi 0, %v1035
    %v55 = vphi 0.0, %v1020
  $region24: #{extraction_net_forward.1} parent=0 // loop_header_branch
    %52 = sbr.rel (%p50) target = $region28
  $region25: #{extraction_net_forward.1} parent=0 // loop_body
    %s56 = smul.u32 %s49, 10
    %s57 = smul.u32 %s49, 80
    %s58 = sshra.s32 %s57, 3
    %s59 = sand.u32 %s57, 7
    %s60 = smul.u32 %s58, 2
    %s61 = smul.addr %s60, 8
    %s62 = scalar_lea.vmem %s0, %s61
    %v63 = vld [vmem:[%s62] sm:$0xff]
    %v64 = vld [vmem:[%s62 + $0x8] sm:$0xff]
    %vm65 = vcmask 523264
    %v67 = vsel %vm65, %v54, 0
    %69 = vmatpush.bf16.msra.mxu0 0
    %70 = vmatpush.bf16.msra.mxu0 0
    %71 = vmatpush.bf16.msra.mxu0 0
    %72 = vmatpush.bf16.msra.mxu0 0
    %73 = vmatpush.bf16.msra.mxu0 %v46
    %74 = vmatpush.bf16.msra.mxu0 %v44
    %75 = vmatpush.bf16.msra.mxu0 %v42
    %76 = vmatpush.bf16.msra.mxu0 %v40
    %77 = vmatmul.bf16.gmra.mxu0 %v67
    %v78 = vpop.f32.mrf.mxu0
    %v79 = vadd.f32 0.0, %v78
    %v80 = vpop.f32.mrf.mxu0
    %81 = vdwg.mxu0
    %82 = vmatpush.bf16.msra.mxu0 0
    %83 = vmatpush.bf16.msra.mxu0 0
    %84 = vmatpush.bf16.msra.mxu0 0
    %85 = vmatpush.bf16.msra.mxu0 0
    %86 = vmatpush.bf16.msra.mxu0 %v47
    %87 = vmatpush.bf16.msra.mxu0 %v45
    %88 = vmatpush.bf16.msra.mxu0 %v43
    %89 = vmatpush.bf16.msra.mxu0 %v41
    %90 = vmatmul.bf16.gmra.mxu0 %v67
    %v91 = vpop.f32.mrf.mxu0
    %v92 = vadd.f32 0.0, %v91
    %v93 = vpop.f32.mrf.mxu0
    %94 = vdwg.mxu0
    %v95 = vadd.f32 %v63, %v79
    %v96 = vadd.f32 %v64, %v92
    %v97 = vpack.c.bf16 %v96, %v95
    %v98 = vxor.u32 %v97, 2147516416
    %v99 = vunpack.c.l.bf16 %v98
    %v100 = vunpack.c.h.bf16 %v98
    %v101 = vmul.f32 %v99, 1.442695
    %v102 = vpow.pop %v101
    %v103 = vmul.f32 %v100, 1.442695
    %v104 = vpow.pop %v103
    %v105 = vpack.c.bf16 %v104, %v102
    %v106 = vunpack.c.l.bf16 %v105
    %v107 = vunpack.c.h.bf16 %v105
    %v108 = vadd.f32 %v106, 1.0
    %v109 = vadd.f32 %v107, 1.0
    %v110 = vpack.c.bf16 %v109, %v108
    %v111 = vunpack.c.h.bf16 1065369472
    %v112 = vunpack.c.l.bf16 1065369472
    %v113 = vunpack.c.h.bf16 %v110
    %v114 = vunpack.c.l.bf16 %v110
    %v115 = vrcp.pop %v113
    %v116 = vmul.f32 %v111, %v115
    %v117 = vrcp.pop %v114
    %v118 = vmul.f32 %v112, %v117
    %v119 = vpack.c.bf16 %v116, %v118
    %121 = vrot.lane.b32.xlu0 %v97, 64
    %v122 = vpop.permute.xlu0 %121
    %v123 = vrot.slane %v122, 4
    %v125 = vunpack.c.l.bf16 %v123
    %v126 = vtanh.pop %v125
    %v127 = vpack.c.bf16 %v126, %v126
    %v128 = vunpack.c.l.bf16 %v119
    %v129 = vmul.f32 %v128, %v55
    %v130 = vunpack.c.l.bf16 %v127
    %v131 = vmul.f32 %v128, %v130
    %v132 = vpack.c.bf16 %v131, %v131
    %v133 = vunpack.c.l.bf16 %v132
    %135 = vrot.lane.b32.xlu0 %v133, 64
    %v136 = vpop.permute.xlu0 %135
    %v138 = vadd.f32 %v129, %v136
    %v139 = vpack.c.bf16 %v138, %v138
    %v140 = vunpack.c.l.bf16 %v139
    %v141 = vtanh.pop %v140
    %v142 = vpack.c.bf16 %v141, %v141
    %v144 = vrot.slane %v119, 4
    %v146 = vunpack.c.l.bf16 %v144
    %v147 = vunpack.c.l.bf16 %v142
    %149 = vrot.lane.b32.xlu0 %v147, 64
    %v150 = vpop.permute.xlu0 %149
    %v152 = vmul.f32 %v146, %v150
    %v153 = vpack.c.bf16 %v152, %v152
    %v154 = vunpack.c.l.bf16 %v153
    %s155 = scalar_lea.vmem [#allocation2], %s57
    %156 = vst.msk [vmem:[%s155] sm:$0xff] %vm65, %v154
    %s157 = sadd.s32 %s56, 1
    %s158 = smul.u32 %s157, 8
    %s159 = sshra.s32 %s158, 3
    %s160 = sand.u32 %s158, 7
    %s161 = smul.u32 %s159, 2
    %s162 = smul.addr %s161, 8
    %s163 = scalar_lea.vmem %s0, %s162
    %v164 = vld [vmem:[%s163] sm:$0xff]
    %v165 = vld [vmem:[%s163 + $0x8] sm:$0xff]
    %v167 = vsel %vm65, %v153, 0
    %169 = vmatpush.bf16.msra.mxu0 0
    %170 = vmatpush.bf16.msra.mxu0 0
    %171 = vmatpush.bf16.msra.mxu0 0
    %172 = vmatpush.bf16.msra.mxu0 0
    %173 = vmatpush.bf16.msra.mxu0 %v46
    %174 = vmatpush.bf16.msra.mxu0 %v44
    %175 = vmatpush.bf16.msra.mxu0 %v42
    %176 = vmatpush.bf16.msra.mxu0 %v40
    %177 = vmatmul.bf16.gmra.mxu0 %v167
    %v178 = vpop.f32.mrf.mxu0
    %v179 = vadd.f32 0.0, %v178
    %v180 = vpop.f32.mrf.mxu0
    %181 = vdwg.mxu0
    %182 = vmatpush.bf16.msra.mxu0 0
    %183 = vmatpush.bf16.msra.mxu0 0
    %184 = vmatpush.bf16.msra.mxu0 0
    %185 = vmatpush.bf16.msra.mxu0 0
    %186 = vmatpush.bf16.msra.mxu0 %v47
    %187 = vmatpush.bf16.msra.mxu0 %v45
    %188 = vmatpush.bf16.msra.mxu0 %v43
    %189 = vmatpush.bf16.msra.mxu0 %v41
    %190 = vmatmul.bf16.gmra.mxu0 %v167
    %v191 = vpop.f32.mrf.mxu0
    %v192 = vadd.f32 0.0, %v191
    %v193 = vpop.f32.mrf.mxu0
    %194 = vdwg.mxu0
    %v195 = vadd.f32 %v164, %v179
    %v196 = vadd.f32 %v165, %v192
    %v197 = vpack.c.bf16 %v196, %v195
    %v198 = vxor.u32 %v197, 2147516416
    %v199 = vunpack.c.l.bf16 %v198
    %v200 = vunpack.c.h.bf16 %v198
    %v201 = vmul.f32 %v199, 1.442695
    %v202 = vpow.pop %v201
    %v203 = vmul.f32 %v200, 1.442695
    %v204 = vpow.pop %v203
    %v205 = vpack.c.bf16 %v204, %v202
    %v206 = vunpack.c.l.bf16 %v205
    %v207 = vunpack.c.h.bf16 %v205
    %v208 = vadd.f32 %v206, 1.0
    %v209 = vadd.f32 %v207, 1.0
    %v210 = vpack.c.bf16 %v209, %v208
    %v211 = vunpack.c.h.bf16 %v210
    %v212 = vunpack.c.l.bf16 %v210
    %v213 = vrcp.pop %v211
    %v214 = vmul.f32 %v111, %v213
    %v215 = vrcp.pop %v212
    %v216 = vmul.f32 %v112, %v215
    %v217 = vpack.c.bf16 %v214, %v216
    %219 = vrot.lane.b32.xlu0 %v197, 64
    %v220 = vpop.permute.xlu0 %219
    %v221 = vrot.slane %v220, 4
    %v223 = vunpack.c.l.bf16 %v221
    %v224 = vtanh.pop %v223
    %v225 = vpack.c.bf16 %v224, %v224
    %v226 = vunpack.c.l.bf16 %v217
    %v227 = vmul.f32 %v226, %v138
    %v228 = vunpack.c.l.bf16 %v225
    %v229 = vmul.f32 %v226, %v228
    %v230 = vpack.c.bf16 %v229, %v229
    %v231 = vunpack.c.l.bf16 %v230
    %233 = vrot.lane.b32.xlu0 %v231, 64
    %v234 = vpop.permute.xlu0 %233
    %v236 = vadd.f32 %v227, %v234
    %v237 = vpack.c.bf16 %v236, %v236
    %v238 = vunpack.c.l.bf16 %v237
    %v239 = vtanh.pop %v238
    %v240 = vpack.c.bf16 %v239, %v239
    %v242 = vrot.slane %v217, 4
    %v244 = vunpack.c.l.bf16 %v242
    %v245 = vunpack.c.l.bf16 %v240
    %247 = vrot.lane.b32.xlu0 %v245, 64
    %v248 = vpop.permute.xlu0 %247
    %v250 = vmul.f32 %v244, %v248
    %v251 = vpack.c.bf16 %v250, %v250
    %v252 = vunpack.c.l.bf16 %v251
    %s253 = scalar_lea.vmem [#allocation2], %s158
    %254 = vst.msk [vmem:[%s253] sm:$0xff] %vm65, %v252
    %s255 = sadd.s32 %s56, 2
    %s256 = smul.u32 %s255, 8
    %s257 = sshra.s32 %s256, 3
    %s258 = sand.u32 %s256, 7
    %s259 = smul.u32 %s257, 2
    %s260 = smul.addr %s259, 8
    %s261 = scalar_lea.vmem %s0, %s260
    %v262 = vld [vmem:[%s261] sm:$0xff]
    %v263 = vld [vmem:[%s261 + $0x8] sm:$0xff]
    %v265 = vsel %vm65, %v251, 0
    %267 = vmatpush.bf16.msra.mxu0 0
    %268 = vmatpush.bf16.msra.mxu0 0
    %269 = vmatpush.bf16.msra.mxu0 0
    %270 = vmatpush.bf16.msra.mxu0 0
    %271 = vmatpush.bf16.msra.mxu0 %v46
    %272 = vmatpush.bf16.msra.mxu0 %v44
    %273 = vmatpush.bf16.msra.mxu0 %v42
    %274 = vmatpush.bf16.msra.mxu0 %v40
    %275 = vmatmul.bf16.gmra.mxu0 %v265
    %v276 = vpop.f32.mrf.mxu0
    %v277 = vadd.f32 0.0, %v276
    %v278 = vpop.f32.mrf.mxu0
    %279 = vdwg.mxu0
    %280 = vmatpush.bf16.msra.mxu0 0
    %281 = vmatpush.bf16.msra.mxu0 0
    %282 = vmatpush.bf16.msra.mxu0 0
    %283 = vmatpush.bf16.msra.mxu0 0
    %284 = vmatpush.bf16.msra.mxu0 %v47
    %285 = vmatpush.bf16.msra.mxu0 %v45
    %286 = vmatpush.bf16.msra.mxu0 %v43
    %287 = vmatpush.bf16.msra.mxu0 %v41
    %288 = vmatmul.bf16.gmra.mxu0 %v265
    %v289 = vpop.f32.mrf.mxu0
    %v290 = vadd.f32 0.0, %v289
    %v291 = vpop.f32.mrf.mxu0
    %292 = vdwg.mxu0
    %v293 = vadd.f32 %v262, %v277
    %v294 = vadd.f32 %v263, %v290
    %v295 = vpack.c.bf16 %v294, %v293
    %v296 = vxor.u32 %v295, 2147516416
    %v297 = vunpack.c.l.bf16 %v296
    %v298 = vunpack.c.h.bf16 %v296
    %v299 = vmul.f32 %v297, 1.442695
    %v300 = vpow.pop %v299
    %v301 = vmul.f32 %v298, 1.442695
    %v302 = vpow.pop %v301
    %v303 = vpack.c.bf16 %v302, %v300
    %v304 = vunpack.c.l.bf16 %v303
    %v305 = vunpack.c.h.bf16 %v303
    %v306 = vadd.f32 %v304, 1.0
    %v307 = vadd.f32 %v305, 1.0
    %v308 = vpack.c.bf16 %v307, %v306
    %v309 = vunpack.c.h.bf16 %v308
    %v310 = vunpack.c.l.bf16 %v308
    %v311 = vrcp.pop %v309
    %v312 = vmul.f32 %v111, %v311
    %v313 = vrcp.pop %v310
    %v314 = vmul.f32 %v112, %v313
    %v315 = vpack.c.bf16 %v312, %v314
    %317 = vrot.lane.b32.xlu0 %v295, 64
    %v318 = vpop.permute.xlu0 %317
    %v319 = vrot.slane %v318, 4
    %v321 = vunpack.c.l.bf16 %v319
    %v322 = vtanh.pop %v321
    %v323 = vpack.c.bf16 %v322, %v322
    %v324 = vunpack.c.l.bf16 %v315
    %v325 = vmul.f32 %v324, %v236
    %v326 = vunpack.c.l.bf16 %v323
    %v327 = vmul.f32 %v324, %v326
    %v328 = vpack.c.bf16 %v327, %v327
    %v329 = vunpack.c.l.bf16 %v328
    %331 = vrot.lane.b32.xlu0 %v329, 64
    %v332 = vpop.permute.xlu0 %331
    %v334 = vadd.f32 %v325, %v332
    %v335 = vpack.c.bf16 %v334, %v334
    %v336 = vunpack.c.l.bf16 %v335
    %v337 = vtanh.pop %v336
    %v338 = vpack.c.bf16 %v337, %v337
    %v340 = vrot.slane %v315, 4
    %v342 = vunpack.c.l.bf16 %v340
    %v343 = vunpack.c.l.bf16 %v338
    %345 = vrot.lane.b32.xlu0 %v343, 64
    %v346 = vpop.permute.xlu0 %345
    %v348 = vmul.f32 %v342, %v346
    %v349 = vpack.c.bf16 %v348, %v348
    %v350 = vunpack.c.l.bf16 %v349
    %s351 = scalar_lea.vmem [#allocation2], %s256
    %352 = vst.msk [vmem:[%s351] sm:$0xff] %vm65, %v350
    %s353 = sadd.s32 %s56, 3
    %s354 = smul.u32 %s353, 8
    %s355 = sshra.s32 %s354, 3
    %s356 = sand.u32 %s354, 7
    %s357 = smul.u32 %s355, 2
    %s358 = smul.addr %s357, 8
    %s359 = scalar_lea.vmem %s0, %s358
    %v360 = vld [vmem:[%s359] sm:$0xff]
    %v361 = vld [vmem:[%s359 + $0x8] sm:$0xff]
    %v363 = vsel %vm65, %v349, 0
    %365 = vmatpush.bf16.msra.mxu0 0
    %366 = vmatpush.bf16.msra.mxu0 0
    %367 = vmatpush.bf16.msra.mxu0 0
    %368 = vmatpush.bf16.msra.mxu0 0
    %369 = vmatpush.bf16.msra.mxu0 %v46
    %370 = vmatpush.bf16.msra.mxu0 %v44
    %371 = vmatpush.bf16.msra.mxu0 %v42
    %372 = vmatpush.bf16.msra.mxu0 %v40
    %373 = vmatmul.bf16.gmra.mxu0 %v363
    %v374 = vpop.f32.mrf.mxu0
    %v375 = vadd.f32 0.0, %v374
    %v376 = vpop.f32.mrf.mxu0
    %377 = vdwg.mxu0
    %378 = vmatpush.bf16.msra.mxu0 0
    %379 = vmatpush.bf16.msra.mxu0 0
    %380 = vmatpush.bf16.msra.mxu0 0
    %381 = vmatpush.bf16.msra.mxu0 0
    %382 = vmatpush.bf16.msra.mxu0 %v47
    %383 = vmatpush.bf16.msra.mxu0 %v45
    %384 = vmatpush.bf16.msra.mxu0 %v43
    %385 = vmatpush.bf16.msra.mxu0 %v41
    %386 = vmatmul.bf16.gmra.mxu0 %v363
    %v387 = vpop.f32.mrf.mxu0
    %v388 = vadd.f32 0.0, %v387
    %v389 = vpop.f32.mrf.mxu0
    %390 = vdwg.mxu0
    %v391 = vadd.f32 %v360, %v375
    %v392 = vadd.f32 %v361, %v388
    %v393 = vpack.c.bf16 %v392, %v391
    %v394 = vxor.u32 %v393, 2147516416
    %v395 = vunpack.c.l.bf16 %v394
    %v396 = vunpack.c.h.bf16 %v394
    %v397 = vmul.f32 %v395, 1.442695
    %v398 = vpow.pop %v397
    %v399 = vmul.f32 %v396, 1.442695
    %v400 = vpow.pop %v399
    %v401 = vpack.c.bf16 %v400, %v398
    %v402 = vunpack.c.l.bf16 %v401
    %v403 = vunpack.c.h.bf16 %v401
    %v404 = vadd.f32 %v402, 1.0
    %v405 = vadd.f32 %v403, 1.0
    %v406 = vpack.c.bf16 %v405, %v404
    %v407 = vunpack.c.h.bf16 %v406
    %v408 = vunpack.c.l.bf16 %v406
    %v409 = vrcp.pop %v407
    %v410 = vmul.f32 %v111, %v409
    %v411 = vrcp.pop %v408
    %v412 = vmul.f32 %v112, %v411
    %v413 = vpack.c.bf16 %v410, %v412
    %415 = vrot.lane.b32.xlu0 %v393, 64
    %v416 = vpop.permute.xlu0 %415
    %v417 = vrot.slane %v416, 4
    %v419 = vunpack.c.l.bf16 %v417
    %v420 = vtanh.pop %v419
    %v421 = vpack.c.bf16 %v420, %v420
    %v422 = vunpack.c.l.bf16 %v413
    %v423 = vmul.f32 %v422, %v334
    %v424 = vunpack.c.l.bf16 %v421
    %v425 = vmul.f32 %v422, %v424
    %v426 = vpack.c.bf16 %v425, %v425
    %v427 = vunpack.c.l.bf16 %v426
    %429 = vrot.lane.b32.xlu0 %v427, 64
    %v430 = vpop.permute.xlu0 %429
    %v432 = vadd.f32 %v423, %v430
    %v433 = vpack.c.bf16 %v432, %v432
    %v434 = vunpack.c.l.bf16 %v433
    %v435 = vtanh.pop %v434
    %v436 = vpack.c.bf16 %v435, %v435
    %v438 = vrot.slane %v413, 4
    %v440 = vunpack.c.l.bf16 %v438
    %v441 = vunpack.c.l.bf16 %v436
    %443 = vrot.lane.b32.xlu0 %v441, 64
    %v444 = vpop.permute.xlu0 %443
    %v446 = vmul.f32 %v440, %v444
    %v447 = vpack.c.bf16 %v446, %v446
    %v448 = vunpack.c.l.bf16 %v447
    %s449 = scalar_lea.vmem [#allocation2], %s354
    %450 = vst.msk [vmem:[%s449] sm:$0xff] %vm65, %v448
    %s451 = sadd.s32 %s56, 4
    %s452 = smul.u32 %s451, 8
    %s453 = sshra.s32 %s452, 3
    %s454 = sand.u32 %s452, 7
    %s455 = smul.u32 %s453, 2
    %s456 = smul.addr %s455, 8
    %s457 = scalar_lea.vmem %s0, %s456
    %v458 = vld [vmem:[%s457] sm:$0xff]
    %v459 = vld [vmem:[%s457 + $0x8] sm:$0xff]
    %v461 = vsel %vm65, %v447, 0
    %463 = vmatpush.bf16.msra.mxu0 0
    %464 = vmatpush.bf16.msra.mxu0 0
    %465 = vmatpush.bf16.msra.mxu0 0
    %466 = vmatpush.bf16.msra.mxu0 0
    %467 = vmatpush.bf16.msra.mxu0 %v46
    %468 = vmatpush.bf16.msra.mxu0 %v44
    %469 = vmatpush.bf16.msra.mxu0 %v42
    %470 = vmatpush.bf16.msra.mxu0 %v40
    %471 = vmatmul.bf16.gmra.mxu0 %v461
    %v472 = vpop.f32.mrf.mxu0
    %v473 = vadd.f32 0.0, %v472
    %v474 = vpop.f32.mrf.mxu0
    %475 = vdwg.mxu0
    %476 = vmatpush.bf16.msra.mxu0 0
    %477 = vmatpush.bf16.msra.mxu0 0
    %478 = vmatpush.bf16.msra.mxu0 0
    %479 = vmatpush.bf16.msra.mxu0 0
    %480 = vmatpush.bf16.msra.mxu0 %v47
    %481 = vmatpush.bf16.msra.mxu0 %v45
    %482 = vmatpush.bf16.msra.mxu0 %v43
    %483 = vmatpush.bf16.msra.mxu0 %v41
    %484 = vmatmul.bf16.gmra.mxu0 %v461
    %v485 = vpop.f32.mrf.mxu0
    %v486 = vadd.f32 0.0, %v485
    %v487 = vpop.f32.mrf.mxu0
    %488 = vdwg.mxu0
    %v489 = vadd.f32 %v458, %v473
    %v490 = vadd.f32 %v459, %v486
    %v491 = vpack.c.bf16 %v490, %v489
    %v492 = vxor.u32 %v491, 2147516416
    %v493 = vunpack.c.l.bf16 %v492
    %v494 = vunpack.c.h.bf16 %v492
    %v495 = vmul.f32 %v493, 1.442695
    %v496 = vpow.pop %v495
    %v497 = vmul.f32 %v494, 1.442695
    %v498 = vpow.pop %v497
    %v499 = vpack.c.bf16 %v498, %v496
    %v500 = vunpack.c.l.bf16 %v499
    %v501 = vunpack.c.h.bf16 %v499
    %v502 = vadd.f32 %v500, 1.0
    %v503 = vadd.f32 %v501, 1.0
    %v504 = vpack.c.bf16 %v503, %v502
    %v505 = vunpack.c.h.bf16 %v504
    %v506 = vunpack.c.l.bf16 %v504
    %v507 = vrcp.pop %v505
    %v508 = vmul.f32 %v111, %v507
    %v509 = vrcp.pop %v506
    %v510 = vmul.f32 %v112, %v509
    %v511 = vpack.c.bf16 %v508, %v510
    %513 = vrot.lane.b32.xlu0 %v491, 64
    %v514 = vpop.permute.xlu0 %513
    %v515 = vrot.slane %v514, 4
    %v517 = vunpack.c.l.bf16 %v515
    %v518 = vtanh.pop %v517
    %v519 = vpack.c.bf16 %v518, %v518
    %v520 = vunpack.c.l.bf16 %v511
    %v521 = vmul.f32 %v520, %v432
    %v522 = vunpack.c.l.bf16 %v519
    %v523 = vmul.f32 %v520, %v522
    %v524 = vpack.c.bf16 %v523, %v523
    %v525 = vunpack.c.l.bf16 %v524
    %527 = vrot.lane.b32.xlu0 %v525, 64
    %v528 = vpop.permute.xlu0 %527
    %v530 = vadd.f32 %v521, %v528
    %v531 = vpack.c.bf16 %v530, %v530
    %v532 = vunpack.c.l.bf16 %v531
    %v533 = vtanh.pop %v532
    %v534 = vpack.c.bf16 %v533, %v533
    %v536 = vrot.slane %v511, 4
    %v538 = vunpack.c.l.bf16 %v536
    %v539 = vunpack.c.l.bf16 %v534
    %541 = vrot.lane.b32.xlu0 %v539, 64
    %v542 = vpop.permute.xlu0 %541
    %v544 = vmul.f32 %v538, %v542
    %v545 = vpack.c.bf16 %v544, %v544
    %v546 = vunpack.c.l.bf16 %v545
    %s547 = scalar_lea.vmem [#allocation2], %s452
    %548 = vst.msk [vmem:[%s547] sm:$0xff] %vm65, %v546
    %s549 = sadd.s32 %s56, 5
    %s550 = smul.u32 %s549, 8
    %s551 = sshra.s32 %s550, 3
    %s552 = sand.u32 %s550, 7
    %s553 = smul.u32 %s551, 2
    %s554 = smul.addr %s553, 8
    %s555 = scalar_lea.vmem %s0, %s554
    %v556 = vld [vmem:[%s555] sm:$0xff]
    %v557 = vld [vmem:[%s555 + $0x8] sm:$0xff]
    %v559 = vsel %vm65, %v545, 0
    %561 = vmatpush.bf16.msra.mxu0 0
    %562 = vmatpush.bf16.msra.mxu0 0
    %563 = vmatpush.bf16.msra.mxu0 0
    %564 = vmatpush.bf16.msra.mxu0 0
    %565 = vmatpush.bf16.msra.mxu0 %v46
    %566 = vmatpush.bf16.msra.mxu0 %v44
    %567 = vmatpush.bf16.msra.mxu0 %v42
    %568 = vmatpush.bf16.msra.mxu0 %v40
    %569 = vmatmul.bf16.gmra.mxu0 %v559
    %v570 = vpop.f32.mrf.mxu0
    %v571 = vadd.f32 0.0, %v570
    %v572 = vpop.f32.mrf.mxu0
    %573 = vdwg.mxu0
    %574 = vmatpush.bf16.msra.mxu0 0
    %575 = vmatpush.bf16.msra.mxu0 0
    %576 = vmatpush.bf16.msra.mxu0 0
    %577 = vmatpush.bf16.msra.mxu0 0
    %578 = vmatpush.bf16.msra.mxu0 %v47
    %579 = vmatpush.bf16.msra.mxu0 %v45
    %580 = vmatpush.bf16.msra.mxu0 %v43
    %581 = vmatpush.bf16.msra.mxu0 %v41
    %582 = vmatmul.bf16.gmra.mxu0 %v559
    %v583 = vpop.f32.mrf.mxu0
    %v584 = vadd.f32 0.0, %v583
    %v585 = vpop.f32.mrf.mxu0
    %586 = vdwg.mxu0
    %v587 = vadd.f32 %v556, %v571
    %v588 = vadd.f32 %v557, %v584
    %v589 = vpack.c.bf16 %v588, %v587
    %v590 = vxor.u32 %v589, 2147516416
    %v591 = vunpack.c.l.bf16 %v590
    %v592 = vunpack.c.h.bf16 %v590
    %v593 = vmul.f32 %v591, 1.442695
    %v594 = vpow.pop %v593
    %v595 = vmul.f32 %v592, 1.442695
    %v596 = vpow.pop %v595
    %v597 = vpack.c.bf16 %v596, %v594
    %v598 = vunpack.c.l.bf16 %v597
    %v599 = vunpack.c.h.bf16 %v597
    %v600 = vadd.f32 %v598, 1.0
    %v601 = vadd.f32 %v599, 1.0
    %v602 = vpack.c.bf16 %v601, %v600
    %v603 = vunpack.c.h.bf16 %v602
    %v604 = vunpack.c.l.bf16 %v602
    %v605 = vrcp.pop %v603
    %v606 = vmul.f32 %v111, %v605
    %v607 = vrcp.pop %v604
    %v608 = vmul.f32 %v112, %v607
    %v609 = vpack.c.bf16 %v606, %v608
    %611 = vrot.lane.b32.xlu0 %v589, 64
    %v612 = vpop.permute.xlu0 %611
    %v613 = vrot.slane %v612, 4
    %v615 = vunpack.c.l.bf16 %v613
    %v616 = vtanh.pop %v615
    %v617 = vpack.c.bf16 %v616, %v616
    %v618 = vunpack.c.l.bf16 %v609
    %v619 = vmul.f32 %v618, %v530
    %v620 = vunpack.c.l.bf16 %v617
    %v621 = vmul.f32 %v618, %v620
    %v622 = vpack.c.bf16 %v621, %v621
    %v623 = vunpack.c.l.bf16 %v622
    %625 = vrot.lane.b32.xlu0 %v623, 64
    %v626 = vpop.permute.xlu0 %625
    %v628 = vadd.f32 %v619, %v626
    %v629 = vpack.c.bf16 %v628, %v628
    %v630 = vunpack.c.l.bf16 %v629
    %v631 = vtanh.pop %v630
    %v632 = vpack.c.bf16 %v631, %v631
    %v634 = vrot.slane %v609, 4
    %v636 = vunpack.c.l.bf16 %v634
    %v637 = vunpack.c.l.bf16 %v632
    %639 = vrot.lane.b32.xlu0 %v637, 64
    %v640 = vpop.permute.xlu0 %639
    %v642 = vmul.f32 %v636, %v640
    %v643 = vpack.c.bf16 %v642, %v642
    %v644 = vunpack.c.l.bf16 %v643
    %s645 = scalar_lea.vmem [#allocation2], %s550
    %646 = vst.msk [vmem:[%s645] sm:$0xff] %vm65, %v644
    %s647 = sadd.s32 %s56, 6
    %s648 = smul.u32 %s647, 8
    %s649 = sshra.s32 %s648, 3
    %s650 = sand.u32 %s648, 7
    %s651 = smul.u32 %s649, 2
    %s652 = smul.addr %s651, 8
    %s653 = scalar_lea.vmem %s0, %s652
    %v654 = vld [vmem:[%s653] sm:$0xff]
    %v655 = vld [vmem:[%s653 + $0x8] sm:$0xff]
    %v657 = vsel %vm65, %v643, 0
    %659 = vmatpush.bf16.msra.mxu0 0
    %660 = vmatpush.bf16.msra.mxu0 0
    %661 = vmatpush.bf16.msra.mxu0 0
    %662 = vmatpush.bf16.msra.mxu0 0
    %663 = vmatpush.bf16.msra.mxu0 %v46
    %664 = vmatpush.bf16.msra.mxu0 %v44
    %665 = vmatpush.bf16.msra.mxu0 %v42
    %666 = vmatpush.bf16.msra.mxu0 %v40
    %667 = vmatmul.bf16.gmra.mxu0 %v657
    %v668 = vpop.f32.mrf.mxu0
    %v669 = vadd.f32 0.0, %v668
    %v670 = vpop.f32.mrf.mxu0
    %671 = vdwg.mxu0
    %672 = vmatpush.bf16.msra.mxu0 0
    %673 = vmatpush.bf16.msra.mxu0 0
    %674 = vmatpush.bf16.msra.mxu0 0
    %675 = vmatpush.bf16.msra.mxu0 0
    %676 = vmatpush.bf16.msra.mxu0 %v47
    %677 = vmatpush.bf16.msra.mxu0 %v45
    %678 = vmatpush.bf16.msra.mxu0 %v43
    %679 = vmatpush.bf16.msra.mxu0 %v41
    %680 = vmatmul.bf16.gmra.mxu0 %v657
    %v681 = vpop.f32.mrf.mxu0
    %v682 = vadd.f32 0.0, %v681
    %v683 = vpop.f32.mrf.mxu0
    %684 = vdwg.mxu0
    %v685 = vadd.f32 %v654, %v669
    %v686 = vadd.f32 %v655, %v682
    %v687 = vpack.c.bf16 %v686, %v685
    %v688 = vxor.u32 %v687, 2147516416
    %v689 = vunpack.c.l.bf16 %v688
    %v690 = vunpack.c.h.bf16 %v688
    %v691 = vmul.f32 %v689, 1.442695
    %v692 = vpow.pop %v691
    %v693 = vmul.f32 %v690, 1.442695
    %v694 = vpow.pop %v693
    %v695 = vpack.c.bf16 %v694, %v692
    %v696 = vunpack.c.l.bf16 %v695
    %v697 = vunpack.c.h.bf16 %v695
    %v698 = vadd.f32 %v696, 1.0
    %v699 = vadd.f32 %v697, 1.0
    %v700 = vpack.c.bf16 %v699, %v698
    %v701 = vunpack.c.h.bf16 %v700
    %v702 = vunpack.c.l.bf16 %v700
    %v703 = vrcp.pop %v701
    %v704 = vmul.f32 %v111, %v703
    %v705 = vrcp.pop %v702
    %v706 = vmul.f32 %v112, %v705
    %v707 = vpack.c.bf16 %v704, %v706
    %709 = vrot.lane.b32.xlu0 %v687, 64
    %v710 = vpop.permute.xlu0 %709
    %v711 = vrot.slane %v710, 4
    %v713 = vunpack.c.l.bf16 %v711
    %v714 = vtanh.pop %v713
    %v715 = vpack.c.bf16 %v714, %v714
    %v716 = vunpack.c.l.bf16 %v707
    %v717 = vmul.f32 %v716, %v628
    %v718 = vunpack.c.l.bf16 %v715
    %v719 = vmul.f32 %v716, %v718
    %v720 = vpack.c.bf16 %v719, %v719
    %v721 = vunpack.c.l.bf16 %v720
    %723 = vrot.lane.b32.xlu0 %v721, 64
    %v724 = vpop.permute.xlu0 %723
    %v726 = vadd.f32 %v717, %v724
    %v727 = vpack.c.bf16 %v726, %v726
    %v728 = vunpack.c.l.bf16 %v727
    %v729 = vtanh.pop %v728
    %v730 = vpack.c.bf16 %v729, %v729
    %v732 = vrot.slane %v707, 4
    %v734 = vunpack.c.l.bf16 %v732
    %v735 = vunpack.c.l.bf16 %v730
    %737 = vrot.lane.b32.xlu0 %v735, 64
    %v738 = vpop.permute.xlu0 %737
    %v740 = vmul.f32 %v734, %v738
    %v741 = vpack.c.bf16 %v740, %v740
    %v742 = vunpack.c.l.bf16 %v741
    %s743 = scalar_lea.vmem [#allocation2], %s648
    %744 = vst.msk [vmem:[%s743] sm:$0xff] %vm65, %v742
    %s745 = sadd.s32 %s56, 7
    %s746 = smul.u32 %s745, 8
    %s747 = sshra.s32 %s746, 3
    %s748 = sand.u32 %s746, 7
    %s749 = smul.u32 %s747, 2
    %s750 = smul.addr %s749, 8
    %s751 = scalar_lea.vmem %s0, %s750
    %v752 = vld [vmem:[%s751] sm:$0xff]
    %v753 = vld [vmem:[%s751 + $0x8] sm:$0xff]
    %v755 = vsel %vm65, %v741, 0
    %757 = vmatpush.bf16.msra.mxu0 0
    %758 = vmatpush.bf16.msra.mxu0 0
    %759 = vmatpush.bf16.msra.mxu0 0
    %760 = vmatpush.bf16.msra.mxu0 0
    %761 = vmatpush.bf16.msra.mxu0 %v46
    %762 = vmatpush.bf16.msra.mxu0 %v44
    %763 = vmatpush.bf16.msra.mxu0 %v42
    %764 = vmatpush.bf16.msra.mxu0 %v40
    %765 = vmatmul.bf16.gmra.mxu0 %v755
    %v766 = vpop.f32.mrf.mxu0
    %v767 = vadd.f32 0.0, %v766
    %v768 = vpop.f32.mrf.mxu0
    %769 = vdwg.mxu0
    %770 = vmatpush.bf16.msra.mxu0 0
    %771 = vmatpush.bf16.msra.mxu0 0
    %772 = vmatpush.bf16.msra.mxu0 0
    %773 = vmatpush.bf16.msra.mxu0 0
    %774 = vmatpush.bf16.msra.mxu0 %v47
    %775 = vmatpush.bf16.msra.mxu0 %v45
    %776 = vmatpush.bf16.msra.mxu0 %v43
    %777 = vmatpush.bf16.msra.mxu0 %v41
    %778 = vmatmul.bf16.gmra.mxu0 %v755
    %v779 = vpop.f32.mrf.mxu0
    %v780 = vadd.f32 0.0, %v779
    %v781 = vpop.f32.mrf.mxu0
    %782 = vdwg.mxu0
    %v783 = vadd.f32 %v752, %v767
    %v784 = vadd.f32 %v753, %v780
    %v785 = vpack.c.bf16 %v784, %v783
    %v786 = vxor.u32 %v785, 2147516416
    %v787 = vunpack.c.l.bf16 %v786
    %v788 = vunpack.c.h.bf16 %v786
    %v789 = vmul.f32 %v787, 1.442695
    %v790 = vpow.pop %v789
    %v791 = vmul.f32 %v788, 1.442695
    %v792 = vpow.pop %v791
    %v793 = vpack.c.bf16 %v792, %v790
    %v794 = vunpack.c.l.bf16 %v793
    %v795 = vunpack.c.h.bf16 %v793
    %v796 = vadd.f32 %v794, 1.0
    %v797 = vadd.f32 %v795, 1.0
    %v798 = vpack.c.bf16 %v797, %v796
    %v799 = vunpack.c.h.bf16 %v798
    %v800 = vunpack.c.l.bf16 %v798
    %v801 = vrcp.pop %v799
    %v802 = vmul.f32 %v111, %v801
    %v803 = vrcp.pop %v800
    %v804 = vmul.f32 %v112, %v803
    %v805 = vpack.c.bf16 %v802, %v804
    %807 = vrot.lane.b32.xlu0 %v785, 64
    %v808 = vpop.permute.xlu0 %807
    %v809 = vrot.slane %v808, 4
    %v811 = vunpack.c.l.bf16 %v809
    %v812 = vtanh.pop %v811
    %v813 = vpack.c.bf16 %v812, %v812
    %v814 = vunpack.c.l.bf16 %v805
    %v815 = vmul.f32 %v814, %v726
    %v816 = vunpack.c.l.bf16 %v813
    %v817 = vmul.f32 %v814, %v816
    %v818 = vpack.c.bf16 %v817, %v817
    %v819 = vunpack.c.l.bf16 %v818
    %821 = vrot.lane.b32.xlu0 %v819, 64
    %v822 = vpop.permute.xlu0 %821
    %v824 = vadd.f32 %v815, %v822
    %v825 = vpack.c.bf16 %v824, %v824
    %v826 = vunpack.c.l.bf16 %v825
    %v827 = vtanh.pop %v826
    %v828 = vpack.c.bf16 %v827, %v827
    %v830 = vrot.slane %v805, 4
    %v832 = vunpack.c.l.bf16 %v830
    %v833 = vunpack.c.l.bf16 %v828
    %835 = vrot.lane.b32.xlu0 %v833, 64
    %v836 = vpop.permute.xlu0 %835
    %v838 = vmul.f32 %v832, %v836
    %v839 = vpack.c.bf16 %v838, %v838
    %v840 = vunpack.c.l.bf16 %v839
    %s841 = scalar_lea.vmem [#allocation2], %s746
    %842 = vst.msk [vmem:[%s841] sm:$0xff] %vm65, %v840
    %s843 = sadd.s32 %s56, 8
    %s844 = smul.u32 %s843, 8
    %s845 = sshra.s32 %s844, 3
    %s846 = sand.u32 %s844, 7
    %s847 = smul.u32 %s845, 2
    %s848 = smul.addr %s847, 8
    %s849 = scalar_lea.vmem %s0, %s848
    %v850 = vld [vmem:[%s849] sm:$0xff]
    %v851 = vld [vmem:[%s849 + $0x8] sm:$0xff]
    %v853 = vsel %vm65, %v839, 0
    %855 = vmatpush.bf16.msra.mxu0 0
    %856 = vmatpush.bf16.msra.mxu0 0
    %857 = vmatpush.bf16.msra.mxu0 0
    %858 = vmatpush.bf16.msra.mxu0 0
    %859 = vmatpush.bf16.msra.mxu0 %v46
    %860 = vmatpush.bf16.msra.mxu0 %v44
    %861 = vmatpush.bf16.msra.mxu0 %v42
    %862 = vmatpush.bf16.msra.mxu0 %v40
    %863 = vmatmul.bf16.gmra.mxu0 %v853
    %v864 = vpop.f32.mrf.mxu0
    %v865 = vadd.f32 0.0, %v864
    %v866 = vpop.f32.mrf.mxu0
    %867 = vdwg.mxu0
    %868 = vmatpush.bf16.msra.mxu0 0
    %869 = vmatpush.bf16.msra.mxu0 0
    %870 = vmatpush.bf16.msra.mxu0 0
    %871 = vmatpush.bf16.msra.mxu0 0
    %872 = vmatpush.bf16.msra.mxu0 %v47
    %873 = vmatpush.bf16.msra.mxu0 %v45
    %874 = vmatpush.bf16.msra.mxu0 %v43
    %875 = vmatpush.bf16.msra.mxu0 %v41
    %876 = vmatmul.bf16.gmra.mxu0 %v853
    %v877 = vpop.f32.mrf.mxu0
    %v878 = vadd.f32 0.0, %v877
    %v879 = vpop.f32.mrf.mxu0
    %880 = vdwg.mxu0
    %v881 = vadd.f32 %v850, %v865
    %v882 = vadd.f32 %v851, %v878
    %v883 = vpack.c.bf16 %v882, %v881
    %v884 = vxor.u32 %v883, 2147516416
    %v885 = vunpack.c.l.bf16 %v884
    %v886 = vunpack.c.h.bf16 %v884
    %v887 = vmul.f32 %v885, 1.442695
    %v888 = vpow.pop %v887
    %v889 = vmul.f32 %v886, 1.442695
    %v890 = vpow.pop %v889
    %v891 = vpack.c.bf16 %v890, %v888
    %v892 = vunpack.c.l.bf16 %v891
    %v893 = vunpack.c.h.bf16 %v891
    %v894 = vadd.f32 %v892, 1.0
    %v895 = vadd.f32 %v893, 1.0
    %v896 = vpack.c.bf16 %v895, %v894
    %v897 = vunpack.c.h.bf16 %v896
    %v898 = vunpack.c.l.bf16 %v896
    %v899 = vrcp.pop %v897
    %v900 = vmul.f32 %v111, %v899
    %v901 = vrcp.pop %v898
    %v902 = vmul.f32 %v112, %v901
    %v903 = vpack.c.bf16 %v900, %v902
    %905 = vrot.lane.b32.xlu0 %v883, 64
    %v906 = vpop.permute.xlu0 %905
    %v907 = vrot.slane %v906, 4
    %v909 = vunpack.c.l.bf16 %v907
    %v910 = vtanh.pop %v909
    %v911 = vpack.c.bf16 %v910, %v910
    %v912 = vunpack.c.l.bf16 %v903
    %v913 = vmul.f32 %v912, %v824
    %v914 = vunpack.c.l.bf16 %v911
    %v915 = vmul.f32 %v912, %v914
    %v916 = vpack.c.bf16 %v915, %v915
    %v917 = vunpack.c.l.bf16 %v916
    %919 = vrot.lane.b32.xlu0 %v917, 64
    %v920 = vpop.permute.xlu0 %919
    %v922 = vadd.f32 %v913, %v920
    %v923 = vpack.c.bf16 %v922, %v922
    %v924 = vunpack.c.l.bf16 %v923
    %v925 = vtanh.pop %v924
    %v926 = vpack.c.bf16 %v925, %v925
    %v928 = vrot.slane %v903, 4
    %v930 = vunpack.c.l.bf16 %v928
    %v931 = vunpack.c.l.bf16 %v926
    %933 = vrot.lane.b32.xlu0 %v931, 64
    %v934 = vpop.permute.xlu0 %933
    %v936 = vmul.f32 %v930, %v934
    %v937 = vpack.c.bf16 %v936, %v936
    %v938 = vunpack.c.l.bf16 %v937
    %s939 = scalar_lea.vmem [#allocation2], %s844
    %940 = vst.msk [vmem:[%s939] sm:$0xff] %vm65, %v938
    %s941 = sadd.s32 %s56, 9
    %s942 = smul.u32 %s941, 8
    %s943 = sshra.s32 %s942, 3
    %s944 = sand.u32 %s942, 7
    %s945 = smul.u32 %s943, 2
    %s946 = smul.addr %s945, 8
    %s947 = scalar_lea.vmem %s0, %s946
    %v948 = vld [vmem:[%s947] sm:$0xff]
    %v949 = vld [vmem:[%s947 + $0x8] sm:$0xff]
    %v951 = vsel %vm65, %v937, 0
    %953 = vmatpush.bf16.msra.mxu0 0
    %954 = vmatpush.bf16.msra.mxu0 0
    %955 = vmatpush.bf16.msra.mxu0 0
    %956 = vmatpush.bf16.msra.mxu0 0
    %957 = vmatpush.bf16.msra.mxu0 %v46
    %958 = vmatpush.bf16.msra.mxu0 %v44
    %959 = vmatpush.bf16.msra.mxu0 %v42
    %960 = vmatpush.bf16.msra.mxu0 %v40
    %961 = vmatmul.bf16.gmra.mxu0 %v951
    %v962 = vpop.f32.mrf.mxu0
    %v963 = vadd.f32 0.0, %v962
    %v964 = vpop.f32.mrf.mxu0
    %965 = vdwg.mxu0
    %966 = vmatpush.bf16.msra.mxu0 0
    %967 = vmatpush.bf16.msra.mxu0 0
    %968 = vmatpush.bf16.msra.mxu0 0
    %969 = vmatpush.bf16.msra.mxu0 0
    %970 = vmatpush.bf16.msra.mxu0 %v47
    %971 = vmatpush.bf16.msra.mxu0 %v45
    %972 = vmatpush.bf16.msra.mxu0 %v43
    %973 = vmatpush.bf16.msra.mxu0 %v41
    %974 = vmatmul.bf16.gmra.mxu0 %v951
    %v975 = vpop.f32.mrf.mxu0
    %v976 = vadd.f32 0.0, %v975
    %v977 = vpop.f32.mrf.mxu0
    %978 = vdwg.mxu0
    %v979 = vadd.f32 %v948, %v963
    %v980 = vadd.f32 %v949, %v976
    %v981 = vpack.c.bf16 %v980, %v979
    %v982 = vxor.u32 %v981, 2147516416
    %v983 = vunpack.c.l.bf16 %v982
    %v984 = vunpack.c.h.bf16 %v982
    %v985 = vmul.f32 %v983, 1.442695
    %v986 = vpow.pop %v985
    %v987 = vmul.f32 %v984, 1.442695
    %v988 = vpow.pop %v987
    %v989 = vpack.c.bf16 %v988, %v986
    %v990 = vunpack.c.l.bf16 %v989
    %v991 = vunpack.c.h.bf16 %v989
    %v992 = vadd.f32 %v990, 1.0
    %v993 = vadd.f32 %v991, 1.0
    %v994 = vpack.c.bf16 %v993, %v992
    %v995 = vunpack.c.h.bf16 %v994
    %v996 = vunpack.c.l.bf16 %v994
    %v997 = vrcp.pop %v995
    %v998 = vmul.f32 %v111, %v997
    %v999 = vrcp.pop %v996
    %v1000 = vmul.f32 %v112, %v999
    %v1001 = vpack.c.bf16 %v998, %v1000
    %1003 = vrot.lane.b32.xlu0 %v981, 64
    %v1004 = vpop.permute.xlu0 %1003
    %v1005 = vrot.slane %v1004, 4
    %v1007 = vunpack.c.l.bf16 %v1005
    %v1008 = vtanh.pop %v1007
    %v1009 = vpack.c.bf16 %v1008, %v1008
    %v1010 = vunpack.c.l.bf16 %v1001
    %v1011 = vmul.f32 %v1010, %v922
    %v1012 = vunpack.c.l.bf16 %v1009
    %v1013 = vmul.f32 %v1010, %v1012
    %v1014 = vpack.c.bf16 %v1013, %v1013
    %v1015 = vunpack.c.l.bf16 %v1014
    %1017 = vrot.lane.b32.xlu0 %v1015, 64
    %v1018 = vpop.permute.xlu0 %1017
    %v1020 = vadd.f32 %v1011, %v1018
    %v1021 = vpack.c.bf16 %v1020, %v1020
    %v1022 = vunpack.c.l.bf16 %v1021
    %v1023 = vtanh.pop %v1022
    %v1024 = vpack.c.bf16 %v1023, %v1023
    %v1026 = vrot.slane %v1001, 4
    %v1028 = vunpack.c.l.bf16 %v1026
    %v1029 = vunpack.c.l.bf16 %v1024
    %1031 = vrot.lane.b32.xlu0 %v1029, 64
    %v1032 = vpop.permute.xlu0 %1031
    %v1034 = vmul.f32 %v1028, %v1032
    %v1035 = vpack.c.bf16 %v1034, %v1034
    %v1036 = vunpack.c.l.bf16 %v1035
    %s1037 = scalar_lea.vmem [#allocation2], %s942
    %1038 = vst.msk [vmem:[%s1037] sm:$0xff] %vm65, %v1036
  $region26: #{extraction_net_forward.1} parent=0 // loop_footer
    %s53 = sadd.s32 1, %s49
  $region27: #{extraction_net_forward.1} parent=0 // loop_footer_branch
    %48 = sbr.rel target = $region23
  $region28: #{extraction_net_forward.1} parent=0 // loop_exit
    _
  %v1039 = vld [vmem:[#allocation2] sm:$0xff]
  %v1040 = vld [vmem:[#allocation2 + $0x8] sm:$0xff]
  %v1041 = vld [vmem:[#allocation2 + $0x10] sm:$0xff]
  %v1042 = vld [vmem:[#allocation2 + $0x18] sm:$0xff]
  %v1043 = vld [vmem:[#allocation2 + $0x20] sm:$0xff]
  %v1044 = vld [vmem:[#allocation2 + $0x28] sm:$0xff]
  %v1045 = vld [vmem:[#allocation2 + $0x30] sm:$0xff]
  %v1046 = vld [vmem:[#allocation2 + $0x38] sm:$0xff]
  %v1047 = vld [vmem:[#allocation2 + $0x40] sm:$0xff]
  %v1048 = vld [vmem:[#allocation2 + $0x48] sm:$0xff]
  %v1049 = vld [vmem:[#allocation2 + $0x50] sm:$0xff]
  %v1050 = vld [vmem:[#allocation2 + $0x58] sm:$0xff]
  %v1051 = vld [vmem:[#allocation2 + $0x60] sm:$0xff]
  %v1052 = vld [vmem:[#allocation2 + $0x68] sm:$0xff]
  %v1053 = vld [vmem:[#allocation2 + $0x70] sm:$0xff]
  %v1054 = vld [vmem:[#allocation2 + $0x78] sm:$0xff]
  %v1055 = vld [vmem:[#allocation2 + $0x80] sm:$0xff]
  %v1056 = vld [vmem:[#allocation2 + $0x88] sm:$0xff]
  %v1057 = vld [vmem:[#allocation2 + $0x90] sm:$0xff]
  %v1058 = vld [vmem:[#allocation2 + $0x98] sm:$0xff]
  %v1059 = vld [vmem:[#allocation2 + $0xa0] sm:$0xff]
  %v1060 = vld [vmem:[#allocation2 + $0xa8] sm:$0xff]
  %v1061 = vld [vmem:[#allocation2 + $0xb0] sm:$0xff]
  %v1062 = vld [vmem:[#allocation2 + $0xb8] sm:$0xff]
  %v1063 = vld [vmem:[#allocation2 + $0xc0] sm:$0xff]
  %v1064 = vld [vmem:[#allocation2 + $0xc8] sm:$0xff]
  %v1065 = vld [vmem:[#allocation2 + $0xd0] sm:$0xff]
  %v1066 = vld [vmem:[#allocation2 + $0xd8] sm:$0xff]
  %v1067 = vld [vmem:[#allocation2 + $0xe0] sm:$0xff]
  %v1068 = vld [vmem:[#allocation2 + $0xe8] sm:$0xff]
  %v1069 = vld [vmem:[#allocation2 + $0xf0] sm:$0xff]
  %v1070 = vld [vmem:[#allocation2 + $0xf8] sm:$0xff]
  %v1071 = vld [vmem:[#allocation2 + $0x100] sm:$0xff]
  %v1072 = vld [vmem:[#allocation2 + $0x108] sm:$0xff]
  %v1073 = vld [vmem:[#allocation2 + $0x110] sm:$0xff]
  %v1074 = vld [vmem:[#allocation2 + $0x118] sm:$0xff]
  %v1075 = vld [vmem:[#allocation2 + $0x120] sm:$0xff]
  %v1076 = vld [vmem:[#allocation2 + $0x128] sm:$0xff]
  %v1077 = vld [vmem:[#allocation2 + $0x130] sm:$0xff]
  %v1078 = vld [vmem:[#allocation2 + $0x138] sm:$0xff]
  %v1079 = vld [vmem:[#allocation2 + $0x140] sm:$0xff]
  %v1080 = vld [vmem:[#allocation2 + $0x148] sm:$0xff]
  %v1081 = vld [vmem:[#allocation2 + $0x150] sm:$0xff]
  %v1082 = vld [vmem:[#allocation2 + $0x158] sm:$0xff]
  %v1083 = vld [vmem:[#allocation2 + $0x160] sm:$0xff]
  %v1084 = vld [vmem:[#allocation2 + $0x168] sm:$0xff]
  %v1085 = vld [vmem:[#allocation2 + $0x170] sm:$0xff]
  %v1086 = vld [vmem:[#allocation2 + $0x178] sm:$0xff]
  %v1087 = vld [vmem:[#allocation2 + $0x180] sm:$0xff]
  %v1088 = vld [vmem:[#allocation2 + $0x188] sm:$0xff]
  %v1089 = vld [vmem:[#allocation2 + $0x190] sm:$0xff]
  %v1090 = vld [vmem:[#allocation2 + $0x198] sm:$0xff]
  %v1091 = vld [vmem:[#allocation2 + $0x1a0] sm:$0xff]
  %v1092 = vld [vmem:[#allocation2 + $0x1a8] sm:$0xff]
  %v1093 = vld [vmem:[#allocation2 + $0x1b0] sm:$0xff]
  %v1094 = vld [vmem:[#allocation2 + $0x1b8] sm:$0xff]
  %v1095 = vld [vmem:[#allocation2 + $0x1c0] sm:$0xff]
  %v1096 = vld [vmem:[#allocation2 + $0x1c8] sm:$0xff]
  %v1097 = vld [vmem:[#allocation2 + $0x1d0] sm:$0xff]
  %v1098 = vld [vmem:[#allocation2 + $0x1d8] sm:$0xff]
  %v1099 = vld [vmem:[#allocation2 + $0x1e0] sm:$0xff]
  %v1100 = vld [vmem:[#allocation2 + $0x1e8] sm:$0xff]
  %v1101 = vld [vmem:[#allocation2 + $0x1f0] sm:$0xff]
  %v1102 = vld [vmem:[#allocation2 + $0x1f8] sm:$0xff]
  %v1103 = vld [vmem:[#allocation2 + $0x200] sm:$0xff]
  %v1104 = vld [vmem:[#allocation2 + $0x208] sm:$0xff]
  %v1105 = vld [vmem:[#allocation2 + $0x210] sm:$0xff]
  %v1106 = vld [vmem:[#allocation2 + $0x218] sm:$0xff]
  %v1107 = vld [vmem:[#allocation2 + $0x220] sm:$0xff]
  %v1108 = vld [vmem:[#allocation2 + $0x228] sm:$0xff]
  %v1109 = vld [vmem:[#allocation2 + $0x230] sm:$0xff]
  %v1110 = vld [vmem:[#allocation2 + $0x238] sm:$0xff]
  %v1111 = vld [vmem:[#allocation2 + $0x240] sm:$0xff]
  %v1112 = vld [vmem:[#allocation2 + $0x248] sm:$0xff]
  %v1113 = vld [vmem:[#allocation2 + $0x250] sm:$0xff]
  %v1114 = vld [vmem:[#allocation2 + $0x258] sm:$0xff]
  %v1115 = vld [vmem:[#allocation2 + $0x260] sm:$0xff]
  %v1116 = vld [vmem:[#allocation2 + $0x268] sm:$0xff]
  %v1117 = vld [vmem:[#allocation2 + $0x270] sm:$0xff]
  %v1118 = vld [vmem:[#allocation2 + $0x278] sm:$0xff]
  %v1119 = vld [vmem:[#allocation2 + $0x280] sm:$0xff]
  %v1120 = vld [vmem:[#allocation2 + $0x288] sm:$0xff]
  %v1121 = vld [vmem:[#allocation2 + $0x290] sm:$0xff]
  %v1122 = vld [vmem:[#allocation2 + $0x298] sm:$0xff]
  %v1123 = vld [vmem:[#allocation2 + $0x2a0] sm:$0xff]
  %v1124 = vld [vmem:[#allocation2 + $0x2a8] sm:$0xff]
  %v1125 = vld [vmem:[#allocation2 + $0x2b0] sm:$0xff]
  %v1126 = vld [vmem:[#allocation2 + $0x2b8] sm:$0xff]
  %v1127 = vld [vmem:[#allocation2 + $0x2c0] sm:$0xff]
  %v1128 = vld [vmem:[#allocation2 + $0x2c8] sm:$0xff]
  %v1129 = vld [vmem:[#allocation2 + $0x2d0] sm:$0xff]
  %v1130 = vld [vmem:[#allocation2 + $0x2d8] sm:$0xff]
  %v1131 = vld [vmem:[#allocation2 + $0x2e0] sm:$0xff]
  %v1132 = vld [vmem:[#allocation2 + $0x2e8] sm:$0xff]
  %v1133 = vld [vmem:[#allocation2 + $0x2f0] sm:$0xff]
  %v1134 = vld [vmem:[#allocation2 + $0x2f8] sm:$0xff]
  %v1135 = vld [vmem:[#allocation2 + $0x300] sm:$0xff]
  %v1136 = vld [vmem:[#allocation2 + $0x308] sm:$0xff]
  %v1137 = vld [vmem:[#allocation2 + $0x310] sm:$0xff]
  %v1138 = vld [vmem:[#allocation2 + $0x318] sm:$0xff]
  %v1139 = vpack.c.bf16 %v1039, %v1039
  %v1140 = vpack.c.bf16 %v1040, %v1040
  %v1141 = vpack.c.bf16 %v1041, %v1041
  %v1142 = vpack.c.bf16 %v1042, %v1042
  %v1143 = vpack.c.bf16 %v1043, %v1043
  %v1144 = vpack.c.bf16 %v1044, %v1044
  %v1145 = vpack.c.bf16 %v1045, %v1045
  %v1146 = vpack.c.bf16 %v1046, %v1046
  %v1147 = vpack.c.bf16 %v1047, %v1047
  %v1148 = vpack.c.bf16 %v1048, %v1048
  %v1149 = vpack.c.bf16 %v1049, %v1049
  %v1150 = vpack.c.bf16 %v1050, %v1050
  %v1151 = vpack.c.bf16 %v1051, %v1051
  %v1152 = vpack.c.bf16 %v1052, %v1052
  %v1153 = vpack.c.bf16 %v1053, %v1053
  %v1154 = vpack.c.bf16 %v1054, %v1054
  %v1155 = vpack.c.bf16 %v1055, %v1055
  %v1156 = vpack.c.bf16 %v1056, %v1056
  %v1157 = vpack.c.bf16 %v1057, %v1057
  %v1158 = vpack.c.bf16 %v1058, %v1058
  %v1159 = vpack.c.bf16 %v1059, %v1059
  %v1160 = vpack.c.bf16 %v1060, %v1060
  %v1161 = vpack.c.bf16 %v1061, %v1061
  %v1162 = vpack.c.bf16 %v1062, %v1062
  %v1163 = vpack.c.bf16 %v1063, %v1063
  %v1164 = vpack.c.bf16 %v1064, %v1064
  %v1165 = vpack.c.bf16 %v1065, %v1065
  %v1166 = vpack.c.bf16 %v1066, %v1066
  %v1167 = vpack.c.bf16 %v1067, %v1067
  %v1168 = vpack.c.bf16 %v1068, %v1068
  %v1169 = vpack.c.bf16 %v1069, %v1069
  %v1170 = vpack.c.bf16 %v1070, %v1070
  %v1171 = vpack.c.bf16 %v1071, %v1071
  %v1172 = vpack.c.bf16 %v1072, %v1072
  %v1173 = vpack.c.bf16 %v1073, %v1073
  %v1174 = vpack.c.bf16 %v1074, %v1074
  %v1175 = vpack.c.bf16 %v1075, %v1075
  %v1176 = vpack.c.bf16 %v1076, %v1076
  %v1177 = vpack.c.bf16 %v1077, %v1077
  %v1178 = vpack.c.bf16 %v1078, %v1078
  %v1179 = vpack.c.bf16 %v1079, %v1079
  %v1180 = vpack.c.bf16 %v1080, %v1080
  %v1181 = vpack.c.bf16 %v1081, %v1081
  %v1182 = vpack.c.bf16 %v1082, %v1082
  %v1183 = vpack.c.bf16 %v1083, %v1083
  %v1184 = vpack.c.bf16 %v1084, %v1084
  %v1185 = vpack.c.bf16 %v1085, %v1085
  %v1186 = vpack.c.bf16 %v1086, %v1086
  %v1187 = vpack.c.bf16 %v1087, %v1087
  %v1188 = vpack.c.bf16 %v1088, %v1088
  %v1189 = vpack.c.bf16 %v1089, %v1089
  %v1190 = vpack.c.bf16 %v1090, %v1090
  %v1191 = vpack.c.bf16 %v1091, %v1091
  %v1192 = vpack.c.bf16 %v1092, %v1092
  %v1193 = vpack.c.bf16 %v1093, %v1093
  %v1194 = vpack.c.bf16 %v1094, %v1094
  %v1195 = vpack.c.bf16 %v1095, %v1095
  %v1196 = vpack.c.bf16 %v1096, %v1096
  %v1197 = vpack.c.bf16 %v1097, %v1097
  %v1198 = vpack.c.bf16 %v1098, %v1098
  %v1199 = vpack.c.bf16 %v1099, %v1099
  %v1200 = vpack.c.bf16 %v1100, %v1100
  %v1201 = vpack.c.bf16 %v1101, %v1101
  %v1202 = vpack.c.bf16 %v1102, %v1102
  %v1203 = vpack.c.bf16 %v1103, %v1103
  %v1204 = vpack.c.bf16 %v1104, %v1104
  %v1205 = vpack.c.bf16 %v1105, %v1105
  %v1206 = vpack.c.bf16 %v1106, %v1106
  %v1207 = vpack.c.bf16 %v1107, %v1107
  %v1208 = vpack.c.bf16 %v1108, %v1108
  %v1209 = vpack.c.bf16 %v1109, %v1109
  %v1210 = vpack.c.bf16 %v1110, %v1110
  %v1211 = vpack.c.bf16 %v1111, %v1111
  %v1212 = vpack.c.bf16 %v1112, %v1112
  %v1213 = vpack.c.bf16 %v1113, %v1113
  %v1214 = vpack.c.bf16 %v1114, %v1114
  %v1215 = vpack.c.bf16 %v1115, %v1115
  %v1216 = vpack.c.bf16 %v1116, %v1116
  %v1217 = vpack.c.bf16 %v1117, %v1117
  %v1218 = vpack.c.bf16 %v1118, %v1118
  %v1219 = vpack.c.bf16 %v1119, %v1119
  %v1220 = vpack.c.bf16 %v1120, %v1120
  %v1221 = vpack.c.bf16 %v1121, %v1121
  %v1222 = vpack.c.bf16 %v1122, %v1122
  %v1223 = vpack.c.bf16 %v1123, %v1123
  %v1224 = vpack.c.bf16 %v1124, %v1124
  %v1225 = vpack.c.bf16 %v1125, %v1125
  %v1226 = vpack.c.bf16 %v1126, %v1126
  %v1227 = vpack.c.bf16 %v1127, %v1127
  %v1228 = vpack.c.bf16 %v1128, %v1128
  %v1229 = vpack.c.bf16 %v1129, %v1129
  %v1230 = vpack.c.bf16 %v1130, %v1130
  %v1231 = vpack.c.bf16 %v1131, %v1131
  %v1232 = vpack.c.bf16 %v1132, %v1132
  %v1233 = vpack.c.bf16 %v1133, %v1133
  %v1234 = vpack.c.bf16 %v1134, %v1134
  %v1235 = vpack.c.bf16 %v1135, %v1135
  %v1236 = vpack.c.bf16 %v1136, %v1136
  %v1237 = vpack.c.bf16 %v1137, %v1137
  %v1238 = vpack.c.bf16 %v1138, %v1138
  %v1239 = vld [vmem:[%s2] sm:$0xff]
  %v1240 = vld [vmem:[%s2 + $0x8] sm:$0xff]
  %v1241 = vld [vmem:[%s2 + $0x10] sm:$0xff]
  %v1242 = vld [vmem:[%s2 + $0x18] sm:$0xff]
  %v1243 = vpack.c.bf16 %v1240, %v1239
  %v1244 = vpack.c.bf16 %v1242, %v1241
  %v1245 = vld [vmem:[%s3] sm:$0xff]
  %v1246 = vld [vmem:[%s3 + $0x8] sm:$0xff]
  %v1247 = vld [vmem:[%s3 + $0x10] sm:$0xff]
  %v1248 = vld [vmem:[%s3 + $0x18] sm:$0xff]
  %v1249 = vpack.c.bf16 %v1246, %v1245
  %v1250 = vpack.c.bf16 %v1248, %v1247
  %v1251 = vld [vmem:[%s4] sm:$0x1]
  %v1253 = vperm.slane %v1251, 0
  %v1355 = vunpack.c.l.b16 %v1139
  %v1356 = vunpack.c.l.b16 %v1140
  %v1357 = vunpack.c.l.b16 %v1141
  %v1358 = vunpack.c.l.b16 %v1142
  %v1359 = vunpack.c.l.b16 %v1143
  %v1360 = vunpack.c.l.b16 %v1144
  %v1361 = vunpack.c.l.b16 %v1145
  %v1362 = vunpack.c.l.b16 %v1146
  %v1363 = vunpack.c.l.b16 %v1147
  %v1364 = vunpack.c.l.b16 %v1148
  %v1365 = vunpack.c.l.b16 %v1149
  %v1366 = vunpack.c.l.b16 %v1150
  %v1367 = vunpack.c.l.b16 %v1151
  %v1368 = vunpack.c.l.b16 %v1152
  %v1369 = vunpack.c.l.b16 %v1153
  %v1370 = vunpack.c.l.b16 %v1154
  %v1371 = vunpack.c.l.b16 %v1155
  %v1372 = vunpack.c.l.b16 %v1156
  %v1373 = vunpack.c.l.b16 %v1157
  %v1374 = vunpack.c.l.b16 %v1158
  %v1375 = vunpack.c.l.b16 %v1159
  %v1376 = vunpack.c.l.b16 %v1160
  %v1377 = vunpack.c.l.b16 %v1161
  %v1378 = vunpack.c.l.b16 %v1162
  %v1379 = vunpack.c.l.b16 %v1163
  %v1380 = vunpack.c.l.b16 %v1164
  %v1381 = vunpack.c.l.b16 %v1165
  %v1382 = vunpack.c.l.b16 %v1166
  %v1383 = vunpack.c.l.b16 %v1167
  %v1384 = vunpack.c.l.b16 %v1168
  %v1385 = vunpack.c.l.b16 %v1169
  %v1386 = vunpack.c.l.b16 %v1170
  %v1387 = vunpack.c.l.b16 %v1171
  %v1388 = vunpack.c.l.b16 %v1172
  %v1389 = vunpack.c.l.b16 %v1173
  %v1390 = vunpack.c.l.b16 %v1174
  %v1391 = vunpack.c.l.b16 %v1175
  %v1392 = vunpack.c.l.b16 %v1176
  %v1393 = vunpack.c.l.b16 %v1177
  %v1394 = vunpack.c.l.b16 %v1178
  %v1395 = vunpack.c.l.b16 %v1179
  %v1396 = vunpack.c.l.b16 %v1180
  %v1397 = vunpack.c.l.b16 %v1181
  %v1398 = vunpack.c.l.b16 %v1182
  %v1399 = vunpack.c.l.b16 %v1183
  %v1400 = vunpack.c.l.b16 %v1184
  %v1401 = vunpack.c.l.b16 %v1185
  %v1402 = vunpack.c.l.b16 %v1186
  %v1403 = vunpack.c.l.b16 %v1187
  %v1404 = vunpack.c.l.b16 %v1188
  %v1405 = vunpack.c.l.b16 %v1189
  %v1406 = vunpack.c.l.b16 %v1190
  %v1407 = vunpack.c.l.b16 %v1191
  %v1408 = vunpack.c.l.b16 %v1192
  %v1409 = vunpack.c.l.b16 %v1193
  %v1410 = vunpack.c.l.b16 %v1194
  %v1411 = vunpack.c.l.b16 %v1195
  %v1412 = vunpack.c.l.b16 %v1196
  %v1413 = vunpack.c.l.b16 %v1197
  %v1414 = vunpack.c.l.b16 %v1198
  %v1415 = vunpack.c.l.b16 %v1199
  %v1416 = vunpack.c.l.b16 %v1200
  %v1417 = vunpack.c.l.b16 %v1201
  %v1418 = vunpack.c.l.b16 %v1202
  %v1419 = vunpack.c.l.b16 %v1203
  %v1420 = vunpack.c.l.b16 %v1204
  %v1421 = vunpack.c.l.b16 %v1205
  %v1422 = vunpack.c.l.b16 %v1206
  %v1423 = vunpack.c.l.b16 %v1207
  %v1424 = vunpack.c.l.b16 %v1208
  %v1425 = vunpack.c.l.b16 %v1209
  %v1426 = vunpack.c.l.b16 %v1210
  %v1427 = vunpack.c.l.b16 %v1211
  %v1428 = vunpack.c.l.b16 %v1212
  %v1429 = vunpack.c.l.b16 %v1213
  %v1430 = vunpack.c.l.b16 %v1214
  %v1431 = vunpack.c.l.b16 %v1215
  %v1432 = vunpack.c.l.b16 %v1216
  %v1433 = vunpack.c.l.b16 %v1217
  %v1434 = vunpack.c.l.b16 %v1218
  %v1435 = vunpack.c.l.b16 %v1219
  %v1436 = vunpack.c.l.b16 %v1220
  %v1437 = vunpack.c.l.b16 %v1221
  %v1438 = vunpack.c.l.b16 %v1222
  %v1439 = vunpack.c.l.b16 %v1223
  %v1440 = vunpack.c.l.b16 %v1224
  %v1441 = vunpack.c.l.b16 %v1225
  %v1442 = vunpack.c.l.b16 %v1226
  %v1443 = vunpack.c.l.b16 %v1227
  %v1444 = vunpack.c.l.b16 %v1228
  %v1445 = vunpack.c.l.b16 %v1229
  %v1446 = vunpack.c.l.b16 %v1230
  %v1447 = vunpack.c.l.b16 %v1231
  %v1448 = vunpack.c.l.b16 %v1232
  %v1449 = vunpack.c.l.b16 %v1233
  %v1450 = vunpack.c.l.b16 %v1234
  %v1451 = vunpack.c.l.b16 %v1235
  %v1452 = vunpack.c.l.b16 %v1236
  %v1453 = vunpack.c.l.b16 %v1237
  %v1454 = vunpack.c.l.b16 %v1238
  %v1455 = vpack.c.b16 %v1356, %v1355
  %v1456 = vpack.c.b16 %v1358, %v1357
  %v1457 = vpack.c.b16 %v1360, %v1359
  %v1458 = vpack.c.b16 %v1362, %v1361
  %v1459 = vpack.c.b16 %v1364, %v1363
  %v1460 = vpack.c.b16 %v1366, %v1365
  %v1461 = vpack.c.b16 %v1368, %v1367
  %v1462 = vpack.c.b16 %v1370, %v1369
  %v1463 = vpack.c.b16 %v1372, %v1371
  %v1464 = vpack.c.b16 %v1374, %v1373
  %v1465 = vpack.c.b16 %v1376, %v1375
  %v1466 = vpack.c.b16 %v1378, %v1377
  %v1467 = vpack.c.b16 %v1380, %v1379
  %v1468 = vpack.c.b16 %v1382, %v1381
  %v1469 = vpack.c.b16 %v1384, %v1383
  %v1470 = vpack.c.b16 %v1386, %v1385
  %v1471 = vpack.c.b16 %v1388, %v1387
  %v1472 = vpack.c.b16 %v1390, %v1389
  %v1473 = vpack.c.b16 %v1392, %v1391
  %v1474 = vpack.c.b16 %v1394, %v1393
  %v1475 = vpack.c.b16 %v1396, %v1395
  %v1476 = vpack.c.b16 %v1398, %v1397
  %v1477 = vpack.c.b16 %v1400, %v1399
  %v1478 = vpack.c.b16 %v1402, %v1401
  %v1479 = vpack.c.b16 %v1404, %v1403
  %v1480 = vpack.c.b16 %v1406, %v1405
  %v1481 = vpack.c.b16 %v1408, %v1407
  %v1482 = vpack.c.b16 %v1410, %v1409
  %v1483 = vpack.c.b16 %v1412, %v1411
  %v1484 = vpack.c.b16 %v1414, %v1413
  %v1485 = vpack.c.b16 %v1416, %v1415
  %v1486 = vpack.c.b16 %v1418, %v1417
  %v1487 = vpack.c.b16 %v1420, %v1419
  %v1488 = vpack.c.b16 %v1422, %v1421
  %v1489 = vpack.c.b16 %v1424, %v1423
  %v1490 = vpack.c.b16 %v1426, %v1425
  %v1491 = vpack.c.b16 %v1428, %v1427
  %v1492 = vpack.c.b16 %v1430, %v1429
  %v1493 = vpack.c.b16 %v1432, %v1431
  %v1494 = vpack.c.b16 %v1434, %v1433
  %v1495 = vpack.c.b16 %v1436, %v1435
  %v1496 = vpack.c.b16 %v1438, %v1437
  %v1497 = vpack.c.b16 %v1440, %v1439
  %v1498 = vpack.c.b16 %v1442, %v1441
  %v1499 = vpack.c.b16 %v1444, %v1443
  %v1500 = vpack.c.b16 %v1446, %v1445
  %v1501 = vpack.c.b16 %v1448, %v1447
  %v1502 = vpack.c.b16 %v1450, %v1449
  %v1503 = vpack.c.b16 %v1452, %v1451
  %v1504 = vpack.c.b16 %v1454, %v1453
  %vm1505 = vcmask 261120
  %v1507 = vsel %vm1505, %v1455, 0
  %v1510 = vsel %vm1505, %v1456, 0
  %v1513 = vsel %vm1505, %v1457, 0
  %v1516 = vsel %vm1505, %v1458, 0
  %v1519 = vsel %vm1505, %v1459, 0
  %v1522 = vsel %vm1505, %v1460, 0
  %v1525 = vsel %vm1505, %v1461, 0
  %v1528 = vsel %vm1505, %v1462, 0
  %v1531 = vsel %vm1505, %v1463, 0
  %v1534 = vsel %vm1505, %v1464, 0
  %v1537 = vsel %vm1505, %v1465, 0
  %v1540 = vsel %vm1505, %v1466, 0
  %v1543 = vsel %vm1505, %v1467, 0
  %v1546 = vsel %vm1505, %v1468, 0
  %v1549 = vsel %vm1505, %v1469, 0
  %v1552 = vsel %vm1505, %v1470, 0
  %v1555 = vsel %vm1505, %v1471, 0
  %v1558 = vsel %vm1505, %v1472, 0
  %v1561 = vsel %vm1505, %v1473, 0
  %v1564 = vsel %vm1505, %v1474, 0
  %v1567 = vsel %vm1505, %v1475, 0
  %v1570 = vsel %vm1505, %v1476, 0
  %v1573 = vsel %vm1505, %v1477, 0
  %v1576 = vsel %vm1505, %v1478, 0
  %v1579 = vsel %vm1505, %v1479, 0
  %v1582 = vsel %vm1505, %v1480, 0
  %v1585 = vsel %vm1505, %v1481, 0
  %v1588 = vsel %vm1505, %v1482, 0
  %v1591 = vsel %vm1505, %v1483, 0
  %v1594 = vsel %vm1505, %v1484, 0
  %v1597 = vsel %vm1505, %v1485, 0
  %v1600 = vsel %vm1505, %v1486, 0
  %v1603 = vsel %vm1505, %v1487, 0
  %v1606 = vsel %vm1505, %v1488, 0
  %v1609 = vsel %vm1505, %v1489, 0
  %v1612 = vsel %vm1505, %v1490, 0
  %v1615 = vsel %vm1505, %v1491, 0
  %v1618 = vsel %vm1505, %v1492, 0
  %v1621 = vsel %vm1505, %v1493, 0
  %v1624 = vsel %vm1505, %v1494, 0
  %v1627 = vsel %vm1505, %v1495, 0
  %v1630 = vsel %vm1505, %v1496, 0
  %v1633 = vsel %vm1505, %v1497, 0
  %v1636 = vsel %vm1505, %v1498, 0
  %v1639 = vsel %vm1505, %v1499, 0
  %v1642 = vsel %vm1505, %v1500, 0
  %v1645 = vsel %vm1505, %v1501, 0
  %v1648 = vsel %vm1505, %v1502, 0
  %v1651 = vsel %vm1505, %v1503, 0
  %v1654 = vsel %vm1505, %v1504, 0
  %1656 = vmatpush.bf16.msra.mxu0 0
  %1657 = vmatpush.bf16.msra.mxu0 0
  %1658 = vmatpush.bf16.msra.mxu0 0
  %1659 = vmatpush.bf16.msra.mxu0 0
  %1660 = vmatpush.bf16.msra.mxu0 0
  %1661 = vmatpush.bf16.msra.mxu0 0
  %1662 = vmatpush.bf16.msra.mxu0 %v1244
  %1663 = vmatpush.bf16.msra.mxu0 %v1243
  %1664 = vmatmul.bf16.gmra.mxu0 %v1507
  %v1665 = vpop.f32.mrf.mxu0
  %v1666 = vadd.f32 %v1253, %v1665
  %v1667 = vpop.f32.mrf.mxu0
  %v1668 = vadd.f32 %v1253, %v1667
  %1669 = vmatmul.bf16.gmra.mxu0 %v1510
  %v1670 = vpop.f32.mrf.mxu0
  %v1671 = vadd.f32 %v1253, %v1670
  %v1672 = vpop.f32.mrf.mxu0
  %v1673 = vadd.f32 %v1253, %v1672
  %1674 = vmatmul.bf16.gmra.mxu0 %v1513
  %v1675 = vpop.f32.mrf.mxu0
  %v1676 = vadd.f32 %v1253, %v1675
  %v1677 = vpop.f32.mrf.mxu0
  %v1678 = vadd.f32 %v1253, %v1677
  %1679 = vmatmul.bf16.gmra.mxu0 %v1516
  %v1680 = vpop.f32.mrf.mxu0
  %v1681 = vadd.f32 %v1253, %v1680
  %v1682 = vpop.f32.mrf.mxu0
  %v1683 = vadd.f32 %v1253, %v1682
  %1684 = vmatmul.bf16.gmra.mxu0 %v1519
  %v1685 = vpop.f32.mrf.mxu0
  %v1686 = vadd.f32 %v1253, %v1685
  %v1687 = vpop.f32.mrf.mxu0
  %v1688 = vadd.f32 %v1253, %v1687
  %1689 = vmatmul.bf16.gmra.mxu0 %v1522
  %v1690 = vpop.f32.mrf.mxu0
  %v1691 = vadd.f32 %v1253, %v1690
  %v1692 = vpop.f32.mrf.mxu0
  %v1693 = vadd.f32 %v1253, %v1692
  %1694 = vmatmul.bf16.gmra.mxu0 %v1525
  %v1695 = vpop.f32.mrf.mxu0
  %v1696 = vadd.f32 %v1253, %v1695
  %v1697 = vpop.f32.mrf.mxu0
  %v1698 = vadd.f32 %v1253, %v1697
  %1699 = vmatmul.bf16.gmra.mxu0 %v1528
  %v1700 = vpop.f32.mrf.mxu0
  %v1701 = vadd.f32 %v1253, %v1700
  %v1702 = vpop.f32.mrf.mxu0
  %v1703 = vadd.f32 %v1253, %v1702
  %1704 = vmatmul.bf16.gmra.mxu0 %v1531
  %v1705 = vpop.f32.mrf.mxu0
  %v1706 = vadd.f32 %v1253, %v1705
  %v1707 = vpop.f32.mrf.mxu0
  %v1708 = vadd.f32 %v1253, %v1707
  %1709 = vmatmul.bf16.gmra.mxu0 %v1534
  %v1710 = vpop.f32.mrf.mxu0
  %v1711 = vadd.f32 %v1253, %v1710
  %v1712 = vpop.f32.mrf.mxu0
  %v1713 = vadd.f32 %v1253, %v1712
  %1714 = vmatmul.bf16.gmra.mxu0 %v1537
  %v1715 = vpop.f32.mrf.mxu0
  %v1716 = vadd.f32 %v1253, %v1715
  %v1717 = vpop.f32.mrf.mxu0
  %v1718 = vadd.f32 %v1253, %v1717
  %1719 = vmatmul.bf16.gmra.mxu0 %v1540
  %v1720 = vpop.f32.mrf.mxu0
  %v1721 = vadd.f32 %v1253, %v1720
  %v1722 = vpop.f32.mrf.mxu0
  %v1723 = vadd.f32 %v1253, %v1722
  %1724 = vmatmul.bf16.gmra.mxu0 %v1543
  %v1725 = vpop.f32.mrf.mxu0
  %v1726 = vadd.f32 %v1253, %v1725
  %v1727 = vpop.f32.mrf.mxu0
  %v1728 = vadd.f32 %v1253, %v1727
  %1729 = vmatmul.bf16.gmra.mxu0 %v1546
  %v1730 = vpop.f32.mrf.mxu0
  %v1731 = vadd.f32 %v1253, %v1730
  %v1732 = vpop.f32.mrf.mxu0
  %v1733 = vadd.f32 %v1253, %v1732
  %1734 = vmatmul.bf16.gmra.mxu0 %v1549
  %v1735 = vpop.f32.mrf.mxu0
  %v1736 = vadd.f32 %v1253, %v1735
  %v1737 = vpop.f32.mrf.mxu0
  %v1738 = vadd.f32 %v1253, %v1737
  %1739 = vmatmul.bf16.gmra.mxu0 %v1552
  %v1740 = vpop.f32.mrf.mxu0
  %v1741 = vadd.f32 %v1253, %v1740
  %v1742 = vpop.f32.mrf.mxu0
  %v1743 = vadd.f32 %v1253, %v1742
  %1744 = vmatmul.bf16.gmra.mxu0 %v1555
  %v1745 = vpop.f32.mrf.mxu0
  %v1746 = vadd.f32 %v1253, %v1745
  %v1747 = vpop.f32.mrf.mxu0
  %v1748 = vadd.f32 %v1253, %v1747
  %1749 = vmatmul.bf16.gmra.mxu0 %v1558
  %v1750 = vpop.f32.mrf.mxu0
  %v1751 = vadd.f32 %v1253, %v1750
  %v1752 = vpop.f32.mrf.mxu0
  %v1753 = vadd.f32 %v1253, %v1752
  %1754 = vmatmul.bf16.gmra.mxu0 %v1561
  %v1755 = vpop.f32.mrf.mxu0
  %v1756 = vadd.f32 %v1253, %v1755
  %v1757 = vpop.f32.mrf.mxu0
  %v1758 = vadd.f32 %v1253, %v1757
  %1759 = vmatmul.bf16.gmra.mxu0 %v1564
  %v1760 = vpop.f32.mrf.mxu0
  %v1761 = vadd.f32 %v1253, %v1760
  %v1762 = vpop.f32.mrf.mxu0
  %v1763 = vadd.f32 %v1253, %v1762
  %1764 = vmatmul.bf16.gmra.mxu0 %v1567
  %v1765 = vpop.f32.mrf.mxu0
  %v1766 = vadd.f32 %v1253, %v1765
  %v1767 = vpop.f32.mrf.mxu0
  %v1768 = vadd.f32 %v1253, %v1767
  %1769 = vmatmul.bf16.gmra.mxu0 %v1570
  %v1770 = vpop.f32.mrf.mxu0
  %v1771 = vadd.f32 %v1253, %v1770
  %v1772 = vpop.f32.mrf.mxu0
  %v1773 = vadd.f32 %v1253, %v1772
  %1774 = vmatmul.bf16.gmra.mxu0 %v1573
  %v1775 = vpop.f32.mrf.mxu0
  %v1776 = vadd.f32 %v1253, %v1775
  %v1777 = vpop.f32.mrf.mxu0
  %v1778 = vadd.f32 %v1253, %v1777
  %1779 = vmatmul.bf16.gmra.mxu0 %v1576
  %v1780 = vpop.f32.mrf.mxu0
  %v1781 = vadd.f32 %v1253, %v1780
  %v1782 = vpop.f32.mrf.mxu0
  %v1783 = vadd.f32 %v1253, %v1782
  %1784 = vmatmul.bf16.gmra.mxu0 %v1579
  %v1785 = vpop.f32.mrf.mxu0
  %v1786 = vadd.f32 %v1253, %v1785
  %v1787 = vpop.f32.mrf.mxu0
  %v1788 = vadd.f32 %v1253, %v1787
  %1789 = vmatmul.bf16.gmra.mxu0 %v1582
  %v1790 = vpop.f32.mrf.mxu0
  %v1791 = vadd.f32 %v1253, %v1790
  %v1792 = vpop.f32.mrf.mxu0
  %v1793 = vadd.f32 %v1253, %v1792
  %1794 = vmatmul.bf16.gmra.mxu0 %v1585
  %v1795 = vpop.f32.mrf.mxu0
  %v1796 = vadd.f32 %v1253, %v1795
  %v1797 = vpop.f32.mrf.mxu0
  %v1798 = vadd.f32 %v1253, %v1797
  %1799 = vmatmul.bf16.gmra.mxu0 %v1588
  %v1800 = vpop.f32.mrf.mxu0
  %v1801 = vadd.f32 %v1253, %v1800
  %v1802 = vpop.f32.mrf.mxu0
  %v1803 = vadd.f32 %v1253, %v1802
  %1804 = vmatmul.bf16.gmra.mxu0 %v1591
  %v1805 = vpop.f32.mrf.mxu0
  %v1806 = vadd.f32 %v1253, %v1805
  %v1807 = vpop.f32.mrf.mxu0
  %v1808 = vadd.f32 %v1253, %v1807
  %1809 = vmatmul.bf16.gmra.mxu0 %v1594
  %v1810 = vpop.f32.mrf.mxu0
  %v1811 = vadd.f32 %v1253, %v1810
  %v1812 = vpop.f32.mrf.mxu0
  %v1813 = vadd.f32 %v1253, %v1812
  %1814 = vmatmul.bf16.gmra.mxu0 %v1597
  %v1815 = vpop.f32.mrf.mxu0
  %v1816 = vadd.f32 %v1253, %v1815
  %v1817 = vpop.f32.mrf.mxu0
  %v1818 = vadd.f32 %v1253, %v1817
  %1819 = vmatmul.bf16.gmra.mxu0 %v1600
  %v1820 = vpop.f32.mrf.mxu0
  %v1821 = vadd.f32 %v1253, %v1820
  %v1822 = vpop.f32.mrf.mxu0
  %v1823 = vadd.f32 %v1253, %v1822
  %1824 = vmatmul.bf16.gmra.mxu0 %v1603
  %v1825 = vpop.f32.mrf.mxu0
  %v1826 = vadd.f32 %v1253, %v1825
  %v1827 = vpop.f32.mrf.mxu0
  %v1828 = vadd.f32 %v1253, %v1827
  %1829 = vmatmul.bf16.gmra.mxu0 %v1606
  %v1830 = vpop.f32.mrf.mxu0
  %v1831 = vadd.f32 %v1253, %v1830
  %v1832 = vpop.f32.mrf.mxu0
  %v1833 = vadd.f32 %v1253, %v1832
  %1834 = vmatmul.bf16.gmra.mxu0 %v1609
  %v1835 = vpop.f32.mrf.mxu0
  %v1836 = vadd.f32 %v1253, %v1835
  %v1837 = vpop.f32.mrf.mxu0
  %v1838 = vadd.f32 %v1253, %v1837
  %1839 = vmatmul.bf16.gmra.mxu0 %v1612
  %v1840 = vpop.f32.mrf.mxu0
  %v1841 = vadd.f32 %v1253, %v1840
  %v1842 = vpop.f32.mrf.mxu0
  %v1843 = vadd.f32 %v1253, %v1842
  %1844 = vmatmul.bf16.gmra.mxu0 %v1615
  %v1845 = vpop.f32.mrf.mxu0
  %v1846 = vadd.f32 %v1253, %v1845
  %v1847 = vpop.f32.mrf.mxu0
  %v1848 = vadd.f32 %v1253, %v1847
  %1849 = vmatmul.bf16.gmra.mxu0 %v1618
  %v1850 = vpop.f32.mrf.mxu0
  %v1851 = vadd.f32 %v1253, %v1850
  %v1852 = vpop.f32.mrf.mxu0
  %v1853 = vadd.f32 %v1253, %v1852
  %1854 = vmatmul.bf16.gmra.mxu0 %v1621
  %v1855 = vpop.f32.mrf.mxu0
  %v1856 = vadd.f32 %v1253, %v1855
  %v1857 = vpop.f32.mrf.mxu0
  %v1858 = vadd.f32 %v1253, %v1857
  %1859 = vmatmul.bf16.gmra.mxu0 %v1624
  %v1860 = vpop.f32.mrf.mxu0
  %v1861 = vadd.f32 %v1253, %v1860
  %v1862 = vpop.f32.mrf.mxu0
  %v1863 = vadd.f32 %v1253, %v1862
  %1864 = vmatmul.bf16.gmra.mxu0 %v1627
  %v1865 = vpop.f32.mrf.mxu0
  %v1866 = vadd.f32 %v1253, %v1865
  %v1867 = vpop.f32.mrf.mxu0
  %v1868 = vadd.f32 %v1253, %v1867
  %1869 = vmatmul.bf16.gmra.mxu0 %v1630
  %v1870 = vpop.f32.mrf.mxu0
  %v1871 = vadd.f32 %v1253, %v1870
  %v1872 = vpop.f32.mrf.mxu0
  %v1873 = vadd.f32 %v1253, %v1872
  %1874 = vmatmul.bf16.gmra.mxu0 %v1633
  %v1875 = vpop.f32.mrf.mxu0
  %v1876 = vadd.f32 %v1253, %v1875
  %v1877 = vpop.f32.mrf.mxu0
  %v1878 = vadd.f32 %v1253, %v1877
  %1879 = vmatmul.bf16.gmra.mxu0 %v1636
  %v1880 = vpop.f32.mrf.mxu0
  %v1881 = vadd.f32 %v1253, %v1880
  %v1882 = vpop.f32.mrf.mxu0
  %v1883 = vadd.f32 %v1253, %v1882
  %1884 = vmatmul.bf16.gmra.mxu0 %v1639
  %v1885 = vpop.f32.mrf.mxu0
  %v1886 = vadd.f32 %v1253, %v1885
  %v1887 = vpop.f32.mrf.mxu0
  %v1888 = vadd.f32 %v1253, %v1887
  %1889 = vmatmul.bf16.gmra.mxu0 %v1642
  %v1890 = vpop.f32.mrf.mxu0
  %v1891 = vadd.f32 %v1253, %v1890
  %v1892 = vpop.f32.mrf.mxu0
  %v1893 = vadd.f32 %v1253, %v1892
  %1894 = vmatmul.bf16.gmra.mxu0 %v1645
  %v1895 = vpop.f32.mrf.mxu0
  %v1896 = vadd.f32 %v1253, %v1895
  %v1897 = vpop.f32.mrf.mxu0
  %v1898 = vadd.f32 %v1253, %v1897
  %1899 = vmatmul.bf16.gmra.mxu0 %v1648
  %v1900 = vpop.f32.mrf.mxu0
  %v1901 = vadd.f32 %v1253, %v1900
  %v1902 = vpop.f32.mrf.mxu0
  %v1903 = vadd.f32 %v1253, %v1902
  %1904 = vmatmul.bf16.gmra.mxu0 %v1651
  %v1905 = vpop.f32.mrf.mxu0
  %v1906 = vadd.f32 %v1253, %v1905
  %v1907 = vpop.f32.mrf.mxu0
  %v1908 = vadd.f32 %v1253, %v1907
  %1909 = vmatmul.bf16.gmra.mxu0 %v1654
  %v1910 = vpop.f32.mrf.mxu0
  %v1911 = vadd.f32 %v1253, %v1910
  %v1912 = vpop.f32.mrf.mxu0
  %v1913 = vadd.f32 %v1253, %v1912
  %1914 = vdwg.mxu0
  %vm1915 = vcmask 72704
  %1916 = vst.msk [vmem:[%s5] sm:$0xff] %vm1915, %v1666
  %1917 = vst.msk [vmem:[%s5 + $0x8] sm:$0xff] %vm1915, %v1668
  %1918 = vst.msk [vmem:[%s5 + $0x10] sm:$0xff] %vm1915, %v1671
  %1919 = vst.msk [vmem:[%s5 + $0x18] sm:$0xff] %vm1915, %v1673
  %1920 = vst.msk [vmem:[%s5 + $0x20] sm:$0xff] %vm1915, %v1676
  %1921 = vst.msk [vmem:[%s5 + $0x28] sm:$0xff] %vm1915, %v1678
  %1922 = vst.msk [vmem:[%s5 + $0x30] sm:$0xff] %vm1915, %v1681
  %1923 = vst.msk [vmem:[%s5 + $0x38] sm:$0xff] %vm1915, %v1683
  %1924 = vst.msk [vmem:[%s5 + $0x40] sm:$0xff] %vm1915, %v1686
  %1925 = vst.msk [vmem:[%s5 + $0x48] sm:$0xff] %vm1915, %v1688
  %1926 = vst.msk [vmem:[%s5 + $0x50] sm:$0xff] %vm1915, %v1691
  %1927 = vst.msk [vmem:[%s5 + $0x58] sm:$0xff] %vm1915, %v1693
  %1928 = vst.msk [vmem:[%s5 + $0x60] sm:$0xff] %vm1915, %v1696
  %1929 = vst.msk [vmem:[%s5 + $0x68] sm:$0xff] %vm1915, %v1698
  %1930 = vst.msk [vmem:[%s5 + $0x70] sm:$0xff] %vm1915, %v1701
  %1931 = vst.msk [vmem:[%s5 + $0x78] sm:$0xff] %vm1915, %v1703
  %1932 = vst.msk [vmem:[%s5 + $0x80] sm:$0xff] %vm1915, %v1706
  %1933 = vst.msk [vmem:[%s5 + $0x88] sm:$0xff] %vm1915, %v1708
  %1934 = vst.msk [vmem:[%s5 + $0x90] sm:$0xff] %vm1915, %v1711
  %1935 = vst.msk [vmem:[%s5 + $0x98] sm:$0xff] %vm1915, %v1713
  %1936 = vst.msk [vmem:[%s5 + $0xa0] sm:$0xff] %vm1915, %v1716
  %1937 = vst.msk [vmem:[%s5 + $0xa8] sm:$0xff] %vm1915, %v1718
  %1938 = vst.msk [vmem:[%s5 + $0xb0] sm:$0xff] %vm1915, %v1721
  %1939 = vst.msk [vmem:[%s5 + $0xb8] sm:$0xff] %vm1915, %v1723
  %1940 = vst.msk [vmem:[%s5 + $0xc0] sm:$0xff] %vm1915, %v1726
  %1941 = vst.msk [vmem:[%s5 + $0xc8] sm:$0xff] %vm1915, %v1728
  %1942 = vst.msk [vmem:[%s5 + $0xd0] sm:$0xff] %vm1915, %v1731
  %1943 = vst.msk [vmem:[%s5 + $0xd8] sm:$0xff] %vm1915, %v1733
  %1944 = vst.msk [vmem:[%s5 + $0xe0] sm:$0xff] %vm1915, %v1736
  %1945 = vst.msk [vmem:[%s5 + $0xe8] sm:$0xff] %vm1915, %v1738
  %1946 = vst.msk [vmem:[%s5 + $0xf0] sm:$0xff] %vm1915, %v1741
  %1947 = vst.msk [vmem:[%s5 + $0xf8] sm:$0xff] %vm1915, %v1743
  %1948 = vst.msk [vmem:[%s5 + $0x100] sm:$0xff] %vm1915, %v1746
  %1949 = vst.msk [vmem:[%s5 + $0x108] sm:$0xff] %vm1915, %v1748
  %1950 = vst.msk [vmem:[%s5 + $0x110] sm:$0xff] %vm1915, %v1751
  %1951 = vst.msk [vmem:[%s5 + $0x118] sm:$0xff] %vm1915, %v1753
  %1952 = vst.msk [vmem:[%s5 + $0x120] sm:$0xff] %vm1915, %v1756
  %1953 = vst.msk [vmem:[%s5 + $0x128] sm:$0xff] %vm1915, %v1758
  %1954 = vst.msk [vmem:[%s5 + $0x130] sm:$0xff] %vm1915, %v1761
  %1955 = vst.msk [vmem:[%s5 + $0x138] sm:$0xff] %vm1915, %v1763
  %1956 = vst.msk [vmem:[%s5 + $0x140] sm:$0xff] %vm1915, %v1766
  %1957 = vst.msk [vmem:[%s5 + $0x148] sm:$0xff] %vm1915, %v1768
  %1958 = vst.msk [vmem:[%s5 + $0x150] sm:$0xff] %vm1915, %v1771
  %1959 = vst.msk [vmem:[%s5 + $0x158] sm:$0xff] %vm1915, %v1773
  %1960 = vst.msk [vmem:[%s5 + $0x160] sm:$0xff] %vm1915, %v1776
  %1961 = vst.msk [vmem:[%s5 + $0x168] sm:$0xff] %vm1915, %v1778
  %1962 = vst.msk [vmem:[%s5 + $0x170] sm:$0xff] %vm1915, %v1781
  %1963 = vst.msk [vmem:[%s5 + $0x178] sm:$0xff] %vm1915, %v1783
  %1964 = vst.msk [vmem:[%s5 + $0x180] sm:$0xff] %vm1915, %v1786
  %1965 = vst.msk [vmem:[%s5 + $0x188] sm:$0xff] %vm1915, %v1788
  %1966 = vst.msk [vmem:[%s5 + $0x190] sm:$0xff] %vm1915, %v1791
  %1967 = vst.msk [vmem:[%s5 + $0x198] sm:$0xff] %vm1915, %v1793
  %1968 = vst.msk [vmem:[%s5 + $0x1a0] sm:$0xff] %vm1915, %v1796
  %1969 = vst.msk [vmem:[%s5 + $0x1a8] sm:$0xff] %vm1915, %v1798
  %1970 = vst.msk [vmem:[%s5 + $0x1b0] sm:$0xff] %vm1915, %v1801
  %1971 = vst.msk [vmem:[%s5 + $0x1b8] sm:$0xff] %vm1915, %v1803
  %1972 = vst.msk [vmem:[%s5 + $0x1c0] sm:$0xff] %vm1915, %v1806
  %1973 = vst.msk [vmem:[%s5 + $0x1c8] sm:$0xff] %vm1915, %v1808
  %1974 = vst.msk [vmem:[%s5 + $0x1d0] sm:$0xff] %vm1915, %v1811
  %1975 = vst.msk [vmem:[%s5 + $0x1d8] sm:$0xff] %vm1915, %v1813
  %1976 = vst.msk [vmem:[%s5 + $0x1e0] sm:$0xff] %vm1915, %v1816
  %1977 = vst.msk [vmem:[%s5 + $0x1e8] sm:$0xff] %vm1915, %v1818
  %1978 = vst.msk [vmem:[%s5 + $0x1f0] sm:$0xff] %vm1915, %v1821
  %1979 = vst.msk [vmem:[%s5 + $0x1f8] sm:$0xff] %vm1915, %v1823
  %1980 = vst.msk [vmem:[%s5 + $0x200] sm:$0xff] %vm1915, %v1826
  %1981 = vst.msk [vmem:[%s5 + $0x208] sm:$0xff] %vm1915, %v1828
  %1982 = vst.msk [vmem:[%s5 + $0x210] sm:$0xff] %vm1915, %v1831
  %1983 = vst.msk [vmem:[%s5 + $0x218] sm:$0xff] %vm1915, %v1833
  %1984 = vst.msk [vmem:[%s5 + $0x220] sm:$0xff] %vm1915, %v1836
  %1985 = vst.msk [vmem:[%s5 + $0x228] sm:$0xff] %vm1915, %v1838
  %1986 = vst.msk [vmem:[%s5 + $0x230] sm:$0xff] %vm1915, %v1841
  %1987 = vst.msk [vmem:[%s5 + $0x238] sm:$0xff] %vm1915, %v1843
  %1988 = vst.msk [vmem:[%s5 + $0x240] sm:$0xff] %vm1915, %v1846
  %1989 = vst.msk [vmem:[%s5 + $0x248] sm:$0xff] %vm1915, %v1848
  %1990 = vst.msk [vmem:[%s5 + $0x250] sm:$0xff] %vm1915, %v1851
  %1991 = vst.msk [vmem:[%s5 + $0x258] sm:$0xff] %vm1915, %v1853
  %1992 = vst.msk [vmem:[%s5 + $0x260] sm:$0xff] %vm1915, %v1856
  %1993 = vst.msk [vmem:[%s5 + $0x268] sm:$0xff] %vm1915, %v1858
  %1994 = vst.msk [vmem:[%s5 + $0x270] sm:$0xff] %vm1915, %v1861
  %1995 = vst.msk [vmem:[%s5 + $0x278] sm:$0xff] %vm1915, %v1863
  %1996 = vst.msk [vmem:[%s5 + $0x280] sm:$0xff] %vm1915, %v1866
  %1997 = vst.msk [vmem:[%s5 + $0x288] sm:$0xff] %vm1915, %v1868
  %1998 = vst.msk [vmem:[%s5 + $0x290] sm:$0xff] %vm1915, %v1871
  %1999 = vst.msk [vmem:[%s5 + $0x298] sm:$0xff] %vm1915, %v1873
  %2000 = vst.msk [vmem:[%s5 + $0x2a0] sm:$0xff] %vm1915, %v1876
  %2001 = vst.msk [vmem:[%s5 + $0x2a8] sm:$0xff] %vm1915, %v1878
  %2002 = vst.msk [vmem:[%s5 + $0x2b0] sm:$0xff] %vm1915, %v1881
  %2003 = vst.msk [vmem:[%s5 + $0x2b8] sm:$0xff] %vm1915, %v1883
  %2004 = vst.msk [vmem:[%s5 + $0x2c0] sm:$0xff] %vm1915, %v1886
  %2005 = vst.msk [vmem:[%s5 + $0x2c8] sm:$0xff] %vm1915, %v1888
  %2006 = vst.msk [vmem:[%s5 + $0x2d0] sm:$0xff] %vm1915, %v1891
  %2007 = vst.msk [vmem:[%s5 + $0x2d8] sm:$0xff] %vm1915, %v1893
  %2008 = vst.msk [vmem:[%s5 + $0x2e0] sm:$0xff] %vm1915, %v1896
  %2009 = vst.msk [vmem:[%s5 + $0x2e8] sm:$0xff] %vm1915, %v1898
  %2010 = vst.msk [vmem:[%s5 + $0x2f0] sm:$0xff] %vm1915, %v1901
  %2011 = vst.msk [vmem:[%s5 + $0x2f8] sm:$0xff] %vm1915, %v1903
  %2012 = vst.msk [vmem:[%s5 + $0x300] sm:$0xff] %vm1915, %v1906
  %2013 = vst.msk [vmem:[%s5 + $0x308] sm:$0xff] %vm1915, %v1908
  %2014 = vst.msk [vmem:[%s5 + $0x310] sm:$0xff] %vm1915, %v1911
  %2015 = vst.msk [vmem:[%s5 + $0x318] sm:$0xff] %vm1915, %v1913
  %2016 = vrot.lane.b32.xlu0 %v1455, 96
  %v2017 = vpop.permute.xlu0 %2016
  %2018 = vrot.lane.b32.xlu0 %v1456, 96
  %v2019 = vpop.permute.xlu0 %2018
  %2020 = vrot.lane.b32.xlu0 %v1457, 96
  %v2021 = vpop.permute.xlu0 %2020
  %2022 = vrot.lane.b32.xlu0 %v1458, 96
  %v2023 = vpop.permute.xlu0 %2022
  %2024 = vrot.lane.b32.xlu0 %v1459, 96
  %v2025 = vpop.permute.xlu0 %2024
  %2026 = vrot.lane.b32.xlu0 %v1460, 96
  %v2027 = vpop.permute.xlu0 %2026
  %2028 = vrot.lane.b32.xlu0 %v1461, 96
  %v2029 = vpop.permute.xlu0 %2028
  %2030 = vrot.lane.b32.xlu0 %v1462, 96
  %v2031 = vpop.permute.xlu0 %2030
  %2032 = vrot.lane.b32.xlu0 %v1463, 96
  %v2033 = vpop.permute.xlu0 %2032
  %2034 = vrot.lane.b32.xlu0 %v1464, 96
  %v2035 = vpop.permute.xlu0 %2034
  %2036 = vrot.lane.b32.xlu0 %v1465, 96
  %v2037 = vpop.permute.xlu0 %2036
  %2038 = vrot.lane.b32.xlu0 %v1466, 96
  %v2039 = vpop.permute.xlu0 %2038
  %2040 = vrot.lane.b32.xlu0 %v1467, 96
  %v2041 = vpop.permute.xlu0 %2040
  %2042 = vrot.lane.b32.xlu0 %v1468, 96
  %v2043 = vpop.permute.xlu0 %2042
  %2044 = vrot.lane.b32.xlu0 %v1469, 96
  %v2045 = vpop.permute.xlu0 %2044
  %2046 = vrot.lane.b32.xlu0 %v1470, 96
  %v2047 = vpop.permute.xlu0 %2046
  %2048 = vrot.lane.b32.xlu0 %v1471, 96
  %v2049 = vpop.permute.xlu0 %2048
  %2050 = vrot.lane.b32.xlu0 %v1472, 96
  %v2051 = vpop.permute.xlu0 %2050
  %2052 = vrot.lane.b32.xlu0 %v1473, 96
  %v2053 = vpop.permute.xlu0 %2052
  %2054 = vrot.lane.b32.xlu0 %v1474, 96
  %v2055 = vpop.permute.xlu0 %2054
  %2056 = vrot.lane.b32.xlu0 %v1475, 96
  %v2057 = vpop.permute.xlu0 %2056
  %2058 = vrot.lane.b32.xlu0 %v1476, 96
  %v2059 = vpop.permute.xlu0 %2058
  %2060 = vrot.lane.b32.xlu0 %v1477, 96
  %v2061 = vpop.permute.xlu0 %2060
  %2062 = vrot.lane.b32.xlu0 %v1478, 96
  %v2063 = vpop.permute.xlu0 %2062
  %2064 = vrot.lane.b32.xlu0 %v1479, 96
  %v2065 = vpop.permute.xlu0 %2064
  %2066 = vrot.lane.b32.xlu0 %v1480, 96
  %v2067 = vpop.permute.xlu0 %2066
  %2068 = vrot.lane.b32.xlu0 %v1481, 96
  %v2069 = vpop.permute.xlu0 %2068
  %2070 = vrot.lane.b32.xlu0 %v1482, 96
  %v2071 = vpop.permute.xlu0 %2070
  %2072 = vrot.lane.b32.xlu0 %v1483, 96
  %v2073 = vpop.permute.xlu0 %2072
  %2074 = vrot.lane.b32.xlu0 %v1484, 96
  %v2075 = vpop.permute.xlu0 %2074
  %2076 = vrot.lane.b32.xlu0 %v1485, 96
  %v2077 = vpop.permute.xlu0 %2076
  %2078 = vrot.lane.b32.xlu0 %v1486, 96
  %v2079 = vpop.permute.xlu0 %2078
  %2080 = vrot.lane.b32.xlu0 %v1487, 96
  %v2081 = vpop.permute.xlu0 %2080
  %2082 = vrot.lane.b32.xlu0 %v1488, 96
  %v2083 = vpop.permute.xlu0 %2082
  %2084 = vrot.lane.b32.xlu0 %v1489, 96
  %v2085 = vpop.permute.xlu0 %2084
  %2086 = vrot.lane.b32.xlu0 %v1490, 96
  %v2087 = vpop.permute.xlu0 %2086
  %2088 = vrot.lane.b32.xlu0 %v1491, 96
  %v2089 = vpop.permute.xlu0 %2088
  %2090 = vrot.lane.b32.xlu0 %v1492, 96
  %v2091 = vpop.permute.xlu0 %2090
  %2092 = vrot.lane.b32.xlu0 %v1493, 96
  %v2093 = vpop.permute.xlu0 %2092
  %2094 = vrot.lane.b32.xlu0 %v1494, 96
  %v2095 = vpop.permute.xlu0 %2094
  %2096 = vrot.lane.b32.xlu0 %v1495, 96
  %v2097 = vpop.permute.xlu0 %2096
  %2098 = vrot.lane.b32.xlu0 %v1496, 96
  %v2099 = vpop.permute.xlu0 %2098
  %2100 = vrot.lane.b32.xlu0 %v1497, 96
  %v2101 = vpop.permute.xlu0 %2100
  %2102 = vrot.lane.b32.xlu0 %v1498, 96
  %v2103 = vpop.permute.xlu0 %2102
  %2104 = vrot.lane.b32.xlu0 %v1499, 96
  %v2105 = vpop.permute.xlu0 %2104
  %2106 = vrot.lane.b32.xlu0 %v1500, 96
  %v2107 = vpop.permute.xlu0 %2106
  %2108 = vrot.lane.b32.xlu0 %v1501, 96
  %v2109 = vpop.permute.xlu0 %2108
  %2110 = vrot.lane.b32.xlu0 %v1502, 96
  %v2111 = vpop.permute.xlu0 %2110
  %2112 = vrot.lane.b32.xlu0 %v1503, 96
  %v2113 = vpop.permute.xlu0 %2112
  %2114 = vrot.lane.b32.xlu0 %v1504, 96
  %v2115 = vpop.permute.xlu0 %2114
  %v2117 = vsel %vm1505, %v2017, 0
  %v2120 = vsel %vm1505, %v2019, 0
  %v2123 = vsel %vm1505, %v2021, 0
  %v2126 = vsel %vm1505, %v2023, 0
  %v2129 = vsel %vm1505, %v2025, 0
  %v2132 = vsel %vm1505, %v2027, 0
  %v2135 = vsel %vm1505, %v2029, 0
  %v2138 = vsel %vm1505, %v2031, 0
  %v2141 = vsel %vm1505, %v2033, 0
  %v2144 = vsel %vm1505, %v2035, 0
  %v2147 = vsel %vm1505, %v2037, 0
  %v2150 = vsel %vm1505, %v2039, 0
  %v2153 = vsel %vm1505, %v2041, 0
  %v2156 = vsel %vm1505, %v2043, 0
  %v2159 = vsel %vm1505, %v2045, 0
  %v2162 = vsel %vm1505, %v2047, 0
  %v2165 = vsel %vm1505, %v2049, 0
  %v2168 = vsel %vm1505, %v2051, 0
  %v2171 = vsel %vm1505, %v2053, 0
  %v2174 = vsel %vm1505, %v2055, 0
  %v2177 = vsel %vm1505, %v2057, 0
  %v2180 = vsel %vm1505, %v2059, 0
  %v2183 = vsel %vm1505, %v2061, 0
  %v2186 = vsel %vm1505, %v2063, 0
  %v2189 = vsel %vm1505, %v2065, 0
  %v2192 = vsel %vm1505, %v2067, 0
  %v2195 = vsel %vm1505, %v2069, 0
  %v2198 = vsel %vm1505, %v2071, 0
  %v2201 = vsel %vm1505, %v2073, 0
  %v2204 = vsel %vm1505, %v2075, 0
  %v2207 = vsel %vm1505, %v2077, 0
  %v2210 = vsel %vm1505, %v2079, 0
  %v2213 = vsel %vm1505, %v2081, 0
  %v2216 = vsel %vm1505, %v2083, 0
  %v2219 = vsel %vm1505, %v2085, 0
  %v2222 = vsel %vm1505, %v2087, 0
  %v2225 = vsel %vm1505, %v2089, 0
  %v2228 = vsel %vm1505, %v2091, 0
  %v2231 = vsel %vm1505, %v2093, 0
  %v2234 = vsel %vm1505, %v2095, 0
  %v2237 = vsel %vm1505, %v2097, 0
  %v2240 = vsel %vm1505, %v2099, 0
  %v2243 = vsel %vm1505, %v2101, 0
  %v2246 = vsel %vm1505, %v2103, 0
  %v2249 = vsel %vm1505, %v2105, 0
  %v2252 = vsel %vm1505, %v2107, 0
  %v2255 = vsel %vm1505, %v2109, 0
  %v2258 = vsel %vm1505, %v2111, 0
  %v2261 = vsel %vm1505, %v2113, 0
  %v2264 = vsel %vm1505, %v2115, 0
  %2266 = vmatpush.bf16.msra.mxu0 0
  %2267 = vmatpush.bf16.msra.mxu0 0
  %2268 = vmatpush.bf16.msra.mxu0 0
  %2269 = vmatpush.bf16.msra.mxu0 0
  %2270 = vmatpush.bf16.msra.mxu0 0
  %2271 = vmatpush.bf16.msra.mxu0 0
  %2272 = vmatpush.bf16.msra.mxu0 %v1250
  %2273 = vmatpush.bf16.msra.mxu0 %v1249
  %2274 = vmatmul.bf16.gmra.mxu0 %v2117
  %v2275 = vpop.f32.mrf.mxu0
  %v2276 = vadd.f32 0.0, %v2275
  %v2277 = vpop.f32.mrf.mxu0
  %v2278 = vadd.f32 0.0, %v2277
  %2279 = vmatmul.bf16.gmra.mxu0 %v2120
  %v2280 = vpop.f32.mrf.mxu0
  %v2281 = vadd.f32 0.0, %v2280
  %v2282 = vpop.f32.mrf.mxu0
  %v2283 = vadd.f32 0.0, %v2282
  %2284 = vmatmul.bf16.gmra.mxu0 %v2123
  %v2285 = vpop.f32.mrf.mxu0
  %v2286 = vadd.f32 0.0, %v2285
  %v2287 = vpop.f32.mrf.mxu0
  %v2288 = vadd.f32 0.0, %v2287
  %2289 = vmatmul.bf16.gmra.mxu0 %v2126
  %v2290 = vpop.f32.mrf.mxu0
  %v2291 = vadd.f32 0.0, %v2290
  %v2292 = vpop.f32.mrf.mxu0
  %v2293 = vadd.f32 0.0, %v2292
  %2294 = vmatmul.bf16.gmra.mxu0 %v2129
  %v2295 = vpop.f32.mrf.mxu0
  %v2296 = vadd.f32 0.0, %v2295
  %v2297 = vpop.f32.mrf.mxu0
  %v2298 = vadd.f32 0.0, %v2297
  %2299 = vmatmul.bf16.gmra.mxu0 %v2132
  %v2300 = vpop.f32.mrf.mxu0
  %v2301 = vadd.f32 0.0, %v2300
  %v2302 = vpop.f32.mrf.mxu0
  %v2303 = vadd.f32 0.0, %v2302
  %2304 = vmatmul.bf16.gmra.mxu0 %v2135
  %v2305 = vpop.f32.mrf.mxu0
  %v2306 = vadd.f32 0.0, %v2305
  %v2307 = vpop.f32.mrf.mxu0
  %v2308 = vadd.f32 0.0, %v2307
  %2309 = vmatmul.bf16.gmra.mxu0 %v2138
  %v2310 = vpop.f32.mrf.mxu0
  %v2311 = vadd.f32 0.0, %v2310
  %v2312 = vpop.f32.mrf.mxu0
  %v2313 = vadd.f32 0.0, %v2312
  %2314 = vmatmul.bf16.gmra.mxu0 %v2141
  %v2315 = vpop.f32.mrf.mxu0
  %v2316 = vadd.f32 0.0, %v2315
  %v2317 = vpop.f32.mrf.mxu0
  %v2318 = vadd.f32 0.0, %v2317
  %2319 = vmatmul.bf16.gmra.mxu0 %v2144
  %v2320 = vpop.f32.mrf.mxu0
  %v2321 = vadd.f32 0.0, %v2320
  %v2322 = vpop.f32.mrf.mxu0
  %v2323 = vadd.f32 0.0, %v2322
  %2324 = vmatmul.bf16.gmra.mxu0 %v2147
  %v2325 = vpop.f32.mrf.mxu0
  %v2326 = vadd.f32 0.0, %v2325
  %v2327 = vpop.f32.mrf.mxu0
  %v2328 = vadd.f32 0.0, %v2327
  %2329 = vmatmul.bf16.gmra.mxu0 %v2150
  %v2330 = vpop.f32.mrf.mxu0
  %v2331 = vadd.f32 0.0, %v2330
  %v2332 = vpop.f32.mrf.mxu0
  %v2333 = vadd.f32 0.0, %v2332
  %2334 = vmatmul.bf16.gmra.mxu0 %v2153
  %v2335 = vpop.f32.mrf.mxu0
  %v2336 = vadd.f32 0.0, %v2335
  %v2337 = vpop.f32.mrf.mxu0
  %v2338 = vadd.f32 0.0, %v2337
  %2339 = vmatmul.bf16.gmra.mxu0 %v2156
  %v2340 = vpop.f32.mrf.mxu0
  %v2341 = vadd.f32 0.0, %v2340
  %v2342 = vpop.f32.mrf.mxu0
  %v2343 = vadd.f32 0.0, %v2342
  %2344 = vmatmul.bf16.gmra.mxu0 %v2159
  %v2345 = vpop.f32.mrf.mxu0
  %v2346 = vadd.f32 0.0, %v2345
  %v2347 = vpop.f32.mrf.mxu0
  %v2348 = vadd.f32 0.0, %v2347
  %2349 = vmatmul.bf16.gmra.mxu0 %v2162
  %v2350 = vpop.f32.mrf.mxu0
  %v2351 = vadd.f32 0.0, %v2350
  %v2352 = vpop.f32.mrf.mxu0
  %v2353 = vadd.f32 0.0, %v2352
  %2354 = vmatmul.bf16.gmra.mxu0 %v2165
  %v2355 = vpop.f32.mrf.mxu0
  %v2356 = vadd.f32 0.0, %v2355
  %v2357 = vpop.f32.mrf.mxu0
  %v2358 = vadd.f32 0.0, %v2357
  %2359 = vmatmul.bf16.gmra.mxu0 %v2168
  %v2360 = vpop.f32.mrf.mxu0
  %v2361 = vadd.f32 0.0, %v2360
  %v2362 = vpop.f32.mrf.mxu0
  %v2363 = vadd.f32 0.0, %v2362
  %2364 = vmatmul.bf16.gmra.mxu0 %v2171
  %v2365 = vpop.f32.mrf.mxu0
  %v2366 = vadd.f32 0.0, %v2365
  %v2367 = vpop.f32.mrf.mxu0
  %v2368 = vadd.f32 0.0, %v2367
  %2369 = vmatmul.bf16.gmra.mxu0 %v2174
  %v2370 = vpop.f32.mrf.mxu0
  %v2371 = vadd.f32 0.0, %v2370
  %v2372 = vpop.f32.mrf.mxu0
  %v2373 = vadd.f32 0.0, %v2372
  %2374 = vmatmul.bf16.gmra.mxu0 %v2177
  %v2375 = vpop.f32.mrf.mxu0
  %v2376 = vadd.f32 0.0, %v2375
  %v2377 = vpop.f32.mrf.mxu0
  %v2378 = vadd.f32 0.0, %v2377
  %2379 = vmatmul.bf16.gmra.mxu0 %v2180
  %v2380 = vpop.f32.mrf.mxu0
  %v2381 = vadd.f32 0.0, %v2380
  %v2382 = vpop.f32.mrf.mxu0
  %v2383 = vadd.f32 0.0, %v2382
  %2384 = vmatmul.bf16.gmra.mxu0 %v2183
  %v2385 = vpop.f32.mrf.mxu0
  %v2386 = vadd.f32 0.0, %v2385
  %v2387 = vpop.f32.mrf.mxu0
  %v2388 = vadd.f32 0.0, %v2387
  %2389 = vmatmul.bf16.gmra.mxu0 %v2186
  %v2390 = vpop.f32.mrf.mxu0
  %v2391 = vadd.f32 0.0, %v2390
  %v2392 = vpop.f32.mrf.mxu0
  %v2393 = vadd.f32 0.0, %v2392
  %2394 = vmatmul.bf16.gmra.mxu0 %v2189
  %v2395 = vpop.f32.mrf.mxu0
  %v2396 = vadd.f32 0.0, %v2395
  %v2397 = vpop.f32.mrf.mxu0
  %v2398 = vadd.f32 0.0, %v2397
  %2399 = vmatmul.bf16.gmra.mxu0 %v2192
  %v2400 = vpop.f32.mrf.mxu0
  %v2401 = vadd.f32 0.0, %v2400
  %v2402 = vpop.f32.mrf.mxu0
  %v2403 = vadd.f32 0.0, %v2402
  %2404 = vmatmul.bf16.gmra.mxu0 %v2195
  %v2405 = vpop.f32.mrf.mxu0
  %v2406 = vadd.f32 0.0, %v2405
  %v2407 = vpop.f32.mrf.mxu0
  %v2408 = vadd.f32 0.0, %v2407
  %2409 = vmatmul.bf16.gmra.mxu0 %v2198
  %v2410 = vpop.f32.mrf.mxu0
  %v2411 = vadd.f32 0.0, %v2410
  %v2412 = vpop.f32.mrf.mxu0
  %v2413 = vadd.f32 0.0, %v2412
  %2414 = vmatmul.bf16.gmra.mxu0 %v2201
  %v2415 = vpop.f32.mrf.mxu0
  %v2416 = vadd.f32 0.0, %v2415
  %v2417 = vpop.f32.mrf.mxu0
  %v2418 = vadd.f32 0.0, %v2417
  %2419 = vmatmul.bf16.gmra.mxu0 %v2204
  %v2420 = vpop.f32.mrf.mxu0
  %v2421 = vadd.f32 0.0, %v2420
  %v2422 = vpop.f32.mrf.mxu0
  %v2423 = vadd.f32 0.0, %v2422
  %2424 = vmatmul.bf16.gmra.mxu0 %v2207
  %v2425 = vpop.f32.mrf.mxu0
  %v2426 = vadd.f32 0.0, %v2425
  %v2427 = vpop.f32.mrf.mxu0
  %v2428 = vadd.f32 0.0, %v2427
  %2429 = vmatmul.bf16.gmra.mxu0 %v2210
  %v2430 = vpop.f32.mrf.mxu0
  %v2431 = vadd.f32 0.0, %v2430
  %v2432 = vpop.f32.mrf.mxu0
  %v2433 = vadd.f32 0.0, %v2432
  %2434 = vmatmul.bf16.gmra.mxu0 %v2213
  %v2435 = vpop.f32.mrf.mxu0
  %v2436 = vadd.f32 0.0, %v2435
  %v2437 = vpop.f32.mrf.mxu0
  %v2438 = vadd.f32 0.0, %v2437
  %2439 = vmatmul.bf16.gmra.mxu0 %v2216
  %v2440 = vpop.f32.mrf.mxu0
  %v2441 = vadd.f32 0.0, %v2440
  %v2442 = vpop.f32.mrf.mxu0
  %v2443 = vadd.f32 0.0, %v2442
  %2444 = vmatmul.bf16.gmra.mxu0 %v2219
  %v2445 = vpop.f32.mrf.mxu0
  %v2446 = vadd.f32 0.0, %v2445
  %v2447 = vpop.f32.mrf.mxu0
  %v2448 = vadd.f32 0.0, %v2447
  %2449 = vmatmul.bf16.gmra.mxu0 %v2222
  %v2450 = vpop.f32.mrf.mxu0
  %v2451 = vadd.f32 0.0, %v2450
  %v2452 = vpop.f32.mrf.mxu0
  %v2453 = vadd.f32 0.0, %v2452
  %2454 = vmatmul.bf16.gmra.mxu0 %v2225
  %v2455 = vpop.f32.mrf.mxu0
  %v2456 = vadd.f32 0.0, %v2455
  %v2457 = vpop.f32.mrf.mxu0
  %v2458 = vadd.f32 0.0, %v2457
  %2459 = vmatmul.bf16.gmra.mxu0 %v2228
  %v2460 = vpop.f32.mrf.mxu0
  %v2461 = vadd.f32 0.0, %v2460
  %v2462 = vpop.f32.mrf.mxu0
  %v2463 = vadd.f32 0.0, %v2462
  %2464 = vmatmul.bf16.gmra.mxu0 %v2231
  %v2465 = vpop.f32.mrf.mxu0
  %v2466 = vadd.f32 0.0, %v2465
  %v2467 = vpop.f32.mrf.mxu0
  %v2468 = vadd.f32 0.0, %v2467
  %2469 = vmatmul.bf16.gmra.mxu0 %v2234
  %v2470 = vpop.f32.mrf.mxu0
  %v2471 = vadd.f32 0.0, %v2470
  %v2472 = vpop.f32.mrf.mxu0
  %v2473 = vadd.f32 0.0, %v2472
  %2474 = vmatmul.bf16.gmra.mxu0 %v2237
  %v2475 = vpop.f32.mrf.mxu0
  %v2476 = vadd.f32 0.0, %v2475
  %v2477 = vpop.f32.mrf.mxu0
  %v2478 = vadd.f32 0.0, %v2477
  %2479 = vmatmul.bf16.gmra.mxu0 %v2240
  %v2480 = vpop.f32.mrf.mxu0
  %v2481 = vadd.f32 0.0, %v2480
  %v2482 = vpop.f32.mrf.mxu0
  %v2483 = vadd.f32 0.0, %v2482
  %2484 = vmatmul.bf16.gmra.mxu0 %v2243
  %v2485 = vpop.f32.mrf.mxu0
  %v2486 = vadd.f32 0.0, %v2485
  %v2487 = vpop.f32.mrf.mxu0
  %v2488 = vadd.f32 0.0, %v2487
  %2489 = vmatmul.bf16.gmra.mxu0 %v2246
  %v2490 = vpop.f32.mrf.mxu0
  %v2491 = vadd.f32 0.0, %v2490
  %v2492 = vpop.f32.mrf.mxu0
  %v2493 = vadd.f32 0.0, %v2492
  %2494 = vmatmul.bf16.gmra.mxu0 %v2249
  %v2495 = vpop.f32.mrf.mxu0
  %v2496 = vadd.f32 0.0, %v2495
  %v2497 = vpop.f32.mrf.mxu0
  %v2498 = vadd.f32 0.0, %v2497
  %2499 = vmatmul.bf16.gmra.mxu0 %v2252
  %v2500 = vpop.f32.mrf.mxu0
  %v2501 = vadd.f32 0.0, %v2500
  %v2502 = vpop.f32.mrf.mxu0
  %v2503 = vadd.f32 0.0, %v2502
  %2504 = vmatmul.bf16.gmra.mxu0 %v2255
  %v2505 = vpop.f32.mrf.mxu0
  %v2506 = vadd.f32 0.0, %v2505
  %v2507 = vpop.f32.mrf.mxu0
  %v2508 = vadd.f32 0.0, %v2507
  %2509 = vmatmul.bf16.gmra.mxu0 %v2258
  %v2510 = vpop.f32.mrf.mxu0
  %v2511 = vadd.f32 0.0, %v2510
  %v2512 = vpop.f32.mrf.mxu0
  %v2513 = vadd.f32 0.0, %v2512
  %2514 = vmatmul.bf16.gmra.mxu0 %v2261
  %v2515 = vpop.f32.mrf.mxu0
  %v2516 = vadd.f32 0.0, %v2515
  %v2517 = vpop.f32.mrf.mxu0
  %v2518 = vadd.f32 0.0, %v2517
  %2519 = vmatmul.bf16.gmra.mxu0 %v2264
  %v2520 = vpop.f32.mrf.mxu0
  %v2521 = vadd.f32 0.0, %v2520
  %v2522 = vpop.f32.mrf.mxu0
  %v2523 = vadd.f32 0.0, %v2522
  %2524 = vdwg.mxu0
  %2525 = vst.msk [vmem:[%s6] sm:$0xff] %vm1915, %v2276
  %2526 = vst.msk [vmem:[%s6 + $0x8] sm:$0xff] %vm1915, %v2278
  %2527 = vst.msk [vmem:[%s6 + $0x10] sm:$0xff] %vm1915, %v2281
  %2528 = vst.msk [vmem:[%s6 + $0x18] sm:$0xff] %vm1915, %v2283
  %2529 = vst.msk [vmem:[%s6 + $0x20] sm:$0xff] %vm1915, %v2286
  %2530 = vst.msk [vmem:[%s6 + $0x28] sm:$0xff] %vm1915, %v2288
  %2531 = vst.msk [vmem:[%s6 + $0x30] sm:$0xff] %vm1915, %v2291
  %2532 = vst.msk [vmem:[%s6 + $0x38] sm:$0xff] %vm1915, %v2293
  %2533 = vst.msk [vmem:[%s6 + $0x40] sm:$0xff] %vm1915, %v2296
  %2534 = vst.msk [vmem:[%s6 + $0x48] sm:$0xff] %vm1915, %v2298
  %2535 = vst.msk [vmem:[%s6 + $0x50] sm:$0xff] %vm1915, %v2301
  %2536 = vst.msk [vmem:[%s6 + $0x58] sm:$0xff] %vm1915, %v2303
  %2537 = vst.msk [vmem:[%s6 + $0x60] sm:$0xff] %vm1915, %v2306
  %2538 = vst.msk [vmem:[%s6 + $0x68] sm:$0xff] %vm1915, %v2308
  %2539 = vst.msk [vmem:[%s6 + $0x70] sm:$0xff] %vm1915, %v2311
  %2540 = vst.msk [vmem:[%s6 + $0x78] sm:$0xff] %vm1915, %v2313
  %2541 = vst.msk [vmem:[%s6 + $0x80] sm:$0xff] %vm1915, %v2316
  %2542 = vst.msk [vmem:[%s6 + $0x88] sm:$0xff] %vm1915, %v2318
  %2543 = vst.msk [vmem:[%s6 + $0x90] sm:$0xff] %vm1915, %v2321
  %2544 = vst.msk [vmem:[%s6 + $0x98] sm:$0xff] %vm1915, %v2323
  %2545 = vst.msk [vmem:[%s6 + $0xa0] sm:$0xff] %vm1915, %v2326
  %2546 = vst.msk [vmem:[%s6 + $0xa8] sm:$0xff] %vm1915, %v2328
  %2547 = vst.msk [vmem:[%s6 + $0xb0] sm:$0xff] %vm1915, %v2331
  %2548 = vst.msk [vmem:[%s6 + $0xb8] sm:$0xff] %vm1915, %v2333
  %2549 = vst.msk [vmem:[%s6 + $0xc0] sm:$0xff] %vm1915, %v2336
  %2550 = vst.msk [vmem:[%s6 + $0xc8] sm:$0xff] %vm1915, %v2338
  %2551 = vst.msk [vmem:[%s6 + $0xd0] sm:$0xff] %vm1915, %v2341
  %2552 = vst.msk [vmem:[%s6 + $0xd8] sm:$0xff] %vm1915, %v2343
  %2553 = vst.msk [vmem:[%s6 + $0xe0] sm:$0xff] %vm1915, %v2346
  %2554 = vst.msk [vmem:[%s6 + $0xe8] sm:$0xff] %vm1915, %v2348
  %2555 = vst.msk [vmem:[%s6 + $0xf0] sm:$0xff] %vm1915, %v2351
  %2556 = vst.msk [vmem:[%s6 + $0xf8] sm:$0xff] %vm1915, %v2353
  %2557 = vst.msk [vmem:[%s6 + $0x100] sm:$0xff] %vm1915, %v2356
  %2558 = vst.msk [vmem:[%s6 + $0x108] sm:$0xff] %vm1915, %v2358
  %2559 = vst.msk [vmem:[%s6 + $0x110] sm:$0xff] %vm1915, %v2361
  %2560 = vst.msk [vmem:[%s6 + $0x118] sm:$0xff] %vm1915, %v2363
  %2561 = vst.msk [vmem:[%s6 + $0x120] sm:$0xff] %vm1915, %v2366
  %2562 = vst.msk [vmem:[%s6 + $0x128] sm:$0xff] %vm1915, %v2368
  %2563 = vst.msk [vmem:[%s6 + $0x130] sm:$0xff] %vm1915, %v2371
  %2564 = vst.msk [vmem:[%s6 + $0x138] sm:$0xff] %vm1915, %v2373
  %2565 = vst.msk [vmem:[%s6 + $0x140] sm:$0xff] %vm1915, %v2376
  %2566 = vst.msk [vmem:[%s6 + $0x148] sm:$0xff] %vm1915, %v2378
  %2567 = vst.msk [vmem:[%s6 + $0x150] sm:$0xff] %vm1915, %v2381
  %2568 = vst.msk [vmem:[%s6 + $0x158] sm:$0xff] %vm1915, %v2383
  %2569 = vst.msk [vmem:[%s6 + $0x160] sm:$0xff] %vm1915, %v2386
  %2570 = vst.msk [vmem:[%s6 + $0x168] sm:$0xff] %vm1915, %v2388
  %2571 = vst.msk [vmem:[%s6 + $0x170] sm:$0xff] %vm1915, %v2391
  %2572 = vst.msk [vmem:[%s6 + $0x178] sm:$0xff] %vm1915, %v2393
  %2573 = vst.msk [vmem:[%s6 + $0x180] sm:$0xff] %vm1915, %v2396
  %2574 = vst.msk [vmem:[%s6 + $0x188] sm:$0xff] %vm1915, %v2398
  %2575 = vst.msk [vmem:[%s6 + $0x190] sm:$0xff] %vm1915, %v2401
  %2576 = vst.msk [vmem:[%s6 + $0x198] sm:$0xff] %vm1915, %v2403
  %2577 = vst.msk [vmem:[%s6 + $0x1a0] sm:$0xff] %vm1915, %v2406
  %2578 = vst.msk [vmem:[%s6 + $0x1a8] sm:$0xff] %vm1915, %v2408
  %2579 = vst.msk [vmem:[%s6 + $0x1b0] sm:$0xff] %vm1915, %v2411
  %2580 = vst.msk [vmem:[%s6 + $0x1b8] sm:$0xff] %vm1915, %v2413
  %2581 = vst.msk [vmem:[%s6 + $0x1c0] sm:$0xff] %vm1915, %v2416
  %2582 = vst.msk [vmem:[%s6 + $0x1c8] sm:$0xff] %vm1915, %v2418
  %2583 = vst.msk [vmem:[%s6 + $0x1d0] sm:$0xff] %vm1915, %v2421
  %2584 = vst.msk [vmem:[%s6 + $0x1d8] sm:$0xff] %vm1915, %v2423
  %2585 = vst.msk [vmem:[%s6 + $0x1e0] sm:$0xff] %vm1915, %v2426
  %2586 = vst.msk [vmem:[%s6 + $0x1e8] sm:$0xff] %vm1915, %v2428
  %2587 = vst.msk [vmem:[%s6 + $0x1f0] sm:$0xff] %vm1915, %v2431
  %2588 = vst.msk [vmem:[%s6 + $0x1f8] sm:$0xff] %vm1915, %v2433
  %2589 = vst.msk [vmem:[%s6 + $0x200] sm:$0xff] %vm1915, %v2436
  %2590 = vst.msk [vmem:[%s6 + $0x208] sm:$0xff] %vm1915, %v2438
  %2591 = vst.msk [vmem:[%s6 + $0x210] sm:$0xff] %vm1915, %v2441
  %2592 = vst.msk [vmem:[%s6 + $0x218] sm:$0xff] %vm1915, %v2443
  %2593 = vst.msk [vmem:[%s6 + $0x220] sm:$0xff] %vm1915, %v2446
  %2594 = vst.msk [vmem:[%s6 + $0x228] sm:$0xff] %vm1915, %v2448
  %2595 = vst.msk [vmem:[%s6 + $0x230] sm:$0xff] %vm1915, %v2451
  %2596 = vst.msk [vmem:[%s6 + $0x238] sm:$0xff] %vm1915, %v2453
  %2597 = vst.msk [vmem:[%s6 + $0x240] sm:$0xff] %vm1915, %v2456
  %2598 = vst.msk [vmem:[%s6 + $0x248] sm:$0xff] %vm1915, %v2458
  %2599 = vst.msk [vmem:[%s6 + $0x250] sm:$0xff] %vm1915, %v2461
  %2600 = vst.msk [vmem:[%s6 + $0x258] sm:$0xff] %vm1915, %v2463
  %2601 = vst.msk [vmem:[%s6 + $0x260] sm:$0xff] %vm1915, %v2466
  %2602 = vst.msk [vmem:[%s6 + $0x268] sm:$0xff] %vm1915, %v2468
  %2603 = vst.msk [vmem:[%s6 + $0x270] sm:$0xff] %vm1915, %v2471
  %2604 = vst.msk [vmem:[%s6 + $0x278] sm:$0xff] %vm1915, %v2473
  %2605 = vst.msk [vmem:[%s6 + $0x280] sm:$0xff] %vm1915, %v2476
  %2606 = vst.msk [vmem:[%s6 + $0x288] sm:$0xff] %vm1915, %v2478
  %2607 = vst.msk [vmem:[%s6 + $0x290] sm:$0xff] %vm1915, %v2481
  %2608 = vst.msk [vmem:[%s6 + $0x298] sm:$0xff] %vm1915, %v2483
  %2609 = vst.msk [vmem:[%s6 + $0x2a0] sm:$0xff] %vm1915, %v2486
  %2610 = vst.msk [vmem:[%s6 + $0x2a8] sm:$0xff] %vm1915, %v2488
  %2611 = vst.msk [vmem:[%s6 + $0x2b0] sm:$0xff] %vm1915, %v2491
  %2612 = vst.msk [vmem:[%s6 + $0x2b8] sm:$0xff] %vm1915, %v2493
  %2613 = vst.msk [vmem:[%s6 + $0x2c0] sm:$0xff] %vm1915, %v2496
  %2614 = vst.msk [vmem:[%s6 + $0x2c8] sm:$0xff] %vm1915, %v2498
  %2615 = vst.msk [vmem:[%s6 + $0x2d0] sm:$0xff] %vm1915, %v2501
  %2616 = vst.msk [vmem:[%s6 + $0x2d8] sm:$0xff] %vm1915, %v2503
  %2617 = vst.msk [vmem:[%s6 + $0x2e0] sm:$0xff] %vm1915, %v2506
  %2618 = vst.msk [vmem:[%s6 + $0x2e8] sm:$0xff] %vm1915, %v2508
  %2619 = vst.msk [vmem:[%s6 + $0x2f0] sm:$0xff] %vm1915, %v2511
  %2620 = vst.msk [vmem:[%s6 + $0x2f8] sm:$0xff] %vm1915, %v2513
  %2621 = vst.msk [vmem:[%s6 + $0x300] sm:$0xff] %vm1915, %v2516
  %2622 = vst.msk [vmem:[%s6 + $0x308] sm:$0xff] %vm1915, %v2518
  %2623 = vst.msk [vmem:[%s6 + $0x310] sm:$0xff] %vm1915, %v2521
  %2624 = vst.msk [vmem:[%s6 + $0x318] sm:$0xff] %vm1915, %v2523
  // Predicated region
  $region29: #{extraction_net_forward.1} parent=0 // pred_check
    _
  $region30: #{extraction_net_forward.1} parent=0 // pred_check_branch
    %2626 = sbr.rel (0) target = $region32
  $region31: #{extraction_net_forward.1} parent=0 // pred_region
    _
  $region32: #{extraction_net_forward.1} parent=0 // pred_fallthru
    _
  // Predicated region
  $region33: #{extraction_net_forward.1} parent=0 // pred_check
    _
  $region34: #{extraction_net_forward.1} parent=0 // pred_check_branch
    %2628 = sbr.rel (0) target = $region36
  $region35: #{extraction_net_forward.1} parent=0 // pred_region
    _
  $region36: #{extraction_net_forward.1} parent=0 // pred_fallthru
    _
  // Predicated region
  $region37: #{extraction_net_forward.1} parent=0 // pred_check
    _
  $region38: #{extraction_net_forward.1} parent=0 // pred_check_branch
    %2630 = sbr.rel (0) target = $region40
  $region39: #{extraction_net_forward.1} parent=0 // pred_region
    _
  $region40: #{extraction_net_forward.1} parent=0 // pred_fallthru
    _
  // Predicated region
  $region41: #{extraction_net_forward.1} parent=0 // pred_check
    _
  $region42: #{extraction_net_forward.1} parent=0 // pred_check_branch
    %2632 = sbr.rel (0) target = $region44
  $region43: #{extraction_net_forward.1} parent=0 // pred_region
    _
  $region44: #{extraction_net_forward.1} parent=0 // pred_fallthru
    _

</llo_original>
